<compile_context>
chip_gen: v5e
topology: v5e:2x2
jax: 0.10.0
libtpu: 0.0.40
codegen_flags: <defaults>
</compile_context>

<pallas_src>
import math
import numpy as np

import jax
import jax.numpy as jnp
from jax.experimental import pallas as pl
from jax.experimental.pallas import tpu as pltpu

_LANES = 128                 # vertices per packed row
_GROUP = 3 * _LANES          # 384 lanes: 128 interleaved (x, y, z) vertices
_ROW_BLOCK_MAX = 1024        # packed rows per grid step


def _round_up(x, m):
    return (x + m - 1) // m * m


def _pick_row_block(r_total):
    """Row block: big enough to amortize per-step overhead, but >= 2 grid
    blocks whenever the data allows so v7x megacore can split the (single)
    parallel axis across both TensorCores."""
    if r_total <= 8:
        return int(r_total)          # one tiny block (full-dim satisfies the (8,128) rule)
    half = _round_up((r_total + 1) // 2, 8)
    return int(max(8, min(_ROW_BLOCK_MAX, half)))


def _make_look_kernel(perspective):
    def kernel(v_ref, w_ref, b_ref, o_ref):
        # v_ref: (rb, 384) f32, interleaved [x0 y0 z0 x1 y1 z1 ...] vertices.
        # w_ref: (384, 384) or (384, 768) block-diagonal transform.
        # b_ref: (1, 384|768) lane-periodic bias (translation / divisor bias).
        wide = jnp.dot(v_ref[...], w_ref[...],
                       preferred_element_type=jnp.float32,
                       precision=jax.lax.Precision.HIGHEST)
        wide = wide + b_ref[...]
        if perspective:
            n = o_ref.shape[-1]
            # cols [0,n): rotated + scaled + translated xyz (interleaved)
            # cols [n,2n): z' replicated under the x/y lanes, exactly 1.0 under
            #              the z lanes -> one divide finishes the projection.
            o_ref[...] = wide[:, :n] / wide[:, n:]
        else:
            o_ref[...] = wide
    return kernel


def _build_transform(camera_direction, perspective, viewing_angle,
                     viewing_scale, eye):
    """Build the (384, 384|768) block-diagonal transform, the (1, 384|768)
    lane-periodic bias, and a 'safe' padding vertex.  All jnp (traceable), so
    per-step cameras do not force a kernel recompile."""
    direction = jnp.asarray(camera_direction, jnp.float32)
    if eye is None:
        eye = [0.0, 0.0, -(1.0 / math.tan(math.radians(viewing_angle)) + 1.0)]
    eye = jnp.asarray(eye, jnp.float32)
    up = jnp.asarray([0.0, 1.0, 0.0], jnp.float32)

    def _normalize(v, eps=1e-5):         # F.normalize: v / max(||v||, eps)
        return v / jnp.maximum(jnp.linalg.norm(v), eps)

    z_axis = _normalize(direction)
    x_axis = _normalize(jnp.cross(up, z_axis))
    y_axis = _normalize(jnp.cross(z_axis, x_axis))
    r = jnp.stack([x_axis, y_axis, z_axis], axis=0)          # (3, 3)

    if perspective:
        s = 1.0 / math.tan(math.radians(viewing_angle))
    else:
        s = float(viewing_scale)
    rs = r * jnp.asarray([s, s, 1.0], jnp.float32)[:, None]  # rows 0/1 pre-scaled
    t = -rs @ eye                                             # (3,)

    eye128 = jnp.eye(_LANES, dtype=jnp.float32)
    w_rot = jnp.kron(eye128, rs.T)                            # (384, 384)
    bias_rot = jnp.tile(t, _LANES)                            # (384,)

    if perspective:
        # z-broadcast block: puts z' under the x and y lanes, 0 under z lanes.
        bz = r[2][:, None] * jnp.asarray([1.0, 1.0, 0.0], jnp.float32)[None, :]
        w_div = jnp.kron(eye128, bz)                          # (384, 384)
        tz = -jnp.dot(r[2], eye)
        bias_div = jnp.tile(jnp.stack([tz, tz, jnp.ones_like(tz)]), _LANES)
        w = jnp.concatenate([w_rot, w_div], axis=1)           # (384, 768)
        bias = jnp.concatenate([bias_rot, bias_div])[None, :]  # (1, 768)
    else:
        w = w_rot
        bias = bias_rot[None, :]

    pad_vertex = eye + z_axis    # transformed z == 1 exactly -> safe divisor
    return w, bias, pad_vertex


def look_packed(packed, w, bias, perspective):
    """Core kernel on interleaved-packed vertices: (R, 384) f32 -> (R, 384)."""
    r_total, group = packed.shape
    assert group == _GROUP
    rb = _pick_row_block(r_total)

    tile_spec = pl.BlockSpec((rb, _GROUP), lambda i: (i, 0))
    w_spec = pl.BlockSpec(w.shape, lambda i: (0, 0))       # resident across grid
    b_spec = pl.BlockSpec(bias.shape, lambda i: (0, 0))

    return pl.pallas_call(
        _make_look_kernel(perspective),
        out_shape=jax.ShapeDtypeStruct((r_total, _GROUP), jnp.float32),
        grid=(pl.cdiv(r_total, rb),),
        in_specs=[tile_spec, w_spec, b_spec],
        out_specs=tile_spec,
        compiler_params=pltpu.CompilerParams(
            dimension_semantics=("parallel",),
            vmem_limit_bytes=32 * 1024 * 1024),
    )(packed, w, bias)


def look_forward(vertices, camera_direction=(0.0, 0.0, 1.0), perspective=True,
                 viewing_angle=30.0, viewing_scale=1.0, eye=None):
    """JAX/Pallas equivalent of Look().forward(vertices); vertices: (B, N, 3)."""
    vertices = jnp.asarray(vertices, jnp.float32)
    B, N, C = vertices.shape
    assert C == 3

    w, bias, pad_vertex = _build_transform(camera_direction, perspective,
                                           viewing_angle, viewing_scale, eye)

    rows = pl.cdiv(N, _LANES)            # packed rows (128 vertices) per batch
    n_pad = rows * _LANES
    if N == n_pad:
        # Pure reshape of the natural (B, N, 3) memory order: no transpose.
        packed = vertices.reshape(B * rows, _GROUP)
    else:
        flat = vertices.reshape(B, N * 3)
        padv = jnp.broadcast_to(pad_vertex, (B, n_pad - N, 3))
        packed = jnp.concatenate([flat, padv.reshape(B, (n_pad - N) * 3)],
                                 axis=1).reshape(B * rows, _GROUP)

    r_total = B * rows
    r_run = r_total
    if r_total < 8:                       # tiny inputs: give the MXU >= 8 rows
        extra = 8 - r_total
        pad_rows = jnp.broadcast_to(pad_vertex, (extra * _LANES, 3))
        packed = jnp.concatenate([packed, pad_rows.reshape(extra, _GROUP)],
                                 axis=0)
        r_run = 8

    out = look_packed(packed, w, bias, perspective)
    if r_run != r_total:
        out = out[:r_total]
    out = out.reshape(B, n_pad, 3)
    if n_pad != N:
        out = out[:, :N, :]
    return out


def _reference_numpy(vertices, camera_direction, perspective, viewing_angle,
                     viewing_scale, eye):
    """Mirror of the torch module (srf.look + perspective/orthogonal)."""
    vertices = np.asarray(vertices, np.float32)
    if eye is None:
        eye = [0.0, 0.0, -(1.0 / math.tan(math.radians(viewing_angle)) + 1.0)]
    eye = np.asarray(eye, np.float32)
    direction = np.asarray(camera_direction, np.float32)
    up = np.asarray([0.0, 1.0, 0.0], np.float32)

    def _normalize(v, eps=1e-5):
        return v / max(float(np.linalg.norm(v)), eps)

    z_axis = _normalize(direction)
    x_axis = _normalize(np.cross(up, z_axis))
    y_axis = _normalize(np.cross(z_axis, x_axis))
    r = np.stack([x_axis, y_axis, z_axis], axis=0).astype(np.float32)

    v = vertices - eye[None, None, :]
    v = np.matmul(v, r.T)
    if perspective:
        wdt = math.tan(viewing_angle / 180.0 * math.pi)
        x = v[:, :, 0] / v[:, :, 2] / wdt
        y = v[:, :, 1] / v[:, :, 2] / wdt
        z = v[:, :, 2]
    else:
        x = v[:, :, 0] * viewing_scale
        y = v[:, :, 1] * viewing_scale
        z = v[:, :, 2]
    return np.stack([x, y, z], axis=2)


if __name__ == "__main__":
    key = jax.random.PRNGKey(0)
    k1, k2, k3 = jax.random.split(key, 3)

    # Case 1: default camera, perspective, tiny batch (N not a multiple of 128).
    v1 = jax.random.uniform(k1, (2, 8, 3), jnp.float32, minval=-1.0, maxval=1.0)
    out1 = jax.block_until_ready(
        look_forward(v1, camera_direction=(0.0, 0.0, 1.0),
                     perspective=True, viewing_angle=30.0))
    ref1 = _reference_numpy(np.asarray(v1), (0.0, 0.0, 1.0), True, 30.0, 1.0, None)
    np.testing.assert_allclose(np.asarray(out1), ref1, rtol=5e-5, atol=5e-5)

    # Case 2: tilted camera, orthogonal projection, N not a multiple of 128.
    v2 = jax.random.uniform(k2, (2, 200, 3), jnp.float32, minval=-1.0, maxval=1.0)
    out2 = jax.block_until_ready(
        look_forward(v2, camera_direction=(0.5, -0.3, 1.0),
                     perspective=False, viewing_scale=2.0))
    ref2 = _reference_numpy(np.asarray(v2), (0.5, -0.3, 1.0), False, 30.0, 2.0, None)
    np.testing.assert_allclose(np.asarray(out2), ref2, rtol=5e-5, atol=5e-5)

    # Case 3: tilted camera + explicit eye, perspective, N a multiple of 128
    # (zero-copy packing path: pure reshape, no pad).
    v3 = jax.random.uniform(k3, (1, 256, 3), jnp.float32, minval=-1.0, maxval=1.0)
    eye3 = (0.3, 0.2, -3.0)
    out3 = jax.block_until_ready(
        look_forward(v3, camera_direction=(0.2, 0.1, 1.0),
                     perspective=True, viewing_angle=45.0, eye=eye3))
    ref3 = _reference_numpy(np.asarray(v3), (0.2, 0.1, 1.0), True, 45.0, 1.0, eye3)
    np.testing.assert_allclose(np.asarray(out3), ref3, rtol=5e-5, atol=5e-5)

    print("KERNEL_OK")
</pallas_src>

<mosaic_0001>
module attributes {stable_mosaic.version = 11 : i64} {
  func.func @kernel(%arg0: i32, %arg1: memref<8x384xf32, #tpu.memory_space<vmem>>, %arg2: memref<384x768xf32, #tpu.memory_space<vmem>>, %arg3: memref<1x768xf32, #tpu.memory_space<vmem>>, %arg4: memref<8x384xf32, #tpu.memory_space<vmem>>) attributes {dimension_semantics = [#tpu.dimension_semantics<parallel>], iteration_bounds = array<i64: 1>, scalar_prefetch = 0 : i64, scratch_operands = 0 : i64, tpu.core_type = #tpu.core_type<tc>, window_params = [{transform_indices = @transform_0, window_bounds = array<i64: 8, 384>}, {pipeline_mode = #tpu.pipeline_mode<synchronous>, transform_indices = @transform_1, window_bounds = array<i64: 384, 768>}, {pipeline_mode = #tpu.pipeline_mode<synchronous>, transform_indices = @transform_2, window_bounds = array<i64: 1, 768>}, {transform_indices = @transform_3, window_bounds = array<i64: 8, 384>}]} {
    %c0 = arith.constant 0 : index
    %c0_0 = arith.constant 0 : index
    %0 = vector.load %arg1[%c0, %c0_0] : memref<8x384xf32, #tpu.memory_space<vmem>>, vector<8x384xf32>
    %c0_1 = arith.constant 0 : index
    %c0_2 = arith.constant 0 : index
    %1 = vector.load %arg2[%c0_1, %c0_2] : memref<384x768xf32, #tpu.memory_space<vmem>>, vector<384x768xf32>
    %cst = arith.constant dense<0.000000e+00> : vector<8x768xf32>
    %2 = tpu.matmul %0, %1, %cst {dimension_numbers = #tpu.dot_dimension_numbers<[1], [0], [0], [1], [0, 0, 1, 1], [], []>, precision = #tpu.contract_precision<fp32>} : vector<8x384xf32>, vector<384x768xf32>, vector<8x768xf32> -> vector<8x768xf32>
    %c0_3 = arith.constant 0 : index
    %c0_4 = arith.constant 0 : index
    %3 = vector.load %arg3[%c0_3, %c0_4] : memref<1x768xf32, #tpu.memory_space<vmem>>, vector<1x768xf32>
    %4 = vector.broadcast %3 : vector<1x768xf32> to vector<8x768xf32>
    %5 = arith.addf %2, %4 : vector<8x768xf32>
    %6 = vector.extract_strided_slice %5 {offsets = [0, 0], sizes = [8, 384], strides = [1, 1]} : vector<8x768xf32> to vector<8x384xf32>
    %7 = vector.extract_strided_slice %5 {offsets = [0, 384], sizes = [8, 384], strides = [1, 1]} : vector<8x768xf32> to vector<8x384xf32>
    %8 = arith.divf %6, %7 : vector<8x384xf32>
    %c0_5 = arith.constant 0 : index
    %c0_6 = arith.constant 0 : index
    %9 = vector.load %arg4[%c0_5, %c0_6] : memref<8x384xf32, #tpu.memory_space<vmem>>, vector<8x384xf32>
    tpu.vector_store %arg4[%c0_5, %c0_6], %8 {strides = array<i32>} : memref<8x384xf32, #tpu.memory_space<vmem>>, vector<8x384xf32>,
    return
  }
  func.func @transform_0(%arg0: i32) -> (i32, i32) {
    %c0_i32 = arith.constant 0 : i32
    %c0_i32_0 = arith.constant 0 : i32
    return %arg0, %c0_i32 : i32, i32
  }
  func.func @transform_1(%arg0: i32) -> (i32, i32) {
    %c0_i32 = arith.constant 0 : i32
    %c0_i32_0 = arith.constant 0 : i32
    %c0_i32_1 = arith.constant 0 : i32
    return %c0_i32, %c0_i32_0 : i32, i32
  }
  func.func @transform_2(%arg0: i32) -> (i32, i32) {
    %c0_i32 = arith.constant 0 : i32
    %c0_i32_0 = arith.constant 0 : i32
    %c0_i32_1 = arith.constant 0 : i32
    return %c0_i32, %c0_i32_0 : i32, i32
  }
  func.func @transform_3(%arg0: i32) -> (i32, i32) {
    %c0_i32 = arith.constant 0 : i32
    %c0_i32_0 = arith.constant 0 : i32
    return %arg0, %c0_i32 : i32, i32
  }
}

</mosaic_0001>

<llo_original>
// kernel: tpu_custom_call.1
$region0: #{tpu_custom_call.1}
  #allocation0 [shape = 'u32[]', space=smem, size = 0x4, offset = 0x4, fixed_abs, tag = 'smem constant byte address 0x4 - core index']
  #allocation1 [shape = 'u32[72,128]{1,0:T(1,128)}', space=vmem, size = 0x9000, scoped, tag = 'internal scratch']
  %s0 = inlined_call_operand.hbm [shape: f32[8,384], index: 0, kind: input, shape index: {}]
  %s1 = inlined_call_operand.hbm [shape: f32[384,768], index: 1, kind: input, shape index: {}]
  %s2 = inlined_call_operand.hbm [shape: f32[1,768], index: 2, kind: input, shape index: {}]
  %s3 = inlined_call_operand.hbm [shape: f32[8,384], index: 3, kind: output, shape index: {}]
  %s4 = sld [smem:[#allocation0]]
  $region34: #{tpu_custom_call.1} parent=0
    _
  %s6 = ssub.s32 1, %s4
  %s7 = scalar_select 0, %s6, %s4
  $region1: #{tpu_custom_call.1} parent=0
    #allocation2 [shape = 'u8[12288]{0}', space=vmem, size = 0x3000, scoped, tag = 'input window, operand 0, single buffered']
    #allocation3 [shape = 's32[1]{0}', space=sflag, size = 0x4, scoped, tag = 'scoped memory for tpu_custom_call.1']
    #allocation4 [shape = 's32[1]{0}', space=sflag, size = 0x4, scoped, tag = 'scoped memory for tpu_custom_call.1']
    #allocation5 [shape = 'u8[1179648]{0}', space=vmem, size = 0x120000, scoped, tag = 'input window, operand 1, single buffered']
    #allocation6 [shape = 's32[1]{0}', space=sflag, size = 0x4, scoped, tag = 'scoped memory for tpu_custom_call.1']
    #allocation7 [shape = 'u8[3072]{0}', space=vmem, size = 0xc00, scoped, tag = 'input window, operand 2, single buffered']
    #allocation8 [shape = 'u8[12288]{0}', space=vmem, size = 0x3000, scoped, tag = 'output window, operand 0, single buffered']
    %8 = vsyncpa [#allocation3], 0
    %9 = vsyncpa [#allocation6], 0
    %10 = vsyncpa [#allocation4], 0
    // Predicated region
    $region2: #{tpu_custom_call.1} parent=1 // pred_check
      _
    $region3: #{tpu_custom_call.1} parent=1 // pred_check_branch
      %12 = sbr.rel (0) target = $region5
    $region4: #{tpu_custom_call.1} parent=1 // pred_region
      %14 = vsyncadd [#allocation3], 0
      %s16 = sshll.u32 %s0, 4
      %s17 = int_to_ptr.hbm [resolvable:$true] %s16
      %s18 = sshll.u32 [#allocation2], 4
      %s19 = int_to_ptr.vmem [resolvable:$true] %s18
      %21 = dma.hbm_to_vmem [thread:$0]  %s17, 384, %s19, [#allocation3]
    $region5: #{tpu_custom_call.1} parent=1 // pred_fallthru
      _
    // Predicated region
    $region6: #{tpu_custom_call.1} parent=1 // pred_check
      _
    $region7: #{tpu_custom_call.1} parent=1 // pred_check_branch
      %23 = sbr.rel (0) target = $region9
    $region8: #{tpu_custom_call.1} parent=1 // pred_region
      %25 = vsyncadd [#allocation6], 0
      %s26 = sshll.u32 %s1, 4
      %s27 = int_to_ptr.hbm [resolvable:$true] %s26
      %s28 = sshll.u32 [#allocation5], 4
      %s29 = int_to_ptr.vmem [resolvable:$true] %s28
      %34 = dma.hbm_to_vmem [thread:$0]  %s27, 36864, %s29, [#allocation6], 768, 768, 48
    $region9: #{tpu_custom_call.1} parent=1 // pred_fallthru
      _
    // Predicated region
    $region10: #{tpu_custom_call.1} parent=1 // pred_check
      _
    $region11: #{tpu_custom_call.1} parent=1 // pred_check_branch
      %36 = sbr.rel (0) target = $region13
    $region12: #{tpu_custom_call.1} parent=1 // pred_region
      %38 = vsyncadd [#allocation6], 0
      %s40 = sshll.u32 %s2, 4
      %s41 = int_to_ptr.hbm [resolvable:$true] %s40
      %s42 = sshll.u32 [#allocation7], 4
      %s43 = int_to_ptr.vmem [resolvable:$true] %s42
      %45 = dma.hbm_to_vmem [thread:$0]  %s41, 96, %s43, [#allocation6]
    $region13: #{tpu_custom_call.1} parent=1 // pred_fallthru
      _
    // Predicated region
    $region14: #{tpu_custom_call.1} parent=1 // pred_check
      _
    $region15: #{tpu_custom_call.1} parent=1 // pred_check_branch
      %47 = sbr.rel (0) target = $region17
    $region16: #{tpu_custom_call.1} parent=1 // pred_region
      %49 = dma.done [#allocation3], 384
    $region17: #{tpu_custom_call.1} parent=1 // pred_fallthru
      _
    // Predicated region
    $region18: #{tpu_custom_call.1} parent=1 // pred_check
      _
    $region19: #{tpu_custom_call.1} parent=1 // pred_check_branch
      %51 = sbr.rel (0) target = $region21
    $region20: #{tpu_custom_call.1} parent=1 // pred_region
      %53 = dma.done [#allocation6], 36864
    $region21: #{tpu_custom_call.1} parent=1 // pred_fallthru
      _
    // Predicated region
    $region22: #{tpu_custom_call.1} parent=1 // pred_check
      _
    $region23: #{tpu_custom_call.1} parent=1 // pred_check_branch
      %55 = sbr.rel (0) target = $region25
    $region24: #{tpu_custom_call.1} parent=1 // pred_region
      %57 = dma.done [#allocation6], 96
    $region25: #{tpu_custom_call.1} parent=1 // pred_fallthru
      _
    %v58 = vld [vmem:[#allocation2] sm:$0xff]
    %v59 = vld [vmem:[#allocation2 + $0x8] sm:$0xff]
    %v60 = vld [vmem:[#allocation2 + $0x10] sm:$0xff]
    %v61 = vld [vmem:[#allocation5] sm:$0xff]
    %v62 = vld [vmem:[#allocation5 + $0x8] sm:$0xff]
    %v63 = vld [vmem:[#allocation5 + $0x10] sm:$0xff]
    %v64 = vld [vmem:[#allocation5 + $0x18] sm:$0xff]
    %v65 = vld [vmem:[#allocation5 + $0x20] sm:$0xff]
    %v66 = vld [vmem:[#allocation5 + $0x28] sm:$0xff]
    %v67 = vld [vmem:[#allocation5 + $0x30] sm:$0xff]
    %v68 = vld [vmem:[#allocation5 + $0x38] sm:$0xff]
    %v69 = vld [vmem:[#allocation5 + $0x40] sm:$0xff]
    %v70 = vld [vmem:[#allocation5 + $0x48] sm:$0xff]
    %v71 = vld [vmem:[#allocation5 + $0x50] sm:$0xff]
    %v72 = vld [vmem:[#allocation5 + $0x58] sm:$0xff]
    %v73 = vld [vmem:[#allocation5 + $0x60] sm:$0xff]
    %v74 = vld [vmem:[#allocation5 + $0x68] sm:$0xff]
    %v75 = vld [vmem:[#allocation5 + $0x70] sm:$0xff]
    %v76 = vld [vmem:[#allocation5 + $0x78] sm:$0xff]
    %v77 = vld [vmem:[#allocation5 + $0x80] sm:$0xff]
    %v78 = vld [vmem:[#allocation5 + $0x88] sm:$0xff]
    %v79 = vld [vmem:[#allocation5 + $0x90] sm:$0xff]
    %v80 = vld [vmem:[#allocation5 + $0x98] sm:$0xff]
    %v81 = vld [vmem:[#allocation5 + $0xa0] sm:$0xff]
    %v82 = vld [vmem:[#allocation5 + $0xa8] sm:$0xff]
    %v83 = vld [vmem:[#allocation5 + $0xb0] sm:$0xff]
    %v84 = vld [vmem:[#allocation5 + $0xb8] sm:$0xff]
    %v85 = vld [vmem:[#allocation5 + $0xc0] sm:$0xff]
    %v86 = vld [vmem:[#allocation5 + $0xc8] sm:$0xff]
    %v87 = vld [vmem:[#allocation5 + $0xd0] sm:$0xff]
    %v88 = vld [vmem:[#allocation5 + $0xd8] sm:$0xff]
    %v89 = vld [vmem:[#allocation5 + $0xe0] sm:$0xff]
    %v90 = vld [vmem:[#allocation5 + $0xe8] sm:$0xff]
    %v91 = vld [vmem:[#allocation5 + $0xf0] sm:$0xff]
    %v92 = vld [vmem:[#allocation5 + $0xf8] sm:$0xff]
    %v93 = vld [vmem:[#allocation5 + $0x100] sm:$0xff]
    %v94 = vld [vmem:[#allocation5 + $0x108] sm:$0xff]
    %v95 = vld [vmem:[#allocation5 + $0x110] sm:$0xff]
    %v96 = vld [vmem:[#allocation5 + $0x118] sm:$0xff]
    %v97 = vld [vmem:[#allocation5 + $0x120] sm:$0xff]
    %v98 = vld [vmem:[#allocation5 + $0x128] sm:$0xff]
    %v99 = vld [vmem:[#allocation5 + $0x130] sm:$0xff]
    %v100 = vld [vmem:[#allocation5 + $0x138] sm:$0xff]
    %v101 = vld [vmem:[#allocation5 + $0x140] sm:$0xff]
    %v102 = vld [vmem:[#allocation5 + $0x148] sm:$0xff]
    %v103 = vld [vmem:[#allocation5 + $0x150] sm:$0xff]
    %v104 = vld [vmem:[#allocation5 + $0x158] sm:$0xff]
    %v105 = vld [vmem:[#allocation5 + $0x160] sm:$0xff]
    %v106 = vld [vmem:[#allocation5 + $0x168] sm:$0xff]
    %v107 = vld [vmem:[#allocation5 + $0x170] sm:$0xff]
    %v108 = vld [vmem:[#allocation5 + $0x178] sm:$0xff]
    %v109 = vld [vmem:[#allocation5 + $0x180] sm:$0xff]
    %v110 = vld [vmem:[#allocation5 + $0x188] sm:$0xff]
    %v111 = vld [vmem:[#allocation5 + $0x190] sm:$0xff]
    %v112 = vld [vmem:[#allocation5 + $0x198] sm:$0xff]
    %v113 = vld [vmem:[#allocation5 + $0x1a0] sm:$0xff]
    %v114 = vld [vmem:[#allocation5 + $0x1a8] sm:$0xff]
    %v115 = vld [vmem:[#allocation5 + $0x1b0] sm:$0xff]
    %v116 = vld [vmem:[#allocation5 + $0x1b8] sm:$0xff]
    %v117 = vld [vmem:[#allocation5 + $0x1c0] sm:$0xff]
    %v118 = vld [vmem:[#allocation5 + $0x1c8] sm:$0xff]
    %v119 = vld [vmem:[#allocation5 + $0x1d0] sm:$0xff]
    %v120 = vld [vmem:[#allocation5 + $0x1d8] sm:$0xff]
    %v121 = vld [vmem:[#allocation5 + $0x1e0] sm:$0xff]
    %v122 = vld [vmem:[#allocation5 + $0x1e8] sm:$0xff]
    %v123 = vld [vmem:[#allocation5 + $0x1f0] sm:$0xff]
    %v124 = vld [vmem:[#allocation5 + $0x1f8] sm:$0xff]
    %v125 = vld [vmem:[#allocation5 + $0x200] sm:$0xff]
    %v126 = vld [vmem:[#allocation5 + $0x208] sm:$0xff]
    %v127 = vld [vmem:[#allocation5 + $0x210] sm:$0xff]
    %v128 = vld [vmem:[#allocation5 + $0x218] sm:$0xff]
    %v129 = vld [vmem:[#allocation5 + $0x220] sm:$0xff]
    %v130 = vld [vmem:[#allocation5 + $0x228] sm:$0xff]
    %v131 = vld [vmem:[#allocation5 + $0x230] sm:$0xff]
    %v132 = vld [vmem:[#allocation5 + $0x238] sm:$0xff]
    %v133 = vld [vmem:[#allocation5 + $0x240] sm:$0xff]
    %v134 = vld [vmem:[#allocation5 + $0x248] sm:$0xff]
    %v135 = vld [vmem:[#allocation5 + $0x250] sm:$0xff]
    %v136 = vld [vmem:[#allocation5 + $0x258] sm:$0xff]
    %v137 = vld [vmem:[#allocation5 + $0x260] sm:$0xff]
    %v138 = vld [vmem:[#allocation5 + $0x268] sm:$0xff]
    %v139 = vld [vmem:[#allocation5 + $0x270] sm:$0xff]
    %v140 = vld [vmem:[#allocation5 + $0x278] sm:$0xff]
    %v141 = vld [vmem:[#allocation5 + $0x280] sm:$0xff]
    %v142 = vld [vmem:[#allocation5 + $0x288] sm:$0xff]
    %v143 = vld [vmem:[#allocation5 + $0x290] sm:$0xff]
    %v144 = vld [vmem:[#allocation5 + $0x298] sm:$0xff]
    %v145 = vld [vmem:[#allocation5 + $0x2a0] sm:$0xff]
    %v146 = vld [vmem:[#allocation5 + $0x2a8] sm:$0xff]
    %v147 = vld [vmem:[#allocation5 + $0x2b0] sm:$0xff]
    %v148 = vld [vmem:[#allocation5 + $0x2b8] sm:$0xff]
    %v149 = vld [vmem:[#allocation5 + $0x2c0] sm:$0xff]
    %v150 = vld [vmem:[#allocation5 + $0x2c8] sm:$0xff]
    %v151 = vld [vmem:[#allocation5 + $0x2d0] sm:$0xff]
    %v152 = vld [vmem:[#allocation5 + $0x2d8] sm:$0xff]
    %v153 = vld [vmem:[#allocation5 + $0x2e0] sm:$0xff]
    %v154 = vld [vmem:[#allocation5 + $0x2e8] sm:$0xff]
    %v155 = vld [vmem:[#allocation5 + $0x2f0] sm:$0xff]
    %v156 = vld [vmem:[#allocation5 + $0x2f8] sm:$0xff]
    %v157 = vld [vmem:[#allocation5 + $0x300] sm:$0xff]
    %v158 = vld [vmem:[#allocation5 + $0x308] sm:$0xff]
    %v159 = vld [vmem:[#allocation5 + $0x310] sm:$0xff]
    %v160 = vld [vmem:[#allocation5 + $0x318] sm:$0xff]
    %v161 = vld [vmem:[#allocation5 + $0x320] sm:$0xff]
    %v162 = vld [vmem:[#allocation5 + $0x328] sm:$0xff]
    %v163 = vld [vmem:[#allocation5 + $0x330] sm:$0xff]
    %v164 = vld [vmem:[#allocation5 + $0x338] sm:$0xff]
    %v165 = vld [vmem:[#allocation5 + $0x340] sm:$0xff]
    %v166 = vld [vmem:[#allocation5 + $0x348] sm:$0xff]
    %v167 = vld [vmem:[#allocation5 + $0x350] sm:$0xff]
    %v168 = vld [vmem:[#allocation5 + $0x358] sm:$0xff]
    %v169 = vld [vmem:[#allocation5 + $0x360] sm:$0xff]
    %v170 = vld [vmem:[#allocation5 + $0x368] sm:$0xff]
    %v171 = vld [vmem:[#allocation5 + $0x370] sm:$0xff]
    %v172 = vld [vmem:[#allocation5 + $0x378] sm:$0xff]
    %v173 = vld [vmem:[#allocation5 + $0x380] sm:$0xff]
    %v174 = vld [vmem:[#allocation5 + $0x388] sm:$0xff]
    %v175 = vld [vmem:[#allocation5 + $0x390] sm:$0xff]
    %v176 = vld [vmem:[#allocation5 + $0x398] sm:$0xff]
    %v177 = vld [vmem:[#allocation5 + $0x3a0] sm:$0xff]
    %v178 = vld [vmem:[#allocation5 + $0x3a8] sm:$0xff]
    %v179 = vld [vmem:[#allocation5 + $0x3b0] sm:$0xff]
    %v180 = vld [vmem:[#allocation5 + $0x3b8] sm:$0xff]
    %v181 = vld [vmem:[#allocation5 + $0x3c0] sm:$0xff]
    %v182 = vld [vmem:[#allocation5 + $0x3c8] sm:$0xff]
    %v183 = vld [vmem:[#allocation5 + $0x3d0] sm:$0xff]
    %v184 = vld [vmem:[#allocation5 + $0x3d8] sm:$0xff]
    %v185 = vld [vmem:[#allocation5 + $0x3e0] sm:$0xff]
    %v186 = vld [vmem:[#allocation5 + $0x3e8] sm:$0xff]
    %v187 = vld [vmem:[#allocation5 + $0x3f0] sm:$0xff]
    %v188 = vld [vmem:[#allocation5 + $0x3f8] sm:$0xff]
    %v189 = vld [vmem:[#allocation5 + $0x400] sm:$0xff]
    %v190 = vld [vmem:[#allocation5 + $0x408] sm:$0xff]
    %v191 = vld [vmem:[#allocation5 + $0x410] sm:$0xff]
    %v192 = vld [vmem:[#allocation5 + $0x418] sm:$0xff]
    %v193 = vld [vmem:[#allocation5 + $0x420] sm:$0xff]
    %v194 = vld [vmem:[#allocation5 + $0x428] sm:$0xff]
    %v195 = vld [vmem:[#allocation5 + $0x430] sm:$0xff]
    %v196 = vld [vmem:[#allocation5 + $0x438] sm:$0xff]
    %v197 = vld [vmem:[#allocation5 + $0x440] sm:$0xff]
    %v198 = vld [vmem:[#allocation5 + $0x448] sm:$0xff]
    %v199 = vld [vmem:[#allocation5 + $0x450] sm:$0xff]
    %v200 = vld [vmem:[#allocation5 + $0x458] sm:$0xff]
    %v201 = vld [vmem:[#allocation5 + $0x460] sm:$0xff]
    %v202 = vld [vmem:[#allocation5 + $0x468] sm:$0xff]
    %v203 = vld [vmem:[#allocation5 + $0x470] sm:$0xff]
    %v204 = vld [vmem:[#allocation5 + $0x478] sm:$0xff]
    %v205 = vld [vmem:[#allocation5 + $0x480] sm:$0xff]
    %v206 = vld [vmem:[#allocation5 + $0x488] sm:$0xff]
    %v207 = vld [vmem:[#allocation5 + $0x490] sm:$0xff]
    %v208 = vld [vmem:[#allocation5 + $0x498] sm:$0xff]
    %v209 = vld [vmem:[#allocation5 + $0x4a0] sm:$0xff]
    %v210 = vld [vmem:[#allocation5 + $0x4a8] sm:$0xff]
    %v211 = vld [vmem:[#allocation5 + $0x4b0] sm:$0xff]
    %v212 = vld [vmem:[#allocation5 + $0x4b8] sm:$0xff]
    %v213 = vld [vmem:[#allocation5 + $0x4c0] sm:$0xff]
    %v214 = vld [vmem:[#allocation5 + $0x4c8] sm:$0xff]
    %v215 = vld [vmem:[#allocation5 + $0x4d0] sm:$0xff]
    %v216 = vld [vmem:[#allocation5 + $0x4d8] sm:$0xff]
    %v217 = vld [vmem:[#allocation5 + $0x4e0] sm:$0xff]
    %v218 = vld [vmem:[#allocation5 + $0x4e8] sm:$0xff]
    %v219 = vld [vmem:[#allocation5 + $0x4f0] sm:$0xff]
    %v220 = vld [vmem:[#allocation5 + $0x4f8] sm:$0xff]
    %v221 = vld [vmem:[#allocation5 + $0x500] sm:$0xff]
    %v222 = vld [vmem:[#allocation5 + $0x508] sm:$0xff]
    %v223 = vld [vmem:[#allocation5 + $0x510] sm:$0xff]
    %v224 = vld [vmem:[#allocation5 + $0x518] sm:$0xff]
    %v225 = vld [vmem:[#allocation5 + $0x520] sm:$0xff]
    %v226 = vld [vmem:[#allocation5 + $0x528] sm:$0xff]
    %v227 = vld [vmem:[#allocation5 + $0x530] sm:$0xff]
    %v228 = vld [vmem:[#allocation5 + $0x538] sm:$0xff]
    %v229 = vld [vmem:[#allocation5 + $0x540] sm:$0xff]
    %v230 = vld [vmem:[#allocation5 + $0x548] sm:$0xff]
    %v231 = vld [vmem:[#allocation5 + $0x550] sm:$0xff]
    %v232 = vld [vmem:[#allocation5 + $0x558] sm:$0xff]
    %v233 = vld [vmem:[#allocation5 + $0x560] sm:$0xff]
    %v234 = vld [vmem:[#allocation5 + $0x568] sm:$0xff]
    %v235 = vld [vmem:[#allocation5 + $0x570] sm:$0xff]
    %v236 = vld [vmem:[#allocation5 + $0x578] sm:$0xff]
    %v237 = vld [vmem:[#allocation5 + $0x580] sm:$0xff]
    %v238 = vld [vmem:[#allocation5 + $0x588] sm:$0xff]
    %v239 = vld [vmem:[#allocation5 + $0x590] sm:$0xff]
    %v240 = vld [vmem:[#allocation5 + $0x598] sm:$0xff]
    %v241 = vld [vmem:[#allocation5 + $0x5a0] sm:$0xff]
    %v242 = vld [vmem:[#allocation5 + $0x5a8] sm:$0xff]
    %v243 = vld [vmem:[#allocation5 + $0x5b0] sm:$0xff]
    %v244 = vld [vmem:[#allocation5 + $0x5b8] sm:$0xff]
    %v245 = vld [vmem:[#allocation5 + $0x5c0] sm:$0xff]
    %v246 = vld [vmem:[#allocation5 + $0x5c8] sm:$0xff]
    %v247 = vld [vmem:[#allocation5 + $0x5d0] sm:$0xff]
    %v248 = vld [vmem:[#allocation5 + $0x5d8] sm:$0xff]
    %v249 = vld [vmem:[#allocation5 + $0x5e0] sm:$0xff]
    %v250 = vld [vmem:[#allocation5 + $0x5e8] sm:$0xff]
    %v251 = vld [vmem:[#allocation5 + $0x5f0] sm:$0xff]
    %v252 = vld [vmem:[#allocation5 + $0x5f8] sm:$0xff]
    %v253 = vld [vmem:[#allocation5 + $0x600] sm:$0xff]
    %v254 = vld [vmem:[#allocation5 + $0x608] sm:$0xff]
    %v255 = vld [vmem:[#allocation5 + $0x610] sm:$0xff]
    %v256 = vld [vmem:[#allocation5 + $0x618] sm:$0xff]
    %v257 = vld [vmem:[#allocation5 + $0x620] sm:$0xff]
    %v258 = vld [vmem:[#allocation5 + $0x628] sm:$0xff]
    %v259 = vld [vmem:[#allocation5 + $0x630] sm:$0xff]
    %v260 = vld [vmem:[#allocation5 + $0x638] sm:$0xff]
    %v261 = vld [vmem:[#allocation5 + $0x640] sm:$0xff]
    %v262 = vld [vmem:[#allocation5 + $0x648] sm:$0xff]
    %v263 = vld [vmem:[#allocation5 + $0x650] sm:$0xff]
    %v264 = vld [vmem:[#allocation5 + $0x658] sm:$0xff]
    %v265 = vld [vmem:[#allocation5 + $0x660] sm:$0xff]
    %v266 = vld [vmem:[#allocation5 + $0x668] sm:$0xff]
    %v267 = vld [vmem:[#allocation5 + $0x670] sm:$0xff]
    %v268 = vld [vmem:[#allocation5 + $0x678] sm:$0xff]
    %v269 = vld [vmem:[#allocation5 + $0x680] sm:$0xff]
    %v270 = vld [vmem:[#allocation5 + $0x688] sm:$0xff]
    %v271 = vld [vmem:[#allocation5 + $0x690] sm:$0xff]
    %v272 = vld [vmem:[#allocation5 + $0x698] sm:$0xff]
    %v273 = vld [vmem:[#allocation5 + $0x6a0] sm:$0xff]
    %v274 = vld [vmem:[#allocation5 + $0x6a8] sm:$0xff]
    %v275 = vld [vmem:[#allocation5 + $0x6b0] sm:$0xff]
    %v276 = vld [vmem:[#allocation5 + $0x6b8] sm:$0xff]
    %v277 = vld [vmem:[#allocation5 + $0x6c0] sm:$0xff]
    %v278 = vld [vmem:[#allocation5 + $0x6c8] sm:$0xff]
    %v279 = vld [vmem:[#allocation5 + $0x6d0] sm:$0xff]
    %v280 = vld [vmem:[#allocation5 + $0x6d8] sm:$0xff]
    %v281 = vld [vmem:[#allocation5 + $0x6e0] sm:$0xff]
    %v282 = vld [vmem:[#allocation5 + $0x6e8] sm:$0xff]
    %v283 = vld [vmem:[#allocation5 + $0x6f0] sm:$0xff]
    %v284 = vld [vmem:[#allocation5 + $0x6f8] sm:$0xff]
    %v285 = vld [vmem:[#allocation5 + $0x700] sm:$0xff]
    %v286 = vld [vmem:[#allocation5 + $0x708] sm:$0xff]
    %v287 = vld [vmem:[#allocation5 + $0x710] sm:$0xff]
    %v288 = vld [vmem:[#allocation5 + $0x718] sm:$0xff]
    %v289 = vld [vmem:[#allocation5 + $0x720] sm:$0xff]
    %v290 = vld [vmem:[#allocation5 + $0x728] sm:$0xff]
    %v291 = vld [vmem:[#allocation5 + $0x730] sm:$0xff]
    %v292 = vld [vmem:[#allocation5 + $0x738] sm:$0xff]
    %v293 = vld [vmem:[#allocation5 + $0x740] sm:$0xff]
    %v294 = vld [vmem:[#allocation5 + $0x748] sm:$0xff]
    %v295 = vld [vmem:[#allocation5 + $0x750] sm:$0xff]
    %v296 = vld [vmem:[#allocation5 + $0x758] sm:$0xff]
    %v297 = vld [vmem:[#allocation5 + $0x760] sm:$0xff]
    %v298 = vld [vmem:[#allocation5 + $0x768] sm:$0xff]
    %v299 = vld [vmem:[#allocation5 + $0x770] sm:$0xff]
    %v300 = vld [vmem:[#allocation5 + $0x778] sm:$0xff]
    %v301 = vld [vmem:[#allocation5 + $0x780] sm:$0xff]
    %v302 = vld [vmem:[#allocation5 + $0x788] sm:$0xff]
    %v303 = vld [vmem:[#allocation5 + $0x790] sm:$0xff]
    %v304 = vld [vmem:[#allocation5 + $0x798] sm:$0xff]
    %v305 = vld [vmem:[#allocation5 + $0x7a0] sm:$0xff]
    %v306 = vld [vmem:[#allocation5 + $0x7a8] sm:$0xff]
    %v307 = vld [vmem:[#allocation5 + $0x7b0] sm:$0xff]
    %v308 = vld [vmem:[#allocation5 + $0x7b8] sm:$0xff]
    %v309 = vld [vmem:[#allocation5 + $0x7c0] sm:$0xff]
    %v310 = vld [vmem:[#allocation5 + $0x7c8] sm:$0xff]
    %v311 = vld [vmem:[#allocation5 + $0x7d0] sm:$0xff]
    %v312 = vld [vmem:[#allocation5 + $0x7d8] sm:$0xff]
    %v313 = vld [vmem:[#allocation5 + $0x7e0] sm:$0xff]
    %v314 = vld [vmem:[#allocation5 + $0x7e8] sm:$0xff]
    %v315 = vld [vmem:[#allocation5 + $0x7f0] sm:$0xff]
    %v316 = vld [vmem:[#allocation5 + $0x7f8] sm:$0xff]
    %v317 = vld [vmem:[#allocation5 + $0x800] sm:$0xff]
    %v318 = vld [vmem:[#allocation5 + $0x808] sm:$0xff]
    %v319 = vld [vmem:[#allocation5 + $0x810] sm:$0xff]
    %v320 = vld [vmem:[#allocation5 + $0x818] sm:$0xff]
    %v321 = vld [vmem:[#allocation5 + $0x820] sm:$0xff]
    %v322 = vld [vmem:[#allocation5 + $0x828] sm:$0xff]
    %v323 = vld [vmem:[#allocation5 + $0x830] sm:$0xff]
    %v324 = vld [vmem:[#allocation5 + $0x838] sm:$0xff]
    %v325 = vld [vmem:[#allocation5 + $0x840] sm:$0xff]
    %v326 = vld [vmem:[#allocation5 + $0x848] sm:$0xff]
    %v327 = vld [vmem:[#allocation5 + $0x850] sm:$0xff]
    %v328 = vld [vmem:[#allocation5 + $0x858] sm:$0xff]
    %v329 = vld [vmem:[#allocation5 + $0x860] sm:$0xff]
    %v330 = vld [vmem:[#allocation5 + $0x868] sm:$0xff]
    %v331 = vld [vmem:[#allocation5 + $0x870] sm:$0xff]
    %v332 = vld [vmem:[#allocation5 + $0x878] sm:$0xff]
    %v333 = vld [vmem:[#allocation5 + $0x880] sm:$0xff]
    %v334 = vld [vmem:[#allocation5 + $0x888] sm:$0xff]
    %v335 = vld [vmem:[#allocation5 + $0x890] sm:$0xff]
    %v336 = vld [vmem:[#allocation5 + $0x898] sm:$0xff]
    %v337 = vld [vmem:[#allocation5 + $0x8a0] sm:$0xff]
    %v338 = vld [vmem:[#allocation5 + $0x8a8] sm:$0xff]
    %v339 = vld [vmem:[#allocation5 + $0x8b0] sm:$0xff]
    %v340 = vld [vmem:[#allocation5 + $0x8b8] sm:$0xff]
    %v341 = vld [vmem:[#allocation5 + $0x8c0] sm:$0xff]
    %v342 = vld [vmem:[#allocation5 + $0x8c8] sm:$0xff]
    %v343 = vld [vmem:[#allocation5 + $0x8d0] sm:$0xff]
    %v344 = vld [vmem:[#allocation5 + $0x8d8] sm:$0xff]
    %v345 = vld [vmem:[#allocation5 + $0x8e0] sm:$0xff]
    %v346 = vld [vmem:[#allocation5 + $0x8e8] sm:$0xff]
    %v347 = vld [vmem:[#allocation5 + $0x8f0] sm:$0xff]
    %v348 = vld [vmem:[#allocation5 + $0x8f8] sm:$0xff]
    %v349 = vld [vmem:[#allocation7] sm:$0x3f]
    %v351 = vperm.slane %v349, 0
    %v352 = vperm.slane %v349, 1
    %v353 = vperm.slane %v349, 2
    %v354 = vperm.slane %v349, 3
    %v355 = vperm.slane %v349, 4
    %v356 = vperm.slane %v349, 5
    %v363 = vand.u32 %v151, 4294901760
    %364 = vmatpush.msra.mxu0 %v363
    %v365 = vand.u32 %v145, 4294901760
    %366 = vmatpush.msra.mxu0 %v365
    %v367 = vand.u32 %v139, 4294901760
    %368 = vmatpush.msra.mxu0 %v367
    %v369 = vand.u32 %v133, 4294901760
    %370 = vmatpush.msra.mxu0 %v369
    %v371 = vand.u32 %v127, 4294901760
    %372 = vmatpush.msra.mxu0 %v371
    %v373 = vand.u32 %v121, 4294901760
    %374 = vmatpush.msra.mxu0 %v373
    %v375 = vand.u32 %v115, 4294901760
    %376 = vmatpush.msra.mxu0 %v375
    %v377 = vand.u32 %v109, 4294901760
    %378 = vmatpush.msra.mxu0 %v377
    %v379 = vand.u32 %v103, 4294901760
    %380 = vmatpush.msra.mxu0 %v379
    %v381 = vand.u32 %v97, 4294901760
    %382 = vmatpush.msra.mxu0 %v381
    %v383 = vand.u32 %v91, 4294901760
    %384 = vmatpush.msra.mxu0 %v383
    %v385 = vand.u32 %v85, 4294901760
    %386 = vmatpush.msra.mxu0 %v385
    %v387 = vand.u32 %v79, 4294901760
    %388 = vmatpush.msra.mxu0 %v387
    %v389 = vand.u32 %v73, 4294901760
    %390 = vmatpush.msra.mxu0 %v389
    %v391 = vand.u32 %v67, 4294901760
    %392 = vmatpush.msra.mxu0 %v391
    %v393 = vand.u32 %v61, 4294901760
    %394 = vmatpush.msra.mxu0 %v393
    %v395 = vand.u32 %v58, 4294901760
    %v396 = vsub.f32 %v58, %v395
    %v397 = vand.u32 %v396, 4294901760
    %v398 = vsub.f32 %v396, %v397
    %v399 = vand.u32 %v398, 4294901760
    %400 = vmatmul.f32.gmra.mxu0 %v399
    %v401 = vpop.f32.mrf.mxu0
    %v402 = vadd.f32 %v351, %v401
    %403 = vdwg.mxu0
    %v404 = vand.u32 %v151, 4294901760
    %v405 = vsub.f32 %v151, %v404
    %v406 = vand.u32 %v405, 4294901760
    %v407 = vsub.f32 %v405, %v406
    %v408 = vand.u32 %v407, 4294901760
    %409 = vmatpush.msra.mxu0 %v408
    %v410 = vand.u32 %v145, 4294901760
    %v411 = vsub.f32 %v145, %v410
    %v412 = vand.u32 %v411, 4294901760
    %v413 = vsub.f32 %v411, %v412
    %v414 = vand.u32 %v413, 4294901760
    %415 = vmatpush.msra.mxu0 %v414
    %v416 = vand.u32 %v139, 4294901760
    %v417 = vsub.f32 %v139, %v416
    %v418 = vand.u32 %v417, 4294901760
    %v419 = vsub.f32 %v417, %v418
    %v420 = vand.u32 %v419, 4294901760
    %421 = vmatpush.msra.mxu0 %v420
    %v422 = vand.u32 %v133, 4294901760
    %v423 = vsub.f32 %v133, %v422
    %v424 = vand.u32 %v423, 4294901760
    %v425 = vsub.f32 %v423, %v424
    %v426 = vand.u32 %v425, 4294901760
    %427 = vmatpush.msra.mxu0 %v426
    %v428 = vand.u32 %v127, 4294901760
    %v429 = vsub.f32 %v127, %v428
    %v430 = vand.u32 %v429, 4294901760
    %v431 = vsub.f32 %v429, %v430
    %v432 = vand.u32 %v431, 4294901760
    %433 = vmatpush.msra.mxu0 %v432
    %v434 = vand.u32 %v121, 4294901760
    %v435 = vsub.f32 %v121, %v434
    %v436 = vand.u32 %v435, 4294901760
    %v437 = vsub.f32 %v435, %v436
    %v438 = vand.u32 %v437, 4294901760
    %439 = vmatpush.msra.mxu0 %v438
    %v440 = vand.u32 %v115, 4294901760
    %v441 = vsub.f32 %v115, %v440
    %v442 = vand.u32 %v441, 4294901760
    %v443 = vsub.f32 %v441, %v442
    %v444 = vand.u32 %v443, 4294901760
    %445 = vmatpush.msra.mxu0 %v444
    %v446 = vand.u32 %v109, 4294901760
    %v447 = vsub.f32 %v109, %v446
    %v448 = vand.u32 %v447, 4294901760
    %v449 = vsub.f32 %v447, %v448
    %v450 = vand.u32 %v449, 4294901760
    %451 = vmatpush.msra.mxu0 %v450
    %v452 = vand.u32 %v103, 4294901760
    %v453 = vsub.f32 %v103, %v452
    %v454 = vand.u32 %v453, 4294901760
    %v455 = vsub.f32 %v453, %v454
    %v456 = vand.u32 %v455, 4294901760
    %457 = vmatpush.msra.mxu0 %v456
    %v458 = vand.u32 %v97, 4294901760
    %v459 = vsub.f32 %v97, %v458
    %v460 = vand.u32 %v459, 4294901760
    %v461 = vsub.f32 %v459, %v460
    %v462 = vand.u32 %v461, 4294901760
    %463 = vmatpush.msra.mxu0 %v462
    %v464 = vand.u32 %v91, 4294901760
    %v465 = vsub.f32 %v91, %v464
    %v466 = vand.u32 %v465, 4294901760
    %v467 = vsub.f32 %v465, %v466
    %v468 = vand.u32 %v467, 4294901760
    %469 = vmatpush.msra.mxu0 %v468
    %v470 = vand.u32 %v85, 4294901760
    %v471 = vsub.f32 %v85, %v470
    %v472 = vand.u32 %v471, 4294901760
    %v473 = vsub.f32 %v471, %v472
    %v474 = vand.u32 %v473, 4294901760
    %475 = vmatpush.msra.mxu0 %v474
    %v476 = vand.u32 %v79, 4294901760
    %v477 = vsub.f32 %v79, %v476
    %v478 = vand.u32 %v477, 4294901760
    %v479 = vsub.f32 %v477, %v478
    %v480 = vand.u32 %v479, 4294901760
    %481 = vmatpush.msra.mxu0 %v480
    %v482 = vand.u32 %v73, 4294901760
    %v483 = vsub.f32 %v73, %v482
    %v484 = vand.u32 %v483, 4294901760
    %v485 = vsub.f32 %v483, %v484
    %v486 = vand.u32 %v485, 4294901760
    %487 = vmatpush.msra.mxu0 %v486
    %v488 = vand.u32 %v67, 4294901760
    %v489 = vsub.f32 %v67, %v488
    %v490 = vand.u32 %v489, 4294901760
    %v491 = vsub.f32 %v489, %v490
    %v492 = vand.u32 %v491, 4294901760
    %493 = vmatpush.msra.mxu0 %v492
    %v494 = vand.u32 %v61, 4294901760
    %v495 = vsub.f32 %v61, %v494
    %v496 = vand.u32 %v495, 4294901760
    %v497 = vsub.f32 %v495, %v496
    %v498 = vand.u32 %v497, 4294901760
    %499 = vmatpush.msra.mxu0 %v498
    %v500 = vand.u32 %v58, 4294901760
    %501 = vmatmul.f32.gmra.mxu0 %v500
    %v502 = vpop.f32.mrf.mxu0
    %v503 = vadd.f32 %v402, %v502
    %504 = vdwg.mxu0
    %v505 = vand.u32 %v151, 4294901760
    %v506 = vsub.f32 %v151, %v505
    %507 = vmatpush.msra.mxu0 %v506
    %v508 = vand.u32 %v145, 4294901760
    %v509 = vsub.f32 %v145, %v508
    %510 = vmatpush.msra.mxu0 %v509
    %v511 = vand.u32 %v139, 4294901760
    %v512 = vsub.f32 %v139, %v511
    %513 = vmatpush.msra.mxu0 %v512
    %v514 = vand.u32 %v133, 4294901760
    %v515 = vsub.f32 %v133, %v514
    %516 = vmatpush.msra.mxu0 %v515
    %v517 = vand.u32 %v127, 4294901760
    %v518 = vsub.f32 %v127, %v517
    %519 = vmatpush.msra.mxu0 %v518
    %v520 = vand.u32 %v121, 4294901760
    %v521 = vsub.f32 %v121, %v520
    %522 = vmatpush.msra.mxu0 %v521
    %v523 = vand.u32 %v115, 4294901760
    %v524 = vsub.f32 %v115, %v523
    %525 = vmatpush.msra.mxu0 %v524
    %v526 = vand.u32 %v109, 4294901760
    %v527 = vsub.f32 %v109, %v526
    %528 = vmatpush.msra.mxu0 %v527
    %v529 = vand.u32 %v103, 4294901760
    %v530 = vsub.f32 %v103, %v529
    %531 = vmatpush.msra.mxu0 %v530
    %v532 = vand.u32 %v97, 4294901760
    %v533 = vsub.f32 %v97, %v532
    %534 = vmatpush.msra.mxu0 %v533
    %v535 = vand.u32 %v91, 4294901760
    %v536 = vsub.f32 %v91, %v535
    %537 = vmatpush.msra.mxu0 %v536
    %v538 = vand.u32 %v85, 4294901760
    %v539 = vsub.f32 %v85, %v538
    %540 = vmatpush.msra.mxu0 %v539
    %v541 = vand.u32 %v79, 4294901760
    %v542 = vsub.f32 %v79, %v541
    %543 = vmatpush.msra.mxu0 %v542
    %v544 = vand.u32 %v73, 4294901760
    %v545 = vsub.f32 %v73, %v544
    %546 = vmatpush.msra.mxu0 %v545
    %v547 = vand.u32 %v67, 4294901760
    %v548 = vsub.f32 %v67, %v547
    %549 = vmatpush.msra.mxu0 %v548
    %v550 = vand.u32 %v61, 4294901760
    %v551 = vsub.f32 %v61, %v550
    %552 = vmatpush.msra.mxu0 %v551
    %v553 = vand.u32 %v58, 4294901760
    %v554 = vsub.f32 %v58, %v553
    %555 = vmatmul.f32.gmra.mxu0 %v554
    %v556 = vpop.f32.mrf.mxu0
    %v557 = vadd.f32 %v503, %v556
    %558 = vdwg.mxu0
    %v559 = vand.u32 %v151, 4294901760
    %560 = vmatpush.msra.mxu0 %v559
    %v561 = vand.u32 %v145, 4294901760
    %562 = vmatpush.msra.mxu0 %v561
    %v563 = vand.u32 %v139, 4294901760
    %564 = vmatpush.msra.mxu0 %v563
    %v565 = vand.u32 %v133, 4294901760
    %566 = vmatpush.msra.mxu0 %v565
    %v567 = vand.u32 %v127, 4294901760
    %568 = vmatpush.msra.mxu0 %v567
    %v569 = vand.u32 %v121, 4294901760
    %570 = vmatpush.msra.mxu0 %v569
    %v571 = vand.u32 %v115, 4294901760
    %572 = vmatpush.msra.mxu0 %v571
    %v573 = vand.u32 %v109, 4294901760
    %574 = vmatpush.msra.mxu0 %v573
    %v575 = vand.u32 %v103, 4294901760
    %576 = vmatpush.msra.mxu0 %v575
    %v577 = vand.u32 %v97, 4294901760
    %578 = vmatpush.msra.mxu0 %v577
    %v579 = vand.u32 %v91, 4294901760
    %580 = vmatpush.msra.mxu0 %v579
    %v581 = vand.u32 %v85, 4294901760
    %582 = vmatpush.msra.mxu0 %v581
    %v583 = vand.u32 %v79, 4294901760
    %584 = vmatpush.msra.mxu0 %v583
    %v585 = vand.u32 %v73, 4294901760
    %586 = vmatpush.msra.mxu0 %v585
    %v587 = vand.u32 %v67, 4294901760
    %588 = vmatpush.msra.mxu0 %v587
    %v589 = vand.u32 %v61, 4294901760
    %590 = vmatpush.msra.mxu0 %v589
    %v591 = vand.u32 %v58, 4294901760
    %v592 = vsub.f32 %v58, %v591
    %v593 = vand.u32 %v592, 4294901760
    %594 = vmatmul.f32.gmra.mxu0 %v593
    %v595 = vpop.f32.mrf.mxu0
    %v596 = vadd.f32 %v557, %v595
    %597 = vdwg.mxu0
    %v598 = vand.u32 %v151, 4294901760
    %v599 = vsub.f32 %v151, %v598
    %v600 = vand.u32 %v599, 4294901760
    %601 = vmatpush.msra.mxu0 %v600
    %v602 = vand.u32 %v145, 4294901760
    %v603 = vsub.f32 %v145, %v602
    %v604 = vand.u32 %v603, 4294901760
    %605 = vmatpush.msra.mxu0 %v604
    %v606 = vand.u32 %v139, 4294901760
    %v607 = vsub.f32 %v139, %v606
    %v608 = vand.u32 %v607, 4294901760
    %609 = vmatpush.msra.mxu0 %v608
    %v610 = vand.u32 %v133, 4294901760
    %v611 = vsub.f32 %v133, %v610
    %v612 = vand.u32 %v611, 4294901760
    %613 = vmatpush.msra.mxu0 %v612
    %v614 = vand.u32 %v127, 4294901760
    %v615 = vsub.f32 %v127, %v614
    %v616 = vand.u32 %v615, 4294901760
    %617 = vmatpush.msra.mxu0 %v616
    %v618 = vand.u32 %v121, 4294901760
    %v619 = vsub.f32 %v121, %v618
    %v620 = vand.u32 %v619, 4294901760
    %621 = vmatpush.msra.mxu0 %v620
    %v622 = vand.u32 %v115, 4294901760
    %v623 = vsub.f32 %v115, %v622
    %v624 = vand.u32 %v623, 4294901760
    %625 = vmatpush.msra.mxu0 %v624
    %v626 = vand.u32 %v109, 4294901760
    %v627 = vsub.f32 %v109, %v626
    %v628 = vand.u32 %v627, 4294901760
    %629 = vmatpush.msra.mxu0 %v628
    %v630 = vand.u32 %v103, 4294901760
    %v631 = vsub.f32 %v103, %v630
    %v632 = vand.u32 %v631, 4294901760
    %633 = vmatpush.msra.mxu0 %v632
    %v634 = vand.u32 %v97, 4294901760
    %v635 = vsub.f32 %v97, %v634
    %v636 = vand.u32 %v635, 4294901760
    %637 = vmatpush.msra.mxu0 %v636
    %v638 = vand.u32 %v91, 4294901760
    %v639 = vsub.f32 %v91, %v638
    %v640 = vand.u32 %v639, 4294901760
    %641 = vmatpush.msra.mxu0 %v640
    %v642 = vand.u32 %v85, 4294901760
    %v643 = vsub.f32 %v85, %v642
    %v644 = vand.u32 %v643, 4294901760
    %645 = vmatpush.msra.mxu0 %v644
    %v646 = vand.u32 %v79, 4294901760
    %v647 = vsub.f32 %v79, %v646
    %v648 = vand.u32 %v647, 4294901760
    %649 = vmatpush.msra.mxu0 %v648
    %v650 = vand.u32 %v73, 4294901760
    %v651 = vsub.f32 %v73, %v650
    %v652 = vand.u32 %v651, 4294901760
    %653 = vmatpush.msra.mxu0 %v652
    %v654 = vand.u32 %v67, 4294901760
    %v655 = vsub.f32 %v67, %v654
    %v656 = vand.u32 %v655, 4294901760
    %657 = vmatpush.msra.mxu0 %v656
    %v658 = vand.u32 %v61, 4294901760
    %v659 = vsub.f32 %v61, %v658
    %v660 = vand.u32 %v659, 4294901760
    %661 = vmatpush.msra.mxu0 %v660
    %v662 = vand.u32 %v58, 4294901760
    %663 = vmatmul.f32.gmra.mxu0 %v662
    %v664 = vpop.f32.mrf.mxu0
    %v665 = vadd.f32 %v596, %v664
    %666 = vdwg.mxu0
    %v667 = vand.u32 %v151, 4294901760
    %668 = vmatpush.msra.mxu0 %v667
    %v669 = vand.u32 %v145, 4294901760
    %670 = vmatpush.msra.mxu0 %v669
    %v671 = vand.u32 %v139, 4294901760
    %672 = vmatpush.msra.mxu0 %v671
    %v673 = vand.u32 %v133, 4294901760
    %674 = vmatpush.msra.mxu0 %v673
    %v675 = vand.u32 %v127, 4294901760
    %676 = vmatpush.msra.mxu0 %v675
    %v677 = vand.u32 %v121, 4294901760
    %678 = vmatpush.msra.mxu0 %v677
    %v679 = vand.u32 %v115, 4294901760
    %680 = vmatpush.msra.mxu0 %v679
    %v681 = vand.u32 %v109, 4294901760
    %682 = vmatpush.msra.mxu0 %v681
    %v683 = vand.u32 %v103, 4294901760
    %684 = vmatpush.msra.mxu0 %v683
    %v685 = vand.u32 %v97, 4294901760
    %686 = vmatpush.msra.mxu0 %v685
    %v687 = vand.u32 %v91, 4294901760
    %688 = vmatpush.msra.mxu0 %v687
    %v689 = vand.u32 %v85, 4294901760
    %690 = vmatpush.msra.mxu0 %v689
    %v691 = vand.u32 %v79, 4294901760
    %692 = vmatpush.msra.mxu0 %v691
    %v693 = vand.u32 %v73, 4294901760
    %694 = vmatpush.msra.mxu0 %v693
    %v695 = vand.u32 %v67, 4294901760
    %696 = vmatpush.msra.mxu0 %v695
    %v697 = vand.u32 %v61, 4294901760
    %698 = vmatpush.msra.mxu0 %v697
    %v699 = vand.u32 %v58, 4294901760
    %700 = vmatmul.f32.gmra.mxu0 %v699
    %v701 = vpop.f32.mrf.mxu0
    %v702 = vadd.f32 %v665, %v701
    %703 = vdwg.mxu0
    %v704 = vand.u32 %v247, 4294901760
    %705 = vmatpush.msra.mxu0 %v704
    %v706 = vand.u32 %v241, 4294901760
    %707 = vmatpush.msra.mxu0 %v706
    %v708 = vand.u32 %v235, 4294901760
    %709 = vmatpush.msra.mxu0 %v708
    %v710 = vand.u32 %v229, 4294901760
    %711 = vmatpush.msra.mxu0 %v710
    %v712 = vand.u32 %v223, 4294901760
    %713 = vmatpush.msra.mxu0 %v712
    %v714 = vand.u32 %v217, 4294901760
    %715 = vmatpush.msra.mxu0 %v714
    %v716 = vand.u32 %v211, 4294901760
    %717 = vmatpush.msra.mxu0 %v716
    %v718 = vand.u32 %v205, 4294901760
    %719 = vmatpush.msra.mxu0 %v718
    %v720 = vand.u32 %v199, 4294901760
    %721 = vmatpush.msra.mxu0 %v720
    %v722 = vand.u32 %v193, 4294901760
    %723 = vmatpush.msra.mxu0 %v722
    %v724 = vand.u32 %v187, 4294901760
    %725 = vmatpush.msra.mxu0 %v724
    %v726 = vand.u32 %v181, 4294901760
    %727 = vmatpush.msra.mxu0 %v726
    %v728 = vand.u32 %v175, 4294901760
    %729 = vmatpush.msra.mxu0 %v728
    %v730 = vand.u32 %v169, 4294901760
    %731 = vmatpush.msra.mxu0 %v730
    %v732 = vand.u32 %v163, 4294901760
    %733 = vmatpush.msra.mxu0 %v732
    %v734 = vand.u32 %v157, 4294901760
    %735 = vmatpush.msra.mxu0 %v734
    %v736 = vand.u32 %v59, 4294901760
    %v737 = vsub.f32 %v59, %v736
    %v738 = vand.u32 %v737, 4294901760
    %v739 = vsub.f32 %v737, %v738
    %v740 = vand.u32 %v739, 4294901760
    %741 = vmatmul.f32.gmra.mxu0 %v740
    %v742 = vpop.f32.mrf.mxu0
    %v743 = vadd.f32 %v702, %v742
    %744 = vdwg.mxu0
    %v745 = vand.u32 %v247, 4294901760
    %v746 = vsub.f32 %v247, %v745
    %v747 = vand.u32 %v746, 4294901760
    %v748 = vsub.f32 %v746, %v747
    %v749 = vand.u32 %v748, 4294901760
    %750 = vmatpush.msra.mxu0 %v749
    %v751 = vand.u32 %v241, 4294901760
    %v752 = vsub.f32 %v241, %v751
    %v753 = vand.u32 %v752, 4294901760
    %v754 = vsub.f32 %v752, %v753
    %v755 = vand.u32 %v754, 4294901760
    %756 = vmatpush.msra.mxu0 %v755
    %v757 = vand.u32 %v235, 4294901760
    %v758 = vsub.f32 %v235, %v757
    %v759 = vand.u32 %v758, 4294901760
    %v760 = vsub.f32 %v758, %v759
    %v761 = vand.u32 %v760, 4294901760
    %762 = vmatpush.msra.mxu0 %v761
    %v763 = vand.u32 %v229, 4294901760
    %v764 = vsub.f32 %v229, %v763
    %v765 = vand.u32 %v764, 4294901760
    %v766 = vsub.f32 %v764, %v765
    %v767 = vand.u32 %v766, 4294901760
    %768 = vmatpush.msra.mxu0 %v767
    %v769 = vand.u32 %v223, 4294901760
    %v770 = vsub.f32 %v223, %v769
    %v771 = vand.u32 %v770, 4294901760
    %v772 = vsub.f32 %v770, %v771
    %v773 = vand.u32 %v772, 4294901760
    %774 = vmatpush.msra.mxu0 %v773
    %v775 = vand.u32 %v217, 4294901760
    %v776 = vsub.f32 %v217, %v775
    %v777 = vand.u32 %v776, 4294901760
    %v778 = vsub.f32 %v776, %v777
    %v779 = vand.u32 %v778, 4294901760
    %780 = vmatpush.msra.mxu0 %v779
    %v781 = vand.u32 %v211, 4294901760
    %v782 = vsub.f32 %v211, %v781
    %v783 = vand.u32 %v782, 4294901760
    %v784 = vsub.f32 %v782, %v783
    %v785 = vand.u32 %v784, 4294901760
    %786 = vmatpush.msra.mxu0 %v785
    %v787 = vand.u32 %v205, 4294901760
    %v788 = vsub.f32 %v205, %v787
    %v789 = vand.u32 %v788, 4294901760
    %v790 = vsub.f32 %v788, %v789
    %v791 = vand.u32 %v790, 4294901760
    %792 = vmatpush.msra.mxu0 %v791
    %v793 = vand.u32 %v199, 4294901760
    %v794 = vsub.f32 %v199, %v793
    %v795 = vand.u32 %v794, 4294901760
    %v796 = vsub.f32 %v794, %v795
    %v797 = vand.u32 %v796, 4294901760
    %798 = vmatpush.msra.mxu0 %v797
    %v799 = vand.u32 %v193, 4294901760
    %v800 = vsub.f32 %v193, %v799
    %v801 = vand.u32 %v800, 4294901760
    %v802 = vsub.f32 %v800, %v801
    %v803 = vand.u32 %v802, 4294901760
    %804 = vmatpush.msra.mxu0 %v803
    %v805 = vand.u32 %v187, 4294901760
    %v806 = vsub.f32 %v187, %v805
    %v807 = vand.u32 %v806, 4294901760
    %v808 = vsub.f32 %v806, %v807
    %v809 = vand.u32 %v808, 4294901760
    %810 = vmatpush.msra.mxu0 %v809
    %v811 = vand.u32 %v181, 4294901760
    %v812 = vsub.f32 %v181, %v811
    %v813 = vand.u32 %v812, 4294901760
    %v814 = vsub.f32 %v812, %v813
    %v815 = vand.u32 %v814, 4294901760
    %816 = vmatpush.msra.mxu0 %v815
    %v817 = vand.u32 %v175, 4294901760
    %v818 = vsub.f32 %v175, %v817
    %v819 = vand.u32 %v818, 4294901760
    %v820 = vsub.f32 %v818, %v819
    %v821 = vand.u32 %v820, 4294901760
    %822 = vmatpush.msra.mxu0 %v821
    %v823 = vand.u32 %v169, 4294901760
    %v824 = vsub.f32 %v169, %v823
    %v825 = vand.u32 %v824, 4294901760
    %v826 = vsub.f32 %v824, %v825
    %v827 = vand.u32 %v826, 4294901760
    %828 = vmatpush.msra.mxu0 %v827
    %v829 = vand.u32 %v163, 4294901760
    %v830 = vsub.f32 %v163, %v829
    %v831 = vand.u32 %v830, 4294901760
    %v832 = vsub.f32 %v830, %v831
    %v833 = vand.u32 %v832, 4294901760
    %834 = vmatpush.msra.mxu0 %v833
    %v835 = vand.u32 %v157, 4294901760
    %v836 = vsub.f32 %v157, %v835
    %v837 = vand.u32 %v836, 4294901760
    %v838 = vsub.f32 %v836, %v837
    %v839 = vand.u32 %v838, 4294901760
    %840 = vmatpush.msra.mxu0 %v839
    %v841 = vand.u32 %v59, 4294901760
    %842 = vmatmul.f32.gmra.mxu0 %v841
    %v843 = vpop.f32.mrf.mxu0
    %v844 = vadd.f32 %v743, %v843
    %845 = vdwg.mxu0
    %v846 = vand.u32 %v247, 4294901760
    %v847 = vsub.f32 %v247, %v846
    %848 = vmatpush.msra.mxu0 %v847
    %v849 = vand.u32 %v241, 4294901760
    %v850 = vsub.f32 %v241, %v849
    %851 = vmatpush.msra.mxu0 %v850
    %v852 = vand.u32 %v235, 4294901760
    %v853 = vsub.f32 %v235, %v852
    %854 = vmatpush.msra.mxu0 %v853
    %v855 = vand.u32 %v229, 4294901760
    %v856 = vsub.f32 %v229, %v855
    %857 = vmatpush.msra.mxu0 %v856
    %v858 = vand.u32 %v223, 4294901760
    %v859 = vsub.f32 %v223, %v858
    %860 = vmatpush.msra.mxu0 %v859
    %v861 = vand.u32 %v217, 4294901760
    %v862 = vsub.f32 %v217, %v861
    %863 = vmatpush.msra.mxu0 %v862
    %v864 = vand.u32 %v211, 4294901760
    %v865 = vsub.f32 %v211, %v864
    %866 = vmatpush.msra.mxu0 %v865
    %v867 = vand.u32 %v205, 4294901760
    %v868 = vsub.f32 %v205, %v867
    %869 = vmatpush.msra.mxu0 %v868
    %v870 = vand.u32 %v199, 4294901760
    %v871 = vsub.f32 %v199, %v870
    %872 = vmatpush.msra.mxu0 %v871
    %v873 = vand.u32 %v193, 4294901760
    %v874 = vsub.f32 %v193, %v873
    %875 = vmatpush.msra.mxu0 %v874
    %v876 = vand.u32 %v187, 4294901760
    %v877 = vsub.f32 %v187, %v876
    %878 = vmatpush.msra.mxu0 %v877
    %v879 = vand.u32 %v181, 4294901760
    %v880 = vsub.f32 %v181, %v879
    %881 = vmatpush.msra.mxu0 %v880
    %v882 = vand.u32 %v175, 4294901760
    %v883 = vsub.f32 %v175, %v882
    %884 = vmatpush.msra.mxu0 %v883
    %v885 = vand.u32 %v169, 4294901760
    %v886 = vsub.f32 %v169, %v885
    %887 = vmatpush.msra.mxu0 %v886
    %v888 = vand.u32 %v163, 4294901760
    %v889 = vsub.f32 %v163, %v888
    %890 = vmatpush.msra.mxu0 %v889
    %v891 = vand.u32 %v157, 4294901760
    %v892 = vsub.f32 %v157, %v891
    %893 = vmatpush.msra.mxu0 %v892
    %v894 = vand.u32 %v59, 4294901760
    %v895 = vsub.f32 %v59, %v894
    %896 = vmatmul.f32.gmra.mxu0 %v895
    %v897 = vpop.f32.mrf.mxu0
    %v898 = vadd.f32 %v844, %v897
    %899 = vdwg.mxu0
    %v900 = vand.u32 %v247, 4294901760
    %901 = vmatpush.msra.mxu0 %v900
    %v902 = vand.u32 %v241, 4294901760
    %903 = vmatpush.msra.mxu0 %v902
    %v904 = vand.u32 %v235, 4294901760
    %905 = vmatpush.msra.mxu0 %v904
    %v906 = vand.u32 %v229, 4294901760
    %907 = vmatpush.msra.mxu0 %v906
    %v908 = vand.u32 %v223, 4294901760
    %909 = vmatpush.msra.mxu0 %v908
    %v910 = vand.u32 %v217, 4294901760
    %911 = vmatpush.msra.mxu0 %v910
    %v912 = vand.u32 %v211, 4294901760
    %913 = vmatpush.msra.mxu0 %v912
    %v914 = vand.u32 %v205, 4294901760
    %915 = vmatpush.msra.mxu0 %v914
    %v916 = vand.u32 %v199, 4294901760
    %917 = vmatpush.msra.mxu0 %v916
    %v918 = vand.u32 %v193, 4294901760
    %919 = vmatpush.msra.mxu0 %v918
    %v920 = vand.u32 %v187, 4294901760
    %921 = vmatpush.msra.mxu0 %v920
    %v922 = vand.u32 %v181, 4294901760
    %923 = vmatpush.msra.mxu0 %v922
    %v924 = vand.u32 %v175, 4294901760
    %925 = vmatpush.msra.mxu0 %v924
    %v926 = vand.u32 %v169, 4294901760
    %927 = vmatpush.msra.mxu0 %v926
    %v928 = vand.u32 %v163, 4294901760
    %929 = vmatpush.msra.mxu0 %v928
    %v930 = vand.u32 %v157, 4294901760
    %931 = vmatpush.msra.mxu0 %v930
    %v932 = vand.u32 %v59, 4294901760
    %v933 = vsub.f32 %v59, %v932
    %v934 = vand.u32 %v933, 4294901760
    %935 = vmatmul.f32.gmra.mxu0 %v934
    %v936 = vpop.f32.mrf.mxu0
    %v937 = vadd.f32 %v898, %v936
    %938 = vdwg.mxu0
    %v939 = vand.u32 %v247, 4294901760
    %v940 = vsub.f32 %v247, %v939
    %v941 = vand.u32 %v940, 4294901760
    %942 = vmatpush.msra.mxu0 %v941
    %v943 = vand.u32 %v241, 4294901760
    %v944 = vsub.f32 %v241, %v943
    %v945 = vand.u32 %v944, 4294901760
    %946 = vmatpush.msra.mxu0 %v945
    %v947 = vand.u32 %v235, 4294901760
    %v948 = vsub.f32 %v235, %v947
    %v949 = vand.u32 %v948, 4294901760
    %950 = vmatpush.msra.mxu0 %v949
    %v951 = vand.u32 %v229, 4294901760
    %v952 = vsub.f32 %v229, %v951
    %v953 = vand.u32 %v952, 4294901760
    %954 = vmatpush.msra.mxu0 %v953
    %v955 = vand.u32 %v223, 4294901760
    %v956 = vsub.f32 %v223, %v955
    %v957 = vand.u32 %v956, 4294901760
    %958 = vmatpush.msra.mxu0 %v957
    %v959 = vand.u32 %v217, 4294901760
    %v960 = vsub.f32 %v217, %v959
    %v961 = vand.u32 %v960, 4294901760
    %962 = vmatpush.msra.mxu0 %v961
    %v963 = vand.u32 %v211, 4294901760
    %v964 = vsub.f32 %v211, %v963
    %v965 = vand.u32 %v964, 4294901760
    %966 = vmatpush.msra.mxu0 %v965
    %v967 = vand.u32 %v205, 4294901760
    %v968 = vsub.f32 %v205, %v967
    %v969 = vand.u32 %v968, 4294901760
    %970 = vmatpush.msra.mxu0 %v969
    %v971 = vand.u32 %v199, 4294901760
    %v972 = vsub.f32 %v199, %v971
    %v973 = vand.u32 %v972, 4294901760
    %974 = vmatpush.msra.mxu0 %v973
    %v975 = vand.u32 %v193, 4294901760
    %v976 = vsub.f32 %v193, %v975
    %v977 = vand.u32 %v976, 4294901760
    %978 = vmatpush.msra.mxu0 %v977
    %v979 = vand.u32 %v187, 4294901760
    %v980 = vsub.f32 %v187, %v979
    %v981 = vand.u32 %v980, 4294901760
    %982 = vmatpush.msra.mxu0 %v981
    %v983 = vand.u32 %v181, 4294901760
    %v984 = vsub.f32 %v181, %v983
    %v985 = vand.u32 %v984, 4294901760
    %986 = vmatpush.msra.mxu0 %v985
    %v987 = vand.u32 %v175, 4294901760
    %v988 = vsub.f32 %v175, %v987
    %v989 = vand.u32 %v988, 4294901760
    %990 = vmatpush.msra.mxu0 %v989
    %v991 = vand.u32 %v169, 4294901760
    %v992 = vsub.f32 %v169, %v991
    %v993 = vand.u32 %v992, 4294901760
    %994 = vmatpush.msra.mxu0 %v993
    %v995 = vand.u32 %v163, 4294901760
    %v996 = vsub.f32 %v163, %v995
    %v997 = vand.u32 %v996, 4294901760
    %998 = vmatpush.msra.mxu0 %v997
    %v999 = vand.u32 %v157, 4294901760
    %v1000 = vsub.f32 %v157, %v999
    %v1001 = vand.u32 %v1000, 4294901760
    %1002 = vmatpush.msra.mxu0 %v1001
    %v1003 = vand.u32 %v59, 4294901760
    %1004 = vmatmul.f32.gmra.mxu0 %v1003
    %v1005 = vpop.f32.mrf.mxu0
    %v1006 = vadd.f32 %v937, %v1005
    %1007 = vdwg.mxu0
    %v1008 = vand.u32 %v247, 4294901760
    %1009 = vmatpush.msra.mxu0 %v1008
    %v1010 = vand.u32 %v241, 4294901760
    %1011 = vmatpush.msra.mxu0 %v1010
    %v1012 = vand.u32 %v235, 4294901760
    %1013 = vmatpush.msra.mxu0 %v1012
    %v1014 = vand.u32 %v229, 4294901760
    %1015 = vmatpush.msra.mxu0 %v1014
    %v1016 = vand.u32 %v223, 4294901760
    %1017 = vmatpush.msra.mxu0 %v1016
    %v1018 = vand.u32 %v217, 4294901760
    %1019 = vmatpush.msra.mxu0 %v1018
    %v1020 = vand.u32 %v211, 4294901760
    %1021 = vmatpush.msra.mxu0 %v1020
    %v1022 = vand.u32 %v205, 4294901760
    %1023 = vmatpush.msra.mxu0 %v1022
    %v1024 = vand.u32 %v199, 4294901760
    %1025 = vmatpush.msra.mxu0 %v1024
    %v1026 = vand.u32 %v193, 4294901760
    %1027 = vmatpush.msra.mxu0 %v1026
    %v1028 = vand.u32 %v187, 4294901760
    %1029 = vmatpush.msra.mxu0 %v1028
    %v1030 = vand.u32 %v181, 4294901760
    %1031 = vmatpush.msra.mxu0 %v1030
    %v1032 = vand.u32 %v175, 4294901760
    %1033 = vmatpush.msra.mxu0 %v1032
    %v1034 = vand.u32 %v169, 4294901760
    %1035 = vmatpush.msra.mxu0 %v1034
    %v1036 = vand.u32 %v163, 4294901760
    %1037 = vmatpush.msra.mxu0 %v1036
    %v1038 = vand.u32 %v157, 4294901760
    %1039 = vmatpush.msra.mxu0 %v1038
    %v1040 = vand.u32 %v59, 4294901760
    %1041 = vmatmul.f32.gmra.mxu0 %v1040
    %v1042 = vpop.f32.mrf.mxu0
    %v1043 = vadd.f32 %v1006, %v1042
    %1044 = vdwg.mxu0
    %v1045 = vand.u32 %v343, 4294901760
    %1046 = vmatpush.msra.mxu0 %v1045
    %v1047 = vand.u32 %v337, 4294901760
    %1048 = vmatpush.msra.mxu0 %v1047
    %v1049 = vand.u32 %v331, 4294901760
    %1050 = vmatpush.msra.mxu0 %v1049
    %v1051 = vand.u32 %v325, 4294901760
    %1052 = vmatpush.msra.mxu0 %v1051
    %v1053 = vand.u32 %v319, 4294901760
    %1054 = vmatpush.msra.mxu0 %v1053
    %v1055 = vand.u32 %v313, 4294901760
    %1056 = vmatpush.msra.mxu0 %v1055
    %v1057 = vand.u32 %v307, 4294901760
    %1058 = vmatpush.msra.mxu0 %v1057
    %v1059 = vand.u32 %v301, 4294901760
    %1060 = vmatpush.msra.mxu0 %v1059
    %v1061 = vand.u32 %v295, 4294901760
    %1062 = vmatpush.msra.mxu0 %v1061
    %v1063 = vand.u32 %v289, 4294901760
    %1064 = vmatpush.msra.mxu0 %v1063
    %v1065 = vand.u32 %v283, 4294901760
    %1066 = vmatpush.msra.mxu0 %v1065
    %v1067 = vand.u32 %v277, 4294901760
    %1068 = vmatpush.msra.mxu0 %v1067
    %v1069 = vand.u32 %v271, 4294901760
    %1070 = vmatpush.msra.mxu0 %v1069
    %v1071 = vand.u32 %v265, 4294901760
    %1072 = vmatpush.msra.mxu0 %v1071
    %v1073 = vand.u32 %v259, 4294901760
    %1074 = vmatpush.msra.mxu0 %v1073
    %v1075 = vand.u32 %v253, 4294901760
    %1076 = vmatpush.msra.mxu0 %v1075
    %v1077 = vand.u32 %v60, 4294901760
    %v1078 = vsub.f32 %v60, %v1077
    %v1079 = vand.u32 %v1078, 4294901760
    %v1080 = vsub.f32 %v1078, %v1079
    %v1081 = vand.u32 %v1080, 4294901760
    %1082 = vmatmul.f32.gmra.mxu0 %v1081
    %v1083 = vpop.f32.mrf.mxu0
    %v1084 = vadd.f32 %v1043, %v1083
    %1085 = vdwg.mxu0
    %v1086 = vand.u32 %v343, 4294901760
    %v1087 = vsub.f32 %v343, %v1086
    %v1088 = vand.u32 %v1087, 4294901760
    %v1089 = vsub.f32 %v1087, %v1088
    %v1090 = vand.u32 %v1089, 4294901760
    %1091 = vmatpush.msra.mxu0 %v1090
    %v1092 = vand.u32 %v337, 4294901760
    %v1093 = vsub.f32 %v337, %v1092
    %v1094 = vand.u32 %v1093, 4294901760
    %v1095 = vsub.f32 %v1093, %v1094
    %v1096 = vand.u32 %v1095, 4294901760
    %1097 = vmatpush.msra.mxu0 %v1096
    %v1098 = vand.u32 %v331, 4294901760
    %v1099 = vsub.f32 %v331, %v1098
    %v1100 = vand.u32 %v1099, 4294901760
    %v1101 = vsub.f32 %v1099, %v1100
    %v1102 = vand.u32 %v1101, 4294901760
    %1103 = vmatpush.msra.mxu0 %v1102
    %v1104 = vand.u32 %v325, 4294901760
    %v1105 = vsub.f32 %v325, %v1104
    %v1106 = vand.u32 %v1105, 4294901760
    %v1107 = vsub.f32 %v1105, %v1106
    %v1108 = vand.u32 %v1107, 4294901760
    %1109 = vmatpush.msra.mxu0 %v1108
    %v1110 = vand.u32 %v319, 4294901760
    %v1111 = vsub.f32 %v319, %v1110
    %v1112 = vand.u32 %v1111, 4294901760
    %v1113 = vsub.f32 %v1111, %v1112
    %v1114 = vand.u32 %v1113, 4294901760
    %1115 = vmatpush.msra.mxu0 %v1114
    %v1116 = vand.u32 %v313, 4294901760
    %v1117 = vsub.f32 %v313, %v1116
    %v1118 = vand.u32 %v1117, 4294901760
    %v1119 = vsub.f32 %v1117, %v1118
    %v1120 = vand.u32 %v1119, 4294901760
    %1121 = vmatpush.msra.mxu0 %v1120
    %v1122 = vand.u32 %v307, 4294901760
    %v1123 = vsub.f32 %v307, %v1122
    %v1124 = vand.u32 %v1123, 4294901760
    %v1125 = vsub.f32 %v1123, %v1124
    %v1126 = vand.u32 %v1125, 4294901760
    %1127 = vmatpush.msra.mxu0 %v1126
    %v1128 = vand.u32 %v301, 4294901760
    %v1129 = vsub.f32 %v301, %v1128
    %v1130 = vand.u32 %v1129, 4294901760
    %v1131 = vsub.f32 %v1129, %v1130
    %v1132 = vand.u32 %v1131, 4294901760
    %1133 = vmatpush.msra.mxu0 %v1132
    %v1134 = vand.u32 %v295, 4294901760
    %v1135 = vsub.f32 %v295, %v1134
    %v1136 = vand.u32 %v1135, 4294901760
    %v1137 = vsub.f32 %v1135, %v1136
    %v1138 = vand.u32 %v1137, 4294901760
    %1139 = vmatpush.msra.mxu0 %v1138
    %v1140 = vand.u32 %v289, 4294901760
    %v1141 = vsub.f32 %v289, %v1140
    %v1142 = vand.u32 %v1141, 4294901760
    %v1143 = vsub.f32 %v1141, %v1142
    %v1144 = vand.u32 %v1143, 4294901760
    %1145 = vmatpush.msra.mxu0 %v1144
    %v1146 = vand.u32 %v283, 4294901760
    %v1147 = vsub.f32 %v283, %v1146
    %v1148 = vand.u32 %v1147, 4294901760
    %v1149 = vsub.f32 %v1147, %v1148
    %v1150 = vand.u32 %v1149, 4294901760
    %1151 = vmatpush.msra.mxu0 %v1150
    %v1152 = vand.u32 %v277, 4294901760
    %v1153 = vsub.f32 %v277, %v1152
    %v1154 = vand.u32 %v1153, 4294901760
    %v1155 = vsub.f32 %v1153, %v1154
    %v1156 = vand.u32 %v1155, 4294901760
    %1157 = vmatpush.msra.mxu0 %v1156
    %v1158 = vand.u32 %v271, 4294901760
    %v1159 = vsub.f32 %v271, %v1158
    %v1160 = vand.u32 %v1159, 4294901760
    %v1161 = vsub.f32 %v1159, %v1160
    %v1162 = vand.u32 %v1161, 4294901760
    %1163 = vmatpush.msra.mxu0 %v1162
    %v1164 = vand.u32 %v265, 4294901760
    %v1165 = vsub.f32 %v265, %v1164
    %v1166 = vand.u32 %v1165, 4294901760
    %v1167 = vsub.f32 %v1165, %v1166
    %v1168 = vand.u32 %v1167, 4294901760
    %1169 = vmatpush.msra.mxu0 %v1168
    %v1170 = vand.u32 %v259, 4294901760
    %v1171 = vsub.f32 %v259, %v1170
    %v1172 = vand.u32 %v1171, 4294901760
    %v1173 = vsub.f32 %v1171, %v1172
    %v1174 = vand.u32 %v1173, 4294901760
    %1175 = vmatpush.msra.mxu0 %v1174
    %v1176 = vand.u32 %v253, 4294901760
    %v1177 = vsub.f32 %v253, %v1176
    %v1178 = vand.u32 %v1177, 4294901760
    %v1179 = vsub.f32 %v1177, %v1178
    %v1180 = vand.u32 %v1179, 4294901760
    %1181 = vmatpush.msra.mxu0 %v1180
    %v1182 = vand.u32 %v60, 4294901760
    %1183 = vmatmul.f32.gmra.mxu0 %v1182
    %v1184 = vpop.f32.mrf.mxu0
    %v1185 = vadd.f32 %v1084, %v1184
    %1186 = vdwg.mxu0
    %v1187 = vand.u32 %v343, 4294901760
    %v1188 = vsub.f32 %v343, %v1187
    %1189 = vmatpush.msra.mxu0 %v1188
    %v1190 = vand.u32 %v337, 4294901760
    %v1191 = vsub.f32 %v337, %v1190
    %1192 = vmatpush.msra.mxu0 %v1191
    %v1193 = vand.u32 %v331, 4294901760
    %v1194 = vsub.f32 %v331, %v1193
    %1195 = vmatpush.msra.mxu0 %v1194
    %v1196 = vand.u32 %v325, 4294901760
    %v1197 = vsub.f32 %v325, %v1196
    %1198 = vmatpush.msra.mxu0 %v1197
    %v1199 = vand.u32 %v319, 4294901760
    %v1200 = vsub.f32 %v319, %v1199
    %1201 = vmatpush.msra.mxu0 %v1200
    %v1202 = vand.u32 %v313, 4294901760
    %v1203 = vsub.f32 %v313, %v1202
    %1204 = vmatpush.msra.mxu0 %v1203
    %v1205 = vand.u32 %v307, 4294901760
    %v1206 = vsub.f32 %v307, %v1205
    %1207 = vmatpush.msra.mxu0 %v1206
    %v1208 = vand.u32 %v301, 4294901760
    %v1209 = vsub.f32 %v301, %v1208
    %1210 = vmatpush.msra.mxu0 %v1209
    %v1211 = vand.u32 %v295, 4294901760
    %v1212 = vsub.f32 %v295, %v1211
    %1213 = vmatpush.msra.mxu0 %v1212
    %v1214 = vand.u32 %v289, 4294901760
    %v1215 = vsub.f32 %v289, %v1214
    %1216 = vmatpush.msra.mxu0 %v1215
    %v1217 = vand.u32 %v283, 4294901760
    %v1218 = vsub.f32 %v283, %v1217
    %1219 = vmatpush.msra.mxu0 %v1218
    %v1220 = vand.u32 %v277, 4294901760
    %v1221 = vsub.f32 %v277, %v1220
    %1222 = vmatpush.msra.mxu0 %v1221
    %v1223 = vand.u32 %v271, 4294901760
    %v1224 = vsub.f32 %v271, %v1223
    %1225 = vmatpush.msra.mxu0 %v1224
    %v1226 = vand.u32 %v265, 4294901760
    %v1227 = vsub.f32 %v265, %v1226
    %1228 = vmatpush.msra.mxu0 %v1227
    %v1229 = vand.u32 %v259, 4294901760
    %v1230 = vsub.f32 %v259, %v1229
    %1231 = vmatpush.msra.mxu0 %v1230
    %v1232 = vand.u32 %v253, 4294901760
    %v1233 = vsub.f32 %v253, %v1232
    %1234 = vmatpush.msra.mxu0 %v1233
    %v1235 = vand.u32 %v60, 4294901760
    %v1236 = vsub.f32 %v60, %v1235
    %1237 = vmatmul.f32.gmra.mxu0 %v1236
    %v1238 = vpop.f32.mrf.mxu0
    %v1239 = vadd.f32 %v1185, %v1238
    %1240 = vdwg.mxu0
    %v1241 = vand.u32 %v343, 4294901760
    %1242 = vmatpush.msra.mxu0 %v1241
    %v1243 = vand.u32 %v337, 4294901760
    %1244 = vmatpush.msra.mxu0 %v1243
    %v1245 = vand.u32 %v331, 4294901760
    %1246 = vmatpush.msra.mxu0 %v1245
    %v1247 = vand.u32 %v325, 4294901760
    %1248 = vmatpush.msra.mxu0 %v1247
    %v1249 = vand.u32 %v319, 4294901760
    %1250 = vmatpush.msra.mxu0 %v1249
    %v1251 = vand.u32 %v313, 4294901760
    %1252 = vmatpush.msra.mxu0 %v1251
    %v1253 = vand.u32 %v307, 4294901760
    %1254 = vmatpush.msra.mxu0 %v1253
    %v1255 = vand.u32 %v301, 4294901760
    %1256 = vmatpush.msra.mxu0 %v1255
    %v1257 = vand.u32 %v295, 4294901760
    %1258 = vmatpush.msra.mxu0 %v1257
    %v1259 = vand.u32 %v289, 4294901760
    %1260 = vmatpush.msra.mxu0 %v1259
    %v1261 = vand.u32 %v283, 4294901760
    %1262 = vmatpush.msra.mxu0 %v1261
    %v1263 = vand.u32 %v277, 4294901760
    %1264 = vmatpush.msra.mxu0 %v1263
    %v1265 = vand.u32 %v271, 4294901760
    %1266 = vmatpush.msra.mxu0 %v1265
    %v1267 = vand.u32 %v265, 4294901760
    %1268 = vmatpush.msra.mxu0 %v1267
    %v1269 = vand.u32 %v259, 4294901760
    %1270 = vmatpush.msra.mxu0 %v1269
    %v1271 = vand.u32 %v253, 4294901760
    %1272 = vmatpush.msra.mxu0 %v1271
    %v1273 = vand.u32 %v60, 4294901760
    %v1274 = vsub.f32 %v60, %v1273
    %v1275 = vand.u32 %v1274, 4294901760
    %1276 = vmatmul.f32.gmra.mxu0 %v1275
    %v1277 = vpop.f32.mrf.mxu0
    %v1278 = vadd.f32 %v1239, %v1277
    %1279 = vdwg.mxu0
    %v1280 = vand.u32 %v343, 4294901760
    %v1281 = vsub.f32 %v343, %v1280
    %v1282 = vand.u32 %v1281, 4294901760
    %1283 = vmatpush.msra.mxu0 %v1282
    %v1284 = vand.u32 %v337, 4294901760
    %v1285 = vsub.f32 %v337, %v1284
    %v1286 = vand.u32 %v1285, 4294901760
    %1287 = vmatpush.msra.mxu0 %v1286
    %v1288 = vand.u32 %v331, 4294901760
    %v1289 = vsub.f32 %v331, %v1288
    %v1290 = vand.u32 %v1289, 4294901760
    %1291 = vmatpush.msra.mxu0 %v1290
    %v1292 = vand.u32 %v325, 4294901760
    %v1293 = vsub.f32 %v325, %v1292
    %v1294 = vand.u32 %v1293, 4294901760
    %1295 = vmatpush.msra.mxu0 %v1294
    %v1296 = vand.u32 %v319, 4294901760
    %v1297 = vsub.f32 %v319, %v1296
    %v1298 = vand.u32 %v1297, 4294901760
    %1299 = vmatpush.msra.mxu0 %v1298
    %v1300 = vand.u32 %v313, 4294901760
    %v1301 = vsub.f32 %v313, %v1300
    %v1302 = vand.u32 %v1301, 4294901760
    %1303 = vmatpush.msra.mxu0 %v1302
    %v1304 = vand.u32 %v307, 4294901760
    %v1305 = vsub.f32 %v307, %v1304
    %v1306 = vand.u32 %v1305, 4294901760
    %1307 = vmatpush.msra.mxu0 %v1306
    %v1308 = vand.u32 %v301, 4294901760
    %v1309 = vsub.f32 %v301, %v1308
    %v1310 = vand.u32 %v1309, 4294901760
    %1311 = vmatpush.msra.mxu0 %v1310
    %v1312 = vand.u32 %v295, 4294901760
    %v1313 = vsub.f32 %v295, %v1312
    %v1314 = vand.u32 %v1313, 4294901760
    %1315 = vmatpush.msra.mxu0 %v1314
    %v1316 = vand.u32 %v289, 4294901760
    %v1317 = vsub.f32 %v289, %v1316
    %v1318 = vand.u32 %v1317, 4294901760
    %1319 = vmatpush.msra.mxu0 %v1318
    %v1320 = vand.u32 %v283, 4294901760
    %v1321 = vsub.f32 %v283, %v1320
    %v1322 = vand.u32 %v1321, 4294901760
    %1323 = vmatpush.msra.mxu0 %v1322
    %v1324 = vand.u32 %v277, 4294901760
    %v1325 = vsub.f32 %v277, %v1324
    %v1326 = vand.u32 %v1325, 4294901760
    %1327 = vmatpush.msra.mxu0 %v1326
    %v1328 = vand.u32 %v271, 4294901760
    %v1329 = vsub.f32 %v271, %v1328
    %v1330 = vand.u32 %v1329, 4294901760
    %1331 = vmatpush.msra.mxu0 %v1330
    %v1332 = vand.u32 %v265, 4294901760
    %v1333 = vsub.f32 %v265, %v1332
    %v1334 = vand.u32 %v1333, 4294901760
    %1335 = vmatpush.msra.mxu0 %v1334
    %v1336 = vand.u32 %v259, 4294901760
    %v1337 = vsub.f32 %v259, %v1336
    %v1338 = vand.u32 %v1337, 4294901760
    %1339 = vmatpush.msra.mxu0 %v1338
    %v1340 = vand.u32 %v253, 4294901760
    %v1341 = vsub.f32 %v253, %v1340
    %v1342 = vand.u32 %v1341, 4294901760
    %1343 = vmatpush.msra.mxu0 %v1342
    %v1344 = vand.u32 %v60, 4294901760
    %1345 = vmatmul.f32.gmra.mxu0 %v1344
    %v1346 = vpop.f32.mrf.mxu0
    %v1347 = vadd.f32 %v1278, %v1346
    %1348 = vdwg.mxu0
    %v1349 = vand.u32 %v343, 4294901760
    %1350 = vmatpush.msra.mxu0 %v1349
    %v1351 = vand.u32 %v337, 4294901760
    %1352 = vmatpush.msra.mxu0 %v1351
    %v1353 = vand.u32 %v331, 4294901760
    %1354 = vmatpush.msra.mxu0 %v1353
    %v1355 = vand.u32 %v325, 4294901760
    %1356 = vmatpush.msra.mxu0 %v1355
    %v1357 = vand.u32 %v319, 4294901760
    %1358 = vmatpush.msra.mxu0 %v1357
    %v1359 = vand.u32 %v313, 4294901760
    %1360 = vmatpush.msra.mxu0 %v1359
    %v1361 = vand.u32 %v307, 4294901760
    %1362 = vmatpush.msra.mxu0 %v1361
    %v1363 = vand.u32 %v301, 4294901760
    %1364 = vmatpush.msra.mxu0 %v1363
    %v1365 = vand.u32 %v295, 4294901760
    %1366 = vmatpush.msra.mxu0 %v1365
    %v1367 = vand.u32 %v289, 4294901760
    %1368 = vmatpush.msra.mxu0 %v1367
    %v1369 = vand.u32 %v283, 4294901760
    %1370 = vmatpush.msra.mxu0 %v1369
    %v1371 = vand.u32 %v277, 4294901760
    %1372 = vmatpush.msra.mxu0 %v1371
    %v1373 = vand.u32 %v271, 4294901760
    %1374 = vmatpush.msra.mxu0 %v1373
    %v1375 = vand.u32 %v265, 4294901760
    %1376 = vmatpush.msra.mxu0 %v1375
    %v1377 = vand.u32 %v259, 4294901760
    %1378 = vmatpush.msra.mxu0 %v1377
    %v1379 = vand.u32 %v253, 4294901760
    %1380 = vmatpush.msra.mxu0 %v1379
    %v1381 = vand.u32 %v60, 4294901760
    %1382 = vmatmul.f32.gmra.mxu0 %v1381
    %v1383 = vpop.f32.mrf.mxu0
    %v1384 = vadd.f32 %v1347, %v1383
    %1385 = vdwg.mxu0
    %v1386 = vand.u32 %v152, 4294901760
    %1387 = vmatpush.msra.mxu0 %v1386
    %v1388 = vand.u32 %v146, 4294901760
    %1389 = vmatpush.msra.mxu0 %v1388
    %v1390 = vand.u32 %v140, 4294901760
    %1391 = vmatpush.msra.mxu0 %v1390
    %v1392 = vand.u32 %v134, 4294901760
    %1393 = vmatpush.msra.mxu0 %v1392
    %v1394 = vand.u32 %v128, 4294901760
    %1395 = vmatpush.msra.mxu0 %v1394
    %v1396 = vand.u32 %v122, 4294901760
    %1397 = vmatpush.msra.mxu0 %v1396
    %v1398 = vand.u32 %v116, 4294901760
    %1399 = vmatpush.msra.mxu0 %v1398
    %v1400 = vand.u32 %v110, 4294901760
    %1401 = vmatpush.msra.mxu0 %v1400
    %v1402 = vand.u32 %v104, 4294901760
    %1403 = vmatpush.msra.mxu0 %v1402
    %v1404 = vand.u32 %v98, 4294901760
    %1405 = vmatpush.msra.mxu0 %v1404
    %v1406 = vand.u32 %v92, 4294901760
    %1407 = vmatpush.msra.mxu0 %v1406
    %v1408 = vand.u32 %v86, 4294901760
    %1409 = vmatpush.msra.mxu0 %v1408
    %v1410 = vand.u32 %v80, 4294901760
    %1411 = vmatpush.msra.mxu0 %v1410
    %v1412 = vand.u32 %v74, 4294901760
    %1413 = vmatpush.msra.mxu0 %v1412
    %v1414 = vand.u32 %v68, 4294901760
    %1415 = vmatpush.msra.mxu0 %v1414
    %v1416 = vand.u32 %v62, 4294901760
    %1417 = vmatpush.msra.mxu0 %v1416
    %v1418 = vand.u32 %v58, 4294901760
    %v1419 = vsub.f32 %v58, %v1418
    %v1420 = vand.u32 %v1419, 4294901760
    %v1421 = vsub.f32 %v1419, %v1420
    %v1422 = vand.u32 %v1421, 4294901760
    %1423 = vmatmul.f32.gmra.mxu0 %v1422
    %v1424 = vpop.f32.mrf.mxu0
    %v1425 = vadd.f32 %v352, %v1424
    %1426 = vdwg.mxu0
    %v1427 = vand.u32 %v152, 4294901760
    %v1428 = vsub.f32 %v152, %v1427
    %v1429 = vand.u32 %v1428, 4294901760
    %v1430 = vsub.f32 %v1428, %v1429
    %v1431 = vand.u32 %v1430, 4294901760
    %1432 = vmatpush.msra.mxu0 %v1431
    %v1433 = vand.u32 %v146, 4294901760
    %v1434 = vsub.f32 %v146, %v1433
    %v1435 = vand.u32 %v1434, 4294901760
    %v1436 = vsub.f32 %v1434, %v1435
    %v1437 = vand.u32 %v1436, 4294901760
    %1438 = vmatpush.msra.mxu0 %v1437
    %v1439 = vand.u32 %v140, 4294901760
    %v1440 = vsub.f32 %v140, %v1439
    %v1441 = vand.u32 %v1440, 4294901760
    %v1442 = vsub.f32 %v1440, %v1441
    %v1443 = vand.u32 %v1442, 4294901760
    %1444 = vmatpush.msra.mxu0 %v1443
    %v1445 = vand.u32 %v134, 4294901760
    %v1446 = vsub.f32 %v134, %v1445
    %v1447 = vand.u32 %v1446, 4294901760
    %v1448 = vsub.f32 %v1446, %v1447
    %v1449 = vand.u32 %v1448, 4294901760
    %1450 = vmatpush.msra.mxu0 %v1449
    %v1451 = vand.u32 %v128, 4294901760
    %v1452 = vsub.f32 %v128, %v1451
    %v1453 = vand.u32 %v1452, 4294901760
    %v1454 = vsub.f32 %v1452, %v1453
    %v1455 = vand.u32 %v1454, 4294901760
    %1456 = vmatpush.msra.mxu0 %v1455
    %v1457 = vand.u32 %v122, 4294901760
    %v1458 = vsub.f32 %v122, %v1457
    %v1459 = vand.u32 %v1458, 4294901760
    %v1460 = vsub.f32 %v1458, %v1459
    %v1461 = vand.u32 %v1460, 4294901760
    %1462 = vmatpush.msra.mxu0 %v1461
    %v1463 = vand.u32 %v116, 4294901760
    %v1464 = vsub.f32 %v116, %v1463
    %v1465 = vand.u32 %v1464, 4294901760
    %v1466 = vsub.f32 %v1464, %v1465
    %v1467 = vand.u32 %v1466, 4294901760
    %1468 = vmatpush.msra.mxu0 %v1467
    %v1469 = vand.u32 %v110, 4294901760
    %v1470 = vsub.f32 %v110, %v1469
    %v1471 = vand.u32 %v1470, 4294901760
    %v1472 = vsub.f32 %v1470, %v1471
    %v1473 = vand.u32 %v1472, 4294901760
    %1474 = vmatpush.msra.mxu0 %v1473
    %v1475 = vand.u32 %v104, 4294901760
    %v1476 = vsub.f32 %v104, %v1475
    %v1477 = vand.u32 %v1476, 4294901760
    %v1478 = vsub.f32 %v1476, %v1477
    %v1479 = vand.u32 %v1478, 4294901760
    %1480 = vmatpush.msra.mxu0 %v1479
    %v1481 = vand.u32 %v98, 4294901760
    %v1482 = vsub.f32 %v98, %v1481
    %v1483 = vand.u32 %v1482, 4294901760
    %v1484 = vsub.f32 %v1482, %v1483
    %v1485 = vand.u32 %v1484, 4294901760
    %1486 = vmatpush.msra.mxu0 %v1485
    %v1487 = vand.u32 %v92, 4294901760
    %v1488 = vsub.f32 %v92, %v1487
    %v1489 = vand.u32 %v1488, 4294901760
    %v1490 = vsub.f32 %v1488, %v1489
    %v1491 = vand.u32 %v1490, 4294901760
    %1492 = vmatpush.msra.mxu0 %v1491
    %v1493 = vand.u32 %v86, 4294901760
    %v1494 = vsub.f32 %v86, %v1493
    %v1495 = vand.u32 %v1494, 4294901760
    %v1496 = vsub.f32 %v1494, %v1495
    %v1497 = vand.u32 %v1496, 4294901760
    %1498 = vmatpush.msra.mxu0 %v1497
    %v1499 = vand.u32 %v80, 4294901760
    %v1500 = vsub.f32 %v80, %v1499
    %v1501 = vand.u32 %v1500, 4294901760
    %v1502 = vsub.f32 %v1500, %v1501
    %v1503 = vand.u32 %v1502, 4294901760
    %1504 = vmatpush.msra.mxu0 %v1503
    %v1505 = vand.u32 %v74, 4294901760
    %v1506 = vsub.f32 %v74, %v1505
    %v1507 = vand.u32 %v1506, 4294901760
    %v1508 = vsub.f32 %v1506, %v1507
    %v1509 = vand.u32 %v1508, 4294901760
    %1510 = vmatpush.msra.mxu0 %v1509
    %v1511 = vand.u32 %v68, 4294901760
    %v1512 = vsub.f32 %v68, %v1511
    %v1513 = vand.u32 %v1512, 4294901760
    %v1514 = vsub.f32 %v1512, %v1513
    %v1515 = vand.u32 %v1514, 4294901760
    %1516 = vmatpush.msra.mxu0 %v1515
    %v1517 = vand.u32 %v62, 4294901760
    %v1518 = vsub.f32 %v62, %v1517
    %v1519 = vand.u32 %v1518, 4294901760
    %v1520 = vsub.f32 %v1518, %v1519
    %v1521 = vand.u32 %v1520, 4294901760
    %1522 = vmatpush.msra.mxu0 %v1521
    %v1523 = vand.u32 %v58, 4294901760
    %1524 = vmatmul.f32.gmra.mxu0 %v1523
    %v1525 = vpop.f32.mrf.mxu0
    %v1526 = vadd.f32 %v1425, %v1525
    %1527 = vdwg.mxu0
    %v1528 = vand.u32 %v152, 4294901760
    %v1529 = vsub.f32 %v152, %v1528
    %1530 = vmatpush.msra.mxu0 %v1529
    %v1531 = vand.u32 %v146, 4294901760
    %v1532 = vsub.f32 %v146, %v1531
    %1533 = vmatpush.msra.mxu0 %v1532
    %v1534 = vand.u32 %v140, 4294901760
    %v1535 = vsub.f32 %v140, %v1534
    %1536 = vmatpush.msra.mxu0 %v1535
    %v1537 = vand.u32 %v134, 4294901760
    %v1538 = vsub.f32 %v134, %v1537
    %1539 = vmatpush.msra.mxu0 %v1538
    %v1540 = vand.u32 %v128, 4294901760
    %v1541 = vsub.f32 %v128, %v1540
    %1542 = vmatpush.msra.mxu0 %v1541
    %v1543 = vand.u32 %v122, 4294901760
    %v1544 = vsub.f32 %v122, %v1543
    %1545 = vmatpush.msra.mxu0 %v1544
    %v1546 = vand.u32 %v116, 4294901760
    %v1547 = vsub.f32 %v116, %v1546
    %1548 = vmatpush.msra.mxu0 %v1547
    %v1549 = vand.u32 %v110, 4294901760
    %v1550 = vsub.f32 %v110, %v1549
    %1551 = vmatpush.msra.mxu0 %v1550
    %v1552 = vand.u32 %v104, 4294901760
    %v1553 = vsub.f32 %v104, %v1552
    %1554 = vmatpush.msra.mxu0 %v1553
    %v1555 = vand.u32 %v98, 4294901760
    %v1556 = vsub.f32 %v98, %v1555
    %1557 = vmatpush.msra.mxu0 %v1556
    %v1558 = vand.u32 %v92, 4294901760
    %v1559 = vsub.f32 %v92, %v1558
    %1560 = vmatpush.msra.mxu0 %v1559
    %v1561 = vand.u32 %v86, 4294901760
    %v1562 = vsub.f32 %v86, %v1561
    %1563 = vmatpush.msra.mxu0 %v1562
    %v1564 = vand.u32 %v80, 4294901760
    %v1565 = vsub.f32 %v80, %v1564
    %1566 = vmatpush.msra.mxu0 %v1565
    %v1567 = vand.u32 %v74, 4294901760
    %v1568 = vsub.f32 %v74, %v1567
    %1569 = vmatpush.msra.mxu0 %v1568
    %v1570 = vand.u32 %v68, 4294901760
    %v1571 = vsub.f32 %v68, %v1570
    %1572 = vmatpush.msra.mxu0 %v1571
    %v1573 = vand.u32 %v62, 4294901760
    %v1574 = vsub.f32 %v62, %v1573
    %1575 = vmatpush.msra.mxu0 %v1574
    %v1576 = vand.u32 %v58, 4294901760
    %v1577 = vsub.f32 %v58, %v1576
    %1578 = vmatmul.f32.gmra.mxu0 %v1577
    %v1579 = vpop.f32.mrf.mxu0
    %v1580 = vadd.f32 %v1526, %v1579
    %1581 = vdwg.mxu0
    %v1582 = vand.u32 %v152, 4294901760
    %1583 = vmatpush.msra.mxu0 %v1582
    %v1584 = vand.u32 %v146, 4294901760
    %1585 = vmatpush.msra.mxu0 %v1584
    %v1586 = vand.u32 %v140, 4294901760
    %1587 = vmatpush.msra.mxu0 %v1586
    %v1588 = vand.u32 %v134, 4294901760
    %1589 = vmatpush.msra.mxu0 %v1588
    %v1590 = vand.u32 %v128, 4294901760
    %1591 = vmatpush.msra.mxu0 %v1590
    %v1592 = vand.u32 %v122, 4294901760
    %1593 = vmatpush.msra.mxu0 %v1592
    %v1594 = vand.u32 %v116, 4294901760
    %1595 = vmatpush.msra.mxu0 %v1594
    %v1596 = vand.u32 %v110, 4294901760
    %1597 = vmatpush.msra.mxu0 %v1596
    %v1598 = vand.u32 %v104, 4294901760
    %1599 = vmatpush.msra.mxu0 %v1598
    %v1600 = vand.u32 %v98, 4294901760
    %1601 = vmatpush.msra.mxu0 %v1600
    %v1602 = vand.u32 %v92, 4294901760
    %1603 = vmatpush.msra.mxu0 %v1602
    %v1604 = vand.u32 %v86, 4294901760
    %1605 = vmatpush.msra.mxu0 %v1604
    %v1606 = vand.u32 %v80, 4294901760
    %1607 = vmatpush.msra.mxu0 %v1606
    %v1608 = vand.u32 %v74, 4294901760
    %1609 = vmatpush.msra.mxu0 %v1608
    %v1610 = vand.u32 %v68, 4294901760
    %1611 = vmatpush.msra.mxu0 %v1610
    %v1612 = vand.u32 %v62, 4294901760
    %1613 = vmatpush.msra.mxu0 %v1612
    %v1614 = vand.u32 %v58, 4294901760
    %v1615 = vsub.f32 %v58, %v1614
    %v1616 = vand.u32 %v1615, 4294901760
    %1617 = vmatmul.f32.gmra.mxu0 %v1616
    %v1618 = vpop.f32.mrf.mxu0
    %v1619 = vadd.f32 %v1580, %v1618
    %1620 = vdwg.mxu0
    %v1621 = vand.u32 %v152, 4294901760
    %v1622 = vsub.f32 %v152, %v1621
    %v1623 = vand.u32 %v1622, 4294901760
    %1624 = vmatpush.msra.mxu0 %v1623
    %v1625 = vand.u32 %v146, 4294901760
    %v1626 = vsub.f32 %v146, %v1625
    %v1627 = vand.u32 %v1626, 4294901760
    %1628 = vmatpush.msra.mxu0 %v1627
    %v1629 = vand.u32 %v140, 4294901760
    %v1630 = vsub.f32 %v140, %v1629
    %v1631 = vand.u32 %v1630, 4294901760
    %1632 = vmatpush.msra.mxu0 %v1631
    %v1633 = vand.u32 %v134, 4294901760
    %v1634 = vsub.f32 %v134, %v1633
    %v1635 = vand.u32 %v1634, 4294901760
    %1636 = vmatpush.msra.mxu0 %v1635
    %v1637 = vand.u32 %v128, 4294901760
    %v1638 = vsub.f32 %v128, %v1637
    %v1639 = vand.u32 %v1638, 4294901760
    %1640 = vmatpush.msra.mxu0 %v1639
    %v1641 = vand.u32 %v122, 4294901760
    %v1642 = vsub.f32 %v122, %v1641
    %v1643 = vand.u32 %v1642, 4294901760
    %1644 = vmatpush.msra.mxu0 %v1643
    %v1645 = vand.u32 %v116, 4294901760
    %v1646 = vsub.f32 %v116, %v1645
    %v1647 = vand.u32 %v1646, 4294901760
    %1648 = vmatpush.msra.mxu0 %v1647
    %v1649 = vand.u32 %v110, 4294901760
    %v1650 = vsub.f32 %v110, %v1649
    %v1651 = vand.u32 %v1650, 4294901760
    %1652 = vmatpush.msra.mxu0 %v1651
    %v1653 = vand.u32 %v104, 4294901760
    %v1654 = vsub.f32 %v104, %v1653
    %v1655 = vand.u32 %v1654, 4294901760
    %1656 = vmatpush.msra.mxu0 %v1655
    %v1657 = vand.u32 %v98, 4294901760
    %v1658 = vsub.f32 %v98, %v1657
    %v1659 = vand.u32 %v1658, 4294901760
    %1660 = vmatpush.msra.mxu0 %v1659
    %v1661 = vand.u32 %v92, 4294901760
    %v1662 = vsub.f32 %v92, %v1661
    %v1663 = vand.u32 %v1662, 4294901760
    %1664 = vmatpush.msra.mxu0 %v1663
    %v1665 = vand.u32 %v86, 4294901760
    %v1666 = vsub.f32 %v86, %v1665
    %v1667 = vand.u32 %v1666, 4294901760
    %1668 = vmatpush.msra.mxu0 %v1667
    %v1669 = vand.u32 %v80, 4294901760
    %v1670 = vsub.f32 %v80, %v1669
    %v1671 = vand.u32 %v1670, 4294901760
    %1672 = vmatpush.msra.mxu0 %v1671
    %v1673 = vand.u32 %v74, 4294901760
    %v1674 = vsub.f32 %v74, %v1673
    %v1675 = vand.u32 %v1674, 4294901760
    %1676 = vmatpush.msra.mxu0 %v1675
    %v1677 = vand.u32 %v68, 4294901760
    %v1678 = vsub.f32 %v68, %v1677
    %v1679 = vand.u32 %v1678, 4294901760
    %1680 = vmatpush.msra.mxu0 %v1679
    %v1681 = vand.u32 %v62, 4294901760
    %v1682 = vsub.f32 %v62, %v1681
    %v1683 = vand.u32 %v1682, 4294901760
    %1684 = vmatpush.msra.mxu0 %v1683
    %v1685 = vand.u32 %v58, 4294901760
    %1686 = vmatmul.f32.gmra.mxu0 %v1685
    %v1687 = vpop.f32.mrf.mxu0
    %v1688 = vadd.f32 %v1619, %v1687
    %1689 = vdwg.mxu0
    %v1690 = vand.u32 %v152, 4294901760
    %1691 = vmatpush.msra.mxu0 %v1690
    %v1692 = vand.u32 %v146, 4294901760
    %1693 = vmatpush.msra.mxu0 %v1692
    %v1694 = vand.u32 %v140, 4294901760
    %1695 = vmatpush.msra.mxu0 %v1694
    %v1696 = vand.u32 %v134, 4294901760
    %1697 = vmatpush.msra.mxu0 %v1696
    %v1698 = vand.u32 %v128, 4294901760
    %1699 = vmatpush.msra.mxu0 %v1698
    %v1700 = vand.u32 %v122, 4294901760
    %1701 = vmatpush.msra.mxu0 %v1700
    %v1702 = vand.u32 %v116, 4294901760
    %1703 = vmatpush.msra.mxu0 %v1702
    %v1704 = vand.u32 %v110, 4294901760
    %1705 = vmatpush.msra.mxu0 %v1704
    %v1706 = vand.u32 %v104, 4294901760
    %1707 = vmatpush.msra.mxu0 %v1706
    %v1708 = vand.u32 %v98, 4294901760
    %1709 = vmatpush.msra.mxu0 %v1708
    %v1710 = vand.u32 %v92, 4294901760
    %1711 = vmatpush.msra.mxu0 %v1710
    %v1712 = vand.u32 %v86, 4294901760
    %1713 = vmatpush.msra.mxu0 %v1712
    %v1714 = vand.u32 %v80, 4294901760
    %1715 = vmatpush.msra.mxu0 %v1714
    %v1716 = vand.u32 %v74, 4294901760
    %1717 = vmatpush.msra.mxu0 %v1716
    %v1718 = vand.u32 %v68, 4294901760
    %1719 = vmatpush.msra.mxu0 %v1718
    %v1720 = vand.u32 %v62, 4294901760
    %1721 = vmatpush.msra.mxu0 %v1720
    %v1722 = vand.u32 %v58, 4294901760
    %1723 = vmatmul.f32.gmra.mxu0 %v1722
    %v1724 = vpop.f32.mrf.mxu0
    %v1725 = vadd.f32 %v1688, %v1724
    %1726 = vdwg.mxu0
    %v1727 = vand.u32 %v248, 4294901760
    %1728 = vmatpush.msra.mxu0 %v1727
    %v1729 = vand.u32 %v242, 4294901760
    %1730 = vmatpush.msra.mxu0 %v1729
    %v1731 = vand.u32 %v236, 4294901760
    %1732 = vmatpush.msra.mxu0 %v1731
    %v1733 = vand.u32 %v230, 4294901760
    %1734 = vmatpush.msra.mxu0 %v1733
    %v1735 = vand.u32 %v224, 4294901760
    %1736 = vmatpush.msra.mxu0 %v1735
    %v1737 = vand.u32 %v218, 4294901760
    %1738 = vmatpush.msra.mxu0 %v1737
    %v1739 = vand.u32 %v212, 4294901760
    %1740 = vmatpush.msra.mxu0 %v1739
    %v1741 = vand.u32 %v206, 4294901760
    %1742 = vmatpush.msra.mxu0 %v1741
    %v1743 = vand.u32 %v200, 4294901760
    %1744 = vmatpush.msra.mxu0 %v1743
    %v1745 = vand.u32 %v194, 4294901760
    %1746 = vmatpush.msra.mxu0 %v1745
    %v1747 = vand.u32 %v188, 4294901760
    %1748 = vmatpush.msra.mxu0 %v1747
    %v1749 = vand.u32 %v182, 4294901760
    %1750 = vmatpush.msra.mxu0 %v1749
    %v1751 = vand.u32 %v176, 4294901760
    %1752 = vmatpush.msra.mxu0 %v1751
    %v1753 = vand.u32 %v170, 4294901760
    %1754 = vmatpush.msra.mxu0 %v1753
    %v1755 = vand.u32 %v164, 4294901760
    %1756 = vmatpush.msra.mxu0 %v1755
    %v1757 = vand.u32 %v158, 4294901760
    %1758 = vmatpush.msra.mxu0 %v1757
    %v1759 = vand.u32 %v59, 4294901760
    %v1760 = vsub.f32 %v59, %v1759
    %v1761 = vand.u32 %v1760, 4294901760
    %v1762 = vsub.f32 %v1760, %v1761
    %v1763 = vand.u32 %v1762, 4294901760
    %1764 = vmatmul.f32.gmra.mxu0 %v1763
    %v1765 = vpop.f32.mrf.mxu0
    %v1766 = vadd.f32 %v1725, %v1765
    %1767 = vdwg.mxu0
    %v1768 = vand.u32 %v248, 4294901760
    %v1769 = vsub.f32 %v248, %v1768
    %v1770 = vand.u32 %v1769, 4294901760
    %v1771 = vsub.f32 %v1769, %v1770
    %v1772 = vand.u32 %v1771, 4294901760
    %1773 = vmatpush.msra.mxu0 %v1772
    %v1774 = vand.u32 %v242, 4294901760
    %v1775 = vsub.f32 %v242, %v1774
    %v1776 = vand.u32 %v1775, 4294901760
    %v1777 = vsub.f32 %v1775, %v1776
    %v1778 = vand.u32 %v1777, 4294901760
    %1779 = vmatpush.msra.mxu0 %v1778
    %v1780 = vand.u32 %v236, 4294901760
    %v1781 = vsub.f32 %v236, %v1780
    %v1782 = vand.u32 %v1781, 4294901760
    %v1783 = vsub.f32 %v1781, %v1782
    %v1784 = vand.u32 %v1783, 4294901760
    %1785 = vmatpush.msra.mxu0 %v1784
    %v1786 = vand.u32 %v230, 4294901760
    %v1787 = vsub.f32 %v230, %v1786
    %v1788 = vand.u32 %v1787, 4294901760
    %v1789 = vsub.f32 %v1787, %v1788
    %v1790 = vand.u32 %v1789, 4294901760
    %1791 = vmatpush.msra.mxu0 %v1790
    %v1792 = vand.u32 %v224, 4294901760
    %v1793 = vsub.f32 %v224, %v1792
    %v1794 = vand.u32 %v1793, 4294901760
    %v1795 = vsub.f32 %v1793, %v1794
    %v1796 = vand.u32 %v1795, 4294901760
    %1797 = vmatpush.msra.mxu0 %v1796
    %v1798 = vand.u32 %v218, 4294901760
    %v1799 = vsub.f32 %v218, %v1798
    %v1800 = vand.u32 %v1799, 4294901760
    %v1801 = vsub.f32 %v1799, %v1800
    %v1802 = vand.u32 %v1801, 4294901760
    %1803 = vmatpush.msra.mxu0 %v1802
    %v1804 = vand.u32 %v212, 4294901760
    %v1805 = vsub.f32 %v212, %v1804
    %v1806 = vand.u32 %v1805, 4294901760
    %v1807 = vsub.f32 %v1805, %v1806
    %v1808 = vand.u32 %v1807, 4294901760
    %1809 = vmatpush.msra.mxu0 %v1808
    %v1810 = vand.u32 %v206, 4294901760
    %v1811 = vsub.f32 %v206, %v1810
    %v1812 = vand.u32 %v1811, 4294901760
    %v1813 = vsub.f32 %v1811, %v1812
    %v1814 = vand.u32 %v1813, 4294901760
    %1815 = vmatpush.msra.mxu0 %v1814
    %v1816 = vand.u32 %v200, 4294901760
    %v1817 = vsub.f32 %v200, %v1816
    %v1818 = vand.u32 %v1817, 4294901760
    %v1819 = vsub.f32 %v1817, %v1818
    %v1820 = vand.u32 %v1819, 4294901760
    %1821 = vmatpush.msra.mxu0 %v1820
    %v1822 = vand.u32 %v194, 4294901760
    %v1823 = vsub.f32 %v194, %v1822
    %v1824 = vand.u32 %v1823, 4294901760
    %v1825 = vsub.f32 %v1823, %v1824
    %v1826 = vand.u32 %v1825, 4294901760
    %1827 = vmatpush.msra.mxu0 %v1826
    %v1828 = vand.u32 %v188, 4294901760
    %v1829 = vsub.f32 %v188, %v1828
    %v1830 = vand.u32 %v1829, 4294901760
    %v1831 = vsub.f32 %v1829, %v1830
    %v1832 = vand.u32 %v1831, 4294901760
    %1833 = vmatpush.msra.mxu0 %v1832
    %v1834 = vand.u32 %v182, 4294901760
    %v1835 = vsub.f32 %v182, %v1834
    %v1836 = vand.u32 %v1835, 4294901760
    %v1837 = vsub.f32 %v1835, %v1836
    %v1838 = vand.u32 %v1837, 4294901760
    %1839 = vmatpush.msra.mxu0 %v1838
    %v1840 = vand.u32 %v176, 4294901760
    %v1841 = vsub.f32 %v176, %v1840
    %v1842 = vand.u32 %v1841, 4294901760
    %v1843 = vsub.f32 %v1841, %v1842
    %v1844 = vand.u32 %v1843, 4294901760
    %1845 = vmatpush.msra.mxu0 %v1844
    %v1846 = vand.u32 %v170, 4294901760
    %v1847 = vsub.f32 %v170, %v1846
    %v1848 = vand.u32 %v1847, 4294901760
    %v1849 = vsub.f32 %v1847, %v1848
    %v1850 = vand.u32 %v1849, 4294901760
    %1851 = vmatpush.msra.mxu0 %v1850
    %v1852 = vand.u32 %v164, 4294901760
    %v1853 = vsub.f32 %v164, %v1852
    %v1854 = vand.u32 %v1853, 4294901760
    %v1855 = vsub.f32 %v1853, %v1854
    %v1856 = vand.u32 %v1855, 4294901760
    %1857 = vmatpush.msra.mxu0 %v1856
    %v1858 = vand.u32 %v158, 4294901760
    %v1859 = vsub.f32 %v158, %v1858
    %v1860 = vand.u32 %v1859, 4294901760
    %v1861 = vsub.f32 %v1859, %v1860
    %v1862 = vand.u32 %v1861, 4294901760
    %1863 = vmatpush.msra.mxu0 %v1862
    %v1864 = vand.u32 %v59, 4294901760
    %1865 = vmatmul.f32.gmra.mxu0 %v1864
    %v1866 = vpop.f32.mrf.mxu0
    %v1867 = vadd.f32 %v1766, %v1866
    %1868 = vdwg.mxu0
    %v1869 = vand.u32 %v248, 4294901760
    %v1870 = vsub.f32 %v248, %v1869
    %1871 = vmatpush.msra.mxu0 %v1870
    %v1872 = vand.u32 %v242, 4294901760
    %v1873 = vsub.f32 %v242, %v1872
    %1874 = vmatpush.msra.mxu0 %v1873
    %v1875 = vand.u32 %v236, 4294901760
    %v1876 = vsub.f32 %v236, %v1875
    %1877 = vmatpush.msra.mxu0 %v1876
    %v1878 = vand.u32 %v230, 4294901760
    %v1879 = vsub.f32 %v230, %v1878
    %1880 = vmatpush.msra.mxu0 %v1879
    %v1881 = vand.u32 %v224, 4294901760
    %v1882 = vsub.f32 %v224, %v1881
    %1883 = vmatpush.msra.mxu0 %v1882
    %v1884 = vand.u32 %v218, 4294901760
    %v1885 = vsub.f32 %v218, %v1884
    %1886 = vmatpush.msra.mxu0 %v1885
    %v1887 = vand.u32 %v212, 4294901760
    %v1888 = vsub.f32 %v212, %v1887
    %1889 = vmatpush.msra.mxu0 %v1888
    %v1890 = vand.u32 %v206, 4294901760
    %v1891 = vsub.f32 %v206, %v1890
    %1892 = vmatpush.msra.mxu0 %v1891
    %v1893 = vand.u32 %v200, 4294901760
    %v1894 = vsub.f32 %v200, %v1893
    %1895 = vmatpush.msra.mxu0 %v1894
    %v1896 = vand.u32 %v194, 4294901760
    %v1897 = vsub.f32 %v194, %v1896
    %1898 = vmatpush.msra.mxu0 %v1897
    %v1899 = vand.u32 %v188, 4294901760
    %v1900 = vsub.f32 %v188, %v1899
    %1901 = vmatpush.msra.mxu0 %v1900
    %v1902 = vand.u32 %v182, 4294901760
    %v1903 = vsub.f32 %v182, %v1902
    %1904 = vmatpush.msra.mxu0 %v1903
    %v1905 = vand.u32 %v176, 4294901760
    %v1906 = vsub.f32 %v176, %v1905
    %1907 = vmatpush.msra.mxu0 %v1906
    %v1908 = vand.u32 %v170, 4294901760
    %v1909 = vsub.f32 %v170, %v1908
    %1910 = vmatpush.msra.mxu0 %v1909
    %v1911 = vand.u32 %v164, 4294901760
    %v1912 = vsub.f32 %v164, %v1911
    %1913 = vmatpush.msra.mxu0 %v1912
    %v1914 = vand.u32 %v158, 4294901760
    %v1915 = vsub.f32 %v158, %v1914
    %1916 = vmatpush.msra.mxu0 %v1915
    %v1917 = vand.u32 %v59, 4294901760
    %v1918 = vsub.f32 %v59, %v1917
    %1919 = vmatmul.f32.gmra.mxu0 %v1918
    %v1920 = vpop.f32.mrf.mxu0
    %v1921 = vadd.f32 %v1867, %v1920
    %1922 = vdwg.mxu0
    %v1923 = vand.u32 %v248, 4294901760
    %1924 = vmatpush.msra.mxu0 %v1923
    %v1925 = vand.u32 %v242, 4294901760
    %1926 = vmatpush.msra.mxu0 %v1925
    %v1927 = vand.u32 %v236, 4294901760
    %1928 = vmatpush.msra.mxu0 %v1927
    %v1929 = vand.u32 %v230, 4294901760
    %1930 = vmatpush.msra.mxu0 %v1929
    %v1931 = vand.u32 %v224, 4294901760
    %1932 = vmatpush.msra.mxu0 %v1931
    %v1933 = vand.u32 %v218, 4294901760
    %1934 = vmatpush.msra.mxu0 %v1933
    %v1935 = vand.u32 %v212, 4294901760
    %1936 = vmatpush.msra.mxu0 %v1935
    %v1937 = vand.u32 %v206, 4294901760
    %1938 = vmatpush.msra.mxu0 %v1937
    %v1939 = vand.u32 %v200, 4294901760
    %1940 = vmatpush.msra.mxu0 %v1939
    %v1941 = vand.u32 %v194, 4294901760
    %1942 = vmatpush.msra.mxu0 %v1941
    %v1943 = vand.u32 %v188, 4294901760
    %1944 = vmatpush.msra.mxu0 %v1943
    %v1945 = vand.u32 %v182, 4294901760
    %1946 = vmatpush.msra.mxu0 %v1945
    %v1947 = vand.u32 %v176, 4294901760
    %1948 = vmatpush.msra.mxu0 %v1947
    %v1949 = vand.u32 %v170, 4294901760
    %1950 = vmatpush.msra.mxu0 %v1949
    %v1951 = vand.u32 %v164, 4294901760
    %1952 = vmatpush.msra.mxu0 %v1951
    %v1953 = vand.u32 %v158, 4294901760
    %1954 = vmatpush.msra.mxu0 %v1953
    %v1955 = vand.u32 %v59, 4294901760
    %v1956 = vsub.f32 %v59, %v1955
    %v1957 = vand.u32 %v1956, 4294901760
    %1958 = vmatmul.f32.gmra.mxu0 %v1957
    %v1959 = vpop.f32.mrf.mxu0
    %v1960 = vadd.f32 %v1921, %v1959
    %1961 = vdwg.mxu0
    %v1962 = vand.u32 %v248, 4294901760
    %v1963 = vsub.f32 %v248, %v1962
    %v1964 = vand.u32 %v1963, 4294901760
    %1965 = vmatpush.msra.mxu0 %v1964
    %v1966 = vand.u32 %v242, 4294901760
    %v1967 = vsub.f32 %v242, %v1966
    %v1968 = vand.u32 %v1967, 4294901760
    %1969 = vmatpush.msra.mxu0 %v1968
    %v1970 = vand.u32 %v236, 4294901760
    %v1971 = vsub.f32 %v236, %v1970
    %v1972 = vand.u32 %v1971, 4294901760
    %1973 = vmatpush.msra.mxu0 %v1972
    %v1974 = vand.u32 %v230, 4294901760
    %v1975 = vsub.f32 %v230, %v1974
    %v1976 = vand.u32 %v1975, 4294901760
    %1977 = vmatpush.msra.mxu0 %v1976
    %v1978 = vand.u32 %v224, 4294901760
    %v1979 = vsub.f32 %v224, %v1978
    %v1980 = vand.u32 %v1979, 4294901760
    %1981 = vmatpush.msra.mxu0 %v1980
    %v1982 = vand.u32 %v218, 4294901760
    %v1983 = vsub.f32 %v218, %v1982
    %v1984 = vand.u32 %v1983, 4294901760
    %1985 = vmatpush.msra.mxu0 %v1984
    %v1986 = vand.u32 %v212, 4294901760
    %v1987 = vsub.f32 %v212, %v1986
    %v1988 = vand.u32 %v1987, 4294901760
    %1989 = vmatpush.msra.mxu0 %v1988
    %v1990 = vand.u32 %v206, 4294901760
    %v1991 = vsub.f32 %v206, %v1990
    %v1992 = vand.u32 %v1991, 4294901760
    %1993 = vmatpush.msra.mxu0 %v1992
    %v1994 = vand.u32 %v200, 4294901760
    %v1995 = vsub.f32 %v200, %v1994
    %v1996 = vand.u32 %v1995, 4294901760
    %1997 = vmatpush.msra.mxu0 %v1996
    %v1998 = vand.u32 %v194, 4294901760
    %v1999 = vsub.f32 %v194, %v1998
    %v2000 = vand.u32 %v1999, 4294901760
    %2001 = vmatpush.msra.mxu0 %v2000
    %v2002 = vand.u32 %v188, 4294901760
    %v2003 = vsub.f32 %v188, %v2002
    %v2004 = vand.u32 %v2003, 4294901760
    %2005 = vmatpush.msra.mxu0 %v2004
    %v2006 = vand.u32 %v182, 4294901760
    %v2007 = vsub.f32 %v182, %v2006
    %v2008 = vand.u32 %v2007, 4294901760
    %2009 = vmatpush.msra.mxu0 %v2008
    %v2010 = vand.u32 %v176, 4294901760
    %v2011 = vsub.f32 %v176, %v2010
    %v2012 = vand.u32 %v2011, 4294901760
    %2013 = vmatpush.msra.mxu0 %v2012
    %v2014 = vand.u32 %v170, 4294901760
    %v2015 = vsub.f32 %v170, %v2014
    %v2016 = vand.u32 %v2015, 4294901760
    %2017 = vmatpush.msra.mxu0 %v2016
    %v2018 = vand.u32 %v164, 4294901760
    %v2019 = vsub.f32 %v164, %v2018
    %v2020 = vand.u32 %v2019, 4294901760
    %2021 = vmatpush.msra.mxu0 %v2020
    %v2022 = vand.u32 %v158, 4294901760
    %v2023 = vsub.f32 %v158, %v2022
    %v2024 = vand.u32 %v2023, 4294901760
    %2025 = vmatpush.msra.mxu0 %v2024
    %v2026 = vand.u32 %v59, 4294901760
    %2027 = vmatmul.f32.gmra.mxu0 %v2026
    %v2028 = vpop.f32.mrf.mxu0
    %v2029 = vadd.f32 %v1960, %v2028
    %2030 = vdwg.mxu0
    %v2031 = vand.u32 %v248, 4294901760
    %2032 = vmatpush.msra.mxu0 %v2031
    %v2033 = vand.u32 %v242, 4294901760
    %2034 = vmatpush.msra.mxu0 %v2033
    %v2035 = vand.u32 %v236, 4294901760
    %2036 = vmatpush.msra.mxu0 %v2035
    %v2037 = vand.u32 %v230, 4294901760
    %2038 = vmatpush.msra.mxu0 %v2037
    %v2039 = vand.u32 %v224, 4294901760
    %2040 = vmatpush.msra.mxu0 %v2039
    %v2041 = vand.u32 %v218, 4294901760
    %2042 = vmatpush.msra.mxu0 %v2041
    %v2043 = vand.u32 %v212, 4294901760
    %2044 = vmatpush.msra.mxu0 %v2043
    %v2045 = vand.u32 %v206, 4294901760
    %2046 = vmatpush.msra.mxu0 %v2045
    %v2047 = vand.u32 %v200, 4294901760
    %2048 = vmatpush.msra.mxu0 %v2047
    %v2049 = vand.u32 %v194, 4294901760
    %2050 = vmatpush.msra.mxu0 %v2049
    %v2051 = vand.u32 %v188, 4294901760
    %2052 = vmatpush.msra.mxu0 %v2051
    %v2053 = vand.u32 %v182, 4294901760
    %2054 = vmatpush.msra.mxu0 %v2053
    %v2055 = vand.u32 %v176, 4294901760
    %2056 = vmatpush.msra.mxu0 %v2055
    %v2057 = vand.u32 %v170, 4294901760
    %2058 = vmatpush.msra.mxu0 %v2057
    %v2059 = vand.u32 %v164, 4294901760
    %2060 = vmatpush.msra.mxu0 %v2059
    %v2061 = vand.u32 %v158, 4294901760
    %2062 = vmatpush.msra.mxu0 %v2061
    %v2063 = vand.u32 %v59, 4294901760
    %2064 = vmatmul.f32.gmra.mxu0 %v2063
    %v2065 = vpop.f32.mrf.mxu0
    %v2066 = vadd.f32 %v2029, %v2065
    %2067 = vdwg.mxu0
    %v2068 = vand.u32 %v344, 4294901760
    %2069 = vmatpush.msra.mxu0 %v2068
    %v2070 = vand.u32 %v338, 4294901760
    %2071 = vmatpush.msra.mxu0 %v2070
    %v2072 = vand.u32 %v332, 4294901760
    %2073 = vmatpush.msra.mxu0 %v2072
    %v2074 = vand.u32 %v326, 4294901760
    %2075 = vmatpush.msra.mxu0 %v2074
    %v2076 = vand.u32 %v320, 4294901760
    %2077 = vmatpush.msra.mxu0 %v2076
    %v2078 = vand.u32 %v314, 4294901760
    %2079 = vmatpush.msra.mxu0 %v2078
    %v2080 = vand.u32 %v308, 4294901760
    %2081 = vmatpush.msra.mxu0 %v2080
    %v2082 = vand.u32 %v302, 4294901760
    %2083 = vmatpush.msra.mxu0 %v2082
    %v2084 = vand.u32 %v296, 4294901760
    %2085 = vmatpush.msra.mxu0 %v2084
    %v2086 = vand.u32 %v290, 4294901760
    %2087 = vmatpush.msra.mxu0 %v2086
    %v2088 = vand.u32 %v284, 4294901760
    %2089 = vmatpush.msra.mxu0 %v2088
    %v2090 = vand.u32 %v278, 4294901760
    %2091 = vmatpush.msra.mxu0 %v2090
    %v2092 = vand.u32 %v272, 4294901760
    %2093 = vmatpush.msra.mxu0 %v2092
    %v2094 = vand.u32 %v266, 4294901760
    %2095 = vmatpush.msra.mxu0 %v2094
    %v2096 = vand.u32 %v260, 4294901760
    %2097 = vmatpush.msra.mxu0 %v2096
    %v2098 = vand.u32 %v254, 4294901760
    %2099 = vmatpush.msra.mxu0 %v2098
    %v2100 = vand.u32 %v60, 4294901760
    %v2101 = vsub.f32 %v60, %v2100
    %v2102 = vand.u32 %v2101, 4294901760
    %v2103 = vsub.f32 %v2101, %v2102
    %v2104 = vand.u32 %v2103, 4294901760
    %2105 = vmatmul.f32.gmra.mxu0 %v2104
    %v2106 = vpop.f32.mrf.mxu0
    %v2107 = vadd.f32 %v2066, %v2106
    %2108 = vdwg.mxu0
    %v2109 = vand.u32 %v344, 4294901760
    %v2110 = vsub.f32 %v344, %v2109
    %v2111 = vand.u32 %v2110, 4294901760
    %v2112 = vsub.f32 %v2110, %v2111
    %v2113 = vand.u32 %v2112, 4294901760
    %2114 = vmatpush.msra.mxu0 %v2113
    %v2115 = vand.u32 %v338, 4294901760
    %v2116 = vsub.f32 %v338, %v2115
    %v2117 = vand.u32 %v2116, 4294901760
    %v2118 = vsub.f32 %v2116, %v2117
    %v2119 = vand.u32 %v2118, 4294901760
    %2120 = vmatpush.msra.mxu0 %v2119
    %v2121 = vand.u32 %v332, 4294901760
    %v2122 = vsub.f32 %v332, %v2121
    %v2123 = vand.u32 %v2122, 4294901760
    %v2124 = vsub.f32 %v2122, %v2123
    %v2125 = vand.u32 %v2124, 4294901760
    %2126 = vmatpush.msra.mxu0 %v2125
    %v2127 = vand.u32 %v326, 4294901760
    %v2128 = vsub.f32 %v326, %v2127
    %v2129 = vand.u32 %v2128, 4294901760
    %v2130 = vsub.f32 %v2128, %v2129
    %v2131 = vand.u32 %v2130, 4294901760
    %2132 = vmatpush.msra.mxu0 %v2131
    %v2133 = vand.u32 %v320, 4294901760
    %v2134 = vsub.f32 %v320, %v2133
    %v2135 = vand.u32 %v2134, 4294901760
    %v2136 = vsub.f32 %v2134, %v2135
    %v2137 = vand.u32 %v2136, 4294901760
    %2138 = vmatpush.msra.mxu0 %v2137
    %v2139 = vand.u32 %v314, 4294901760
    %v2140 = vsub.f32 %v314, %v2139
    %v2141 = vand.u32 %v2140, 4294901760
    %v2142 = vsub.f32 %v2140, %v2141
    %v2143 = vand.u32 %v2142, 4294901760
    %2144 = vmatpush.msra.mxu0 %v2143
    %v2145 = vand.u32 %v308, 4294901760
    %v2146 = vsub.f32 %v308, %v2145
    %v2147 = vand.u32 %v2146, 4294901760
    %v2148 = vsub.f32 %v2146, %v2147
    %v2149 = vand.u32 %v2148, 4294901760
    %2150 = vmatpush.msra.mxu0 %v2149
    %v2151 = vand.u32 %v302, 4294901760
    %v2152 = vsub.f32 %v302, %v2151
    %v2153 = vand.u32 %v2152, 4294901760
    %v2154 = vsub.f32 %v2152, %v2153
    %v2155 = vand.u32 %v2154, 4294901760
    %2156 = vmatpush.msra.mxu0 %v2155
    %v2157 = vand.u32 %v296, 4294901760
    %v2158 = vsub.f32 %v296, %v2157
    %v2159 = vand.u32 %v2158, 4294901760
    %v2160 = vsub.f32 %v2158, %v2159
    %v2161 = vand.u32 %v2160, 4294901760
    %2162 = vmatpush.msra.mxu0 %v2161
    %v2163 = vand.u32 %v290, 4294901760
    %v2164 = vsub.f32 %v290, %v2163
    %v2165 = vand.u32 %v2164, 4294901760
    %v2166 = vsub.f32 %v2164, %v2165
    %v2167 = vand.u32 %v2166, 4294901760
    %2168 = vmatpush.msra.mxu0 %v2167
    %v2169 = vand.u32 %v284, 4294901760
    %v2170 = vsub.f32 %v284, %v2169
    %v2171 = vand.u32 %v2170, 4294901760
    %v2172 = vsub.f32 %v2170, %v2171
    %v2173 = vand.u32 %v2172, 4294901760
    %2174 = vmatpush.msra.mxu0 %v2173
    %v2175 = vand.u32 %v278, 4294901760
    %v2176 = vsub.f32 %v278, %v2175
    %v2177 = vand.u32 %v2176, 4294901760
    %v2178 = vsub.f32 %v2176, %v2177
    %v2179 = vand.u32 %v2178, 4294901760
    %2180 = vmatpush.msra.mxu0 %v2179
    %v2181 = vand.u32 %v272, 4294901760
    %v2182 = vsub.f32 %v272, %v2181
    %v2183 = vand.u32 %v2182, 4294901760
    %v2184 = vsub.f32 %v2182, %v2183
    %v2185 = vand.u32 %v2184, 4294901760
    %2186 = vmatpush.msra.mxu0 %v2185
    %v2187 = vand.u32 %v266, 4294901760
    %v2188 = vsub.f32 %v266, %v2187
    %v2189 = vand.u32 %v2188, 4294901760
    %v2190 = vsub.f32 %v2188, %v2189
    %v2191 = vand.u32 %v2190, 4294901760
    %2192 = vmatpush.msra.mxu0 %v2191
    %v2193 = vand.u32 %v260, 4294901760
    %v2194 = vsub.f32 %v260, %v2193
    %v2195 = vand.u32 %v2194, 4294901760
    %v2196 = vsub.f32 %v2194, %v2195
    %v2197 = vand.u32 %v2196, 4294901760
    %2198 = vmatpush.msra.mxu0 %v2197
    %v2199 = vand.u32 %v254, 4294901760
    %v2200 = vsub.f32 %v254, %v2199
    %v2201 = vand.u32 %v2200, 4294901760
    %v2202 = vsub.f32 %v2200, %v2201
    %v2203 = vand.u32 %v2202, 4294901760
    %2204 = vmatpush.msra.mxu0 %v2203
    %v2205 = vand.u32 %v60, 4294901760
    %2206 = vmatmul.f32.gmra.mxu0 %v2205
    %v2207 = vpop.f32.mrf.mxu0
    %v2208 = vadd.f32 %v2107, %v2207
    %2209 = vdwg.mxu0
    %v2210 = vand.u32 %v344, 4294901760
    %v2211 = vsub.f32 %v344, %v2210
    %2212 = vmatpush.msra.mxu0 %v2211
    %v2213 = vand.u32 %v338, 4294901760
    %v2214 = vsub.f32 %v338, %v2213
    %2215 = vmatpush.msra.mxu0 %v2214
    %v2216 = vand.u32 %v332, 4294901760
    %v2217 = vsub.f32 %v332, %v2216
    %2218 = vmatpush.msra.mxu0 %v2217
    %v2219 = vand.u32 %v326, 4294901760
    %v2220 = vsub.f32 %v326, %v2219
    %2221 = vmatpush.msra.mxu0 %v2220
    %v2222 = vand.u32 %v320, 4294901760
    %v2223 = vsub.f32 %v320, %v2222
    %2224 = vmatpush.msra.mxu0 %v2223
    %v2225 = vand.u32 %v314, 4294901760
    %v2226 = vsub.f32 %v314, %v2225
    %2227 = vmatpush.msra.mxu0 %v2226
    %v2228 = vand.u32 %v308, 4294901760
    %v2229 = vsub.f32 %v308, %v2228
    %2230 = vmatpush.msra.mxu0 %v2229
    %v2231 = vand.u32 %v302, 4294901760
    %v2232 = vsub.f32 %v302, %v2231
    %2233 = vmatpush.msra.mxu0 %v2232
    %v2234 = vand.u32 %v296, 4294901760
    %v2235 = vsub.f32 %v296, %v2234
    %2236 = vmatpush.msra.mxu0 %v2235
    %v2237 = vand.u32 %v290, 4294901760
    %v2238 = vsub.f32 %v290, %v2237
    %2239 = vmatpush.msra.mxu0 %v2238
    %v2240 = vand.u32 %v284, 4294901760
    %v2241 = vsub.f32 %v284, %v2240
    %2242 = vmatpush.msra.mxu0 %v2241
    %v2243 = vand.u32 %v278, 4294901760
    %v2244 = vsub.f32 %v278, %v2243
    %2245 = vmatpush.msra.mxu0 %v2244
    %v2246 = vand.u32 %v272, 4294901760
    %v2247 = vsub.f32 %v272, %v2246
    %2248 = vmatpush.msra.mxu0 %v2247
    %v2249 = vand.u32 %v266, 4294901760
    %v2250 = vsub.f32 %v266, %v2249
    %2251 = vmatpush.msra.mxu0 %v2250
    %v2252 = vand.u32 %v260, 4294901760
    %v2253 = vsub.f32 %v260, %v2252
    %2254 = vmatpush.msra.mxu0 %v2253
    %v2255 = vand.u32 %v254, 4294901760
    %v2256 = vsub.f32 %v254, %v2255
    %2257 = vmatpush.msra.mxu0 %v2256
    %v2258 = vand.u32 %v60, 4294901760
    %v2259 = vsub.f32 %v60, %v2258
    %2260 = vmatmul.f32.gmra.mxu0 %v2259
    %v2261 = vpop.f32.mrf.mxu0
    %v2262 = vadd.f32 %v2208, %v2261
    %2263 = vdwg.mxu0
    %v2264 = vand.u32 %v344, 4294901760
    %2265 = vmatpush.msra.mxu0 %v2264
    %v2266 = vand.u32 %v338, 4294901760
    %2267 = vmatpush.msra.mxu0 %v2266
    %v2268 = vand.u32 %v332, 4294901760
    %2269 = vmatpush.msra.mxu0 %v2268
    %v2270 = vand.u32 %v326, 4294901760
    %2271 = vmatpush.msra.mxu0 %v2270
    %v2272 = vand.u32 %v320, 4294901760
    %2273 = vmatpush.msra.mxu0 %v2272
    %v2274 = vand.u32 %v314, 4294901760
    %2275 = vmatpush.msra.mxu0 %v2274
    %v2276 = vand.u32 %v308, 4294901760
    %2277 = vmatpush.msra.mxu0 %v2276
    %v2278 = vand.u32 %v302, 4294901760
    %2279 = vmatpush.msra.mxu0 %v2278
    %v2280 = vand.u32 %v296, 4294901760
    %2281 = vmatpush.msra.mxu0 %v2280
    %v2282 = vand.u32 %v290, 4294901760
    %2283 = vmatpush.msra.mxu0 %v2282
    %v2284 = vand.u32 %v284, 4294901760
    %2285 = vmatpush.msra.mxu0 %v2284
    %v2286 = vand.u32 %v278, 4294901760
    %2287 = vmatpush.msra.mxu0 %v2286
    %v2288 = vand.u32 %v272, 4294901760
    %2289 = vmatpush.msra.mxu0 %v2288
    %v2290 = vand.u32 %v266, 4294901760
    %2291 = vmatpush.msra.mxu0 %v2290
    %v2292 = vand.u32 %v260, 4294901760
    %2293 = vmatpush.msra.mxu0 %v2292
    %v2294 = vand.u32 %v254, 4294901760
    %2295 = vmatpush.msra.mxu0 %v2294
    %v2296 = vand.u32 %v60, 4294901760
    %v2297 = vsub.f32 %v60, %v2296
    %v2298 = vand.u32 %v2297, 4294901760
    %2299 = vmatmul.f32.gmra.mxu0 %v2298
    %v2300 = vpop.f32.mrf.mxu0
    %v2301 = vadd.f32 %v2262, %v2300
    %2302 = vdwg.mxu0
    %v2303 = vand.u32 %v344, 4294901760
    %v2304 = vsub.f32 %v344, %v2303
    %v2305 = vand.u32 %v2304, 4294901760
    %2306 = vmatpush.msra.mxu0 %v2305
    %v2307 = vand.u32 %v338, 4294901760
    %v2308 = vsub.f32 %v338, %v2307
    %v2309 = vand.u32 %v2308, 4294901760
    %2310 = vmatpush.msra.mxu0 %v2309
    %v2311 = vand.u32 %v332, 4294901760
    %v2312 = vsub.f32 %v332, %v2311
    %v2313 = vand.u32 %v2312, 4294901760
    %2314 = vmatpush.msra.mxu0 %v2313
    %v2315 = vand.u32 %v326, 4294901760
    %v2316 = vsub.f32 %v326, %v2315
    %v2317 = vand.u32 %v2316, 4294901760
    %2318 = vmatpush.msra.mxu0 %v2317
    %v2319 = vand.u32 %v320, 4294901760
    %v2320 = vsub.f32 %v320, %v2319
    %v2321 = vand.u32 %v2320, 4294901760
    %2322 = vmatpush.msra.mxu0 %v2321
    %v2323 = vand.u32 %v314, 4294901760
    %v2324 = vsub.f32 %v314, %v2323
    %v2325 = vand.u32 %v2324, 4294901760
    %2326 = vmatpush.msra.mxu0 %v2325
    %v2327 = vand.u32 %v308, 4294901760
    %v2328 = vsub.f32 %v308, %v2327
    %v2329 = vand.u32 %v2328, 4294901760
    %2330 = vmatpush.msra.mxu0 %v2329
    %v2331 = vand.u32 %v302, 4294901760
    %v2332 = vsub.f32 %v302, %v2331
    %v2333 = vand.u32 %v2332, 4294901760
    %2334 = vmatpush.msra.mxu0 %v2333
    %v2335 = vand.u32 %v296, 4294901760
    %v2336 = vsub.f32 %v296, %v2335
    %v2337 = vand.u32 %v2336, 4294901760
    %2338 = vmatpush.msra.mxu0 %v2337
    %v2339 = vand.u32 %v290, 4294901760
    %v2340 = vsub.f32 %v290, %v2339
    %v2341 = vand.u32 %v2340, 4294901760
    %2342 = vmatpush.msra.mxu0 %v2341
    %v2343 = vand.u32 %v284, 4294901760
    %v2344 = vsub.f32 %v284, %v2343
    %v2345 = vand.u32 %v2344, 4294901760
    %2346 = vmatpush.msra.mxu0 %v2345
    %v2347 = vand.u32 %v278, 4294901760
    %v2348 = vsub.f32 %v278, %v2347
    %v2349 = vand.u32 %v2348, 4294901760
    %2350 = vmatpush.msra.mxu0 %v2349
    %v2351 = vand.u32 %v272, 4294901760
    %v2352 = vsub.f32 %v272, %v2351
    %v2353 = vand.u32 %v2352, 4294901760
    %2354 = vmatpush.msra.mxu0 %v2353
    %v2355 = vand.u32 %v266, 4294901760
    %v2356 = vsub.f32 %v266, %v2355
    %v2357 = vand.u32 %v2356, 4294901760
    %2358 = vmatpush.msra.mxu0 %v2357
    %v2359 = vand.u32 %v260, 4294901760
    %v2360 = vsub.f32 %v260, %v2359
    %v2361 = vand.u32 %v2360, 4294901760
    %2362 = vmatpush.msra.mxu0 %v2361
    %v2363 = vand.u32 %v254, 4294901760
    %v2364 = vsub.f32 %v254, %v2363
    %v2365 = vand.u32 %v2364, 4294901760
    %2366 = vmatpush.msra.mxu0 %v2365
    %v2367 = vand.u32 %v60, 4294901760
    %2368 = vmatmul.f32.gmra.mxu0 %v2367
    %v2369 = vpop.f32.mrf.mxu0
    %v2370 = vadd.f32 %v2301, %v2369
    %2371 = vdwg.mxu0
    %v2372 = vand.u32 %v344, 4294901760
    %2373 = vmatpush.msra.mxu0 %v2372
    %v2374 = vand.u32 %v338, 4294901760
    %2375 = vmatpush.msra.mxu0 %v2374
    %v2376 = vand.u32 %v332, 4294901760
    %2377 = vmatpush.msra.mxu0 %v2376
    %v2378 = vand.u32 %v326, 4294901760
    %2379 = vmatpush.msra.mxu0 %v2378
    %v2380 = vand.u32 %v320, 4294901760
    %2381 = vmatpush.msra.mxu0 %v2380
    %v2382 = vand.u32 %v314, 4294901760
    %2383 = vmatpush.msra.mxu0 %v2382
    %v2384 = vand.u32 %v308, 4294901760
    %2385 = vmatpush.msra.mxu0 %v2384
    %v2386 = vand.u32 %v302, 4294901760
    %2387 = vmatpush.msra.mxu0 %v2386
    %v2388 = vand.u32 %v296, 4294901760
    %2389 = vmatpush.msra.mxu0 %v2388
    %v2390 = vand.u32 %v290, 4294901760
    %2391 = vmatpush.msra.mxu0 %v2390
    %v2392 = vand.u32 %v284, 4294901760
    %2393 = vmatpush.msra.mxu0 %v2392
    %v2394 = vand.u32 %v278, 4294901760
    %2395 = vmatpush.msra.mxu0 %v2394
    %v2396 = vand.u32 %v272, 4294901760
    %2397 = vmatpush.msra.mxu0 %v2396
    %v2398 = vand.u32 %v266, 4294901760
    %2399 = vmatpush.msra.mxu0 %v2398
    %v2400 = vand.u32 %v260, 4294901760
    %2401 = vmatpush.msra.mxu0 %v2400
    %v2402 = vand.u32 %v254, 4294901760
    %2403 = vmatpush.msra.mxu0 %v2402
    %v2404 = vand.u32 %v60, 4294901760
    %2405 = vmatmul.f32.gmra.mxu0 %v2404
    %v2406 = vpop.f32.mrf.mxu0
    %v2407 = vadd.f32 %v2370, %v2406
    %2408 = vdwg.mxu0
    %v2409 = vand.u32 %v153, 4294901760
    %2410 = vmatpush.msra.mxu0 %v2409
    %v2411 = vand.u32 %v147, 4294901760
    %2412 = vmatpush.msra.mxu0 %v2411
    %v2413 = vand.u32 %v141, 4294901760
    %2414 = vmatpush.msra.mxu0 %v2413
    %v2415 = vand.u32 %v135, 4294901760
    %2416 = vmatpush.msra.mxu0 %v2415
    %v2417 = vand.u32 %v129, 4294901760
    %2418 = vmatpush.msra.mxu0 %v2417
    %v2419 = vand.u32 %v123, 4294901760
    %2420 = vmatpush.msra.mxu0 %v2419
    %v2421 = vand.u32 %v117, 4294901760
    %2422 = vmatpush.msra.mxu0 %v2421
    %v2423 = vand.u32 %v111, 4294901760
    %2424 = vmatpush.msra.mxu0 %v2423
    %v2425 = vand.u32 %v105, 4294901760
    %2426 = vmatpush.msra.mxu0 %v2425
    %v2427 = vand.u32 %v99, 4294901760
    %2428 = vmatpush.msra.mxu0 %v2427
    %v2429 = vand.u32 %v93, 4294901760
    %2430 = vmatpush.msra.mxu0 %v2429
    %v2431 = vand.u32 %v87, 4294901760
    %2432 = vmatpush.msra.mxu0 %v2431
    %v2433 = vand.u32 %v81, 4294901760
    %2434 = vmatpush.msra.mxu0 %v2433
    %v2435 = vand.u32 %v75, 4294901760
    %2436 = vmatpush.msra.mxu0 %v2435
    %v2437 = vand.u32 %v69, 4294901760
    %2438 = vmatpush.msra.mxu0 %v2437
    %v2439 = vand.u32 %v63, 4294901760
    %2440 = vmatpush.msra.mxu0 %v2439
    %v2441 = vand.u32 %v58, 4294901760
    %v2442 = vsub.f32 %v58, %v2441
    %v2443 = vand.u32 %v2442, 4294901760
    %v2444 = vsub.f32 %v2442, %v2443
    %v2445 = vand.u32 %v2444, 4294901760
    %2446 = vmatmul.f32.gmra.mxu0 %v2445
    %v2447 = vpop.f32.mrf.mxu0
    %v2448 = vadd.f32 %v353, %v2447
    %2449 = vdwg.mxu0
    %v2450 = vand.u32 %v153, 4294901760
    %v2451 = vsub.f32 %v153, %v2450
    %v2452 = vand.u32 %v2451, 4294901760
    %v2453 = vsub.f32 %v2451, %v2452
    %v2454 = vand.u32 %v2453, 4294901760
    %2455 = vmatpush.msra.mxu0 %v2454
    %v2456 = vand.u32 %v147, 4294901760
    %v2457 = vsub.f32 %v147, %v2456
    %v2458 = vand.u32 %v2457, 4294901760
    %v2459 = vsub.f32 %v2457, %v2458
    %v2460 = vand.u32 %v2459, 4294901760
    %2461 = vmatpush.msra.mxu0 %v2460
    %v2462 = vand.u32 %v141, 4294901760
    %v2463 = vsub.f32 %v141, %v2462
    %v2464 = vand.u32 %v2463, 4294901760
    %v2465 = vsub.f32 %v2463, %v2464
    %v2466 = vand.u32 %v2465, 4294901760
    %2467 = vmatpush.msra.mxu0 %v2466
    %v2468 = vand.u32 %v135, 4294901760
    %v2469 = vsub.f32 %v135, %v2468
    %v2470 = vand.u32 %v2469, 4294901760
    %v2471 = vsub.f32 %v2469, %v2470
    %v2472 = vand.u32 %v2471, 4294901760
    %2473 = vmatpush.msra.mxu0 %v2472
    %v2474 = vand.u32 %v129, 4294901760
    %v2475 = vsub.f32 %v129, %v2474
    %v2476 = vand.u32 %v2475, 4294901760
    %v2477 = vsub.f32 %v2475, %v2476
    %v2478 = vand.u32 %v2477, 4294901760
    %2479 = vmatpush.msra.mxu0 %v2478
    %v2480 = vand.u32 %v123, 4294901760
    %v2481 = vsub.f32 %v123, %v2480
    %v2482 = vand.u32 %v2481, 4294901760
    %v2483 = vsub.f32 %v2481, %v2482
    %v2484 = vand.u32 %v2483, 4294901760
    %2485 = vmatpush.msra.mxu0 %v2484
    %v2486 = vand.u32 %v117, 4294901760
    %v2487 = vsub.f32 %v117, %v2486
    %v2488 = vand.u32 %v2487, 4294901760
    %v2489 = vsub.f32 %v2487, %v2488
    %v2490 = vand.u32 %v2489, 4294901760
    %2491 = vmatpush.msra.mxu0 %v2490
    %v2492 = vand.u32 %v111, 4294901760
    %v2493 = vsub.f32 %v111, %v2492
    %v2494 = vand.u32 %v2493, 4294901760
    %v2495 = vsub.f32 %v2493, %v2494
    %v2496 = vand.u32 %v2495, 4294901760
    %2497 = vmatpush.msra.mxu0 %v2496
    %v2498 = vand.u32 %v105, 4294901760
    %v2499 = vsub.f32 %v105, %v2498
    %v2500 = vand.u32 %v2499, 4294901760
    %v2501 = vsub.f32 %v2499, %v2500
    %v2502 = vand.u32 %v2501, 4294901760
    %2503 = vmatpush.msra.mxu0 %v2502
    %v2504 = vand.u32 %v99, 4294901760
    %v2505 = vsub.f32 %v99, %v2504
    %v2506 = vand.u32 %v2505, 4294901760
    %v2507 = vsub.f32 %v2505, %v2506
    %v2508 = vand.u32 %v2507, 4294901760
    %2509 = vmatpush.msra.mxu0 %v2508
    %v2510 = vand.u32 %v93, 4294901760
    %v2511 = vsub.f32 %v93, %v2510
    %v2512 = vand.u32 %v2511, 4294901760
    %v2513 = vsub.f32 %v2511, %v2512
    %v2514 = vand.u32 %v2513, 4294901760
    %2515 = vmatpush.msra.mxu0 %v2514
    %v2516 = vand.u32 %v87, 4294901760
    %v2517 = vsub.f32 %v87, %v2516
    %v2518 = vand.u32 %v2517, 4294901760
    %v2519 = vsub.f32 %v2517, %v2518
    %v2520 = vand.u32 %v2519, 4294901760
    %2521 = vmatpush.msra.mxu0 %v2520
    %v2522 = vand.u32 %v81, 4294901760
    %v2523 = vsub.f32 %v81, %v2522
    %v2524 = vand.u32 %v2523, 4294901760
    %v2525 = vsub.f32 %v2523, %v2524
    %v2526 = vand.u32 %v2525, 4294901760
    %2527 = vmatpush.msra.mxu0 %v2526
    %v2528 = vand.u32 %v75, 4294901760
    %v2529 = vsub.f32 %v75, %v2528
    %v2530 = vand.u32 %v2529, 4294901760
    %v2531 = vsub.f32 %v2529, %v2530
    %v2532 = vand.u32 %v2531, 4294901760
    %2533 = vmatpush.msra.mxu0 %v2532
    %v2534 = vand.u32 %v69, 4294901760
    %v2535 = vsub.f32 %v69, %v2534
    %v2536 = vand.u32 %v2535, 4294901760
    %v2537 = vsub.f32 %v2535, %v2536
    %v2538 = vand.u32 %v2537, 4294901760
    %2539 = vmatpush.msra.mxu0 %v2538
    %v2540 = vand.u32 %v63, 4294901760
    %v2541 = vsub.f32 %v63, %v2540
    %v2542 = vand.u32 %v2541, 4294901760
    %v2543 = vsub.f32 %v2541, %v2542
    %v2544 = vand.u32 %v2543, 4294901760
    %2545 = vmatpush.msra.mxu0 %v2544
    %v2546 = vand.u32 %v58, 4294901760
    %2547 = vmatmul.f32.gmra.mxu0 %v2546
    %v2548 = vpop.f32.mrf.mxu0
    %v2549 = vadd.f32 %v2448, %v2548
    %2550 = vdwg.mxu0
    %v2551 = vand.u32 %v153, 4294901760
    %v2552 = vsub.f32 %v153, %v2551
    %2553 = vmatpush.msra.mxu0 %v2552
    %v2554 = vand.u32 %v147, 4294901760
    %v2555 = vsub.f32 %v147, %v2554
    %2556 = vmatpush.msra.mxu0 %v2555
    %v2557 = vand.u32 %v141, 4294901760
    %v2558 = vsub.f32 %v141, %v2557
    %2559 = vmatpush.msra.mxu0 %v2558
    %v2560 = vand.u32 %v135, 4294901760
    %v2561 = vsub.f32 %v135, %v2560
    %2562 = vmatpush.msra.mxu0 %v2561
    %v2563 = vand.u32 %v129, 4294901760
    %v2564 = vsub.f32 %v129, %v2563
    %2565 = vmatpush.msra.mxu0 %v2564
    %v2566 = vand.u32 %v123, 4294901760
    %v2567 = vsub.f32 %v123, %v2566
    %2568 = vmatpush.msra.mxu0 %v2567
    %v2569 = vand.u32 %v117, 4294901760
    %v2570 = vsub.f32 %v117, %v2569
    %2571 = vmatpush.msra.mxu0 %v2570
    %v2572 = vand.u32 %v111, 4294901760
    %v2573 = vsub.f32 %v111, %v2572
    %2574 = vmatpush.msra.mxu0 %v2573
    %v2575 = vand.u32 %v105, 4294901760
    %v2576 = vsub.f32 %v105, %v2575
    %2577 = vmatpush.msra.mxu0 %v2576
    %v2578 = vand.u32 %v99, 4294901760
    %v2579 = vsub.f32 %v99, %v2578
    %2580 = vmatpush.msra.mxu0 %v2579
    %v2581 = vand.u32 %v93, 4294901760
    %v2582 = vsub.f32 %v93, %v2581
    %2583 = vmatpush.msra.mxu0 %v2582
    %v2584 = vand.u32 %v87, 4294901760
    %v2585 = vsub.f32 %v87, %v2584
    %2586 = vmatpush.msra.mxu0 %v2585
    %v2587 = vand.u32 %v81, 4294901760
    %v2588 = vsub.f32 %v81, %v2587
    %2589 = vmatpush.msra.mxu0 %v2588
    %v2590 = vand.u32 %v75, 4294901760
    %v2591 = vsub.f32 %v75, %v2590
    %2592 = vmatpush.msra.mxu0 %v2591
    %v2593 = vand.u32 %v69, 4294901760
    %v2594 = vsub.f32 %v69, %v2593
    %2595 = vmatpush.msra.mxu0 %v2594
    %v2596 = vand.u32 %v63, 4294901760
    %v2597 = vsub.f32 %v63, %v2596
    %2598 = vmatpush.msra.mxu0 %v2597
    %v2599 = vand.u32 %v58, 4294901760
    %v2600 = vsub.f32 %v58, %v2599
    %2601 = vmatmul.f32.gmra.mxu0 %v2600
    %v2602 = vpop.f32.mrf.mxu0
    %v2603 = vadd.f32 %v2549, %v2602
    %2604 = vdwg.mxu0
    %v2605 = vand.u32 %v153, 4294901760
    %2606 = vmatpush.msra.mxu0 %v2605
    %v2607 = vand.u32 %v147, 4294901760
    %2608 = vmatpush.msra.mxu0 %v2607
    %v2609 = vand.u32 %v141, 4294901760
    %2610 = vmatpush.msra.mxu0 %v2609
    %v2611 = vand.u32 %v135, 4294901760
    %2612 = vmatpush.msra.mxu0 %v2611
    %v2613 = vand.u32 %v129, 4294901760
    %2614 = vmatpush.msra.mxu0 %v2613
    %v2615 = vand.u32 %v123, 4294901760
    %2616 = vmatpush.msra.mxu0 %v2615
    %v2617 = vand.u32 %v117, 4294901760
    %2618 = vmatpush.msra.mxu0 %v2617
    %v2619 = vand.u32 %v111, 4294901760
    %2620 = vmatpush.msra.mxu0 %v2619
    %v2621 = vand.u32 %v105, 4294901760
    %2622 = vmatpush.msra.mxu0 %v2621
    %v2623 = vand.u32 %v99, 4294901760
    %2624 = vmatpush.msra.mxu0 %v2623
    %v2625 = vand.u32 %v93, 4294901760
    %2626 = vmatpush.msra.mxu0 %v2625
    %v2627 = vand.u32 %v87, 4294901760
    %2628 = vmatpush.msra.mxu0 %v2627
    %v2629 = vand.u32 %v81, 4294901760
    %2630 = vmatpush.msra.mxu0 %v2629
    %v2631 = vand.u32 %v75, 4294901760
    %2632 = vmatpush.msra.mxu0 %v2631
    %v2633 = vand.u32 %v69, 4294901760
    %2634 = vmatpush.msra.mxu0 %v2633
    %v2635 = vand.u32 %v63, 4294901760
    %2636 = vmatpush.msra.mxu0 %v2635
    %v2637 = vand.u32 %v58, 4294901760
    %v2638 = vsub.f32 %v58, %v2637
    %v2639 = vand.u32 %v2638, 4294901760
    %2640 = vmatmul.f32.gmra.mxu0 %v2639
    %v2641 = vpop.f32.mrf.mxu0
    %v2642 = vadd.f32 %v2603, %v2641
    %2643 = vdwg.mxu0
    %v2644 = vand.u32 %v153, 4294901760
    %v2645 = vsub.f32 %v153, %v2644
    %v2646 = vand.u32 %v2645, 4294901760
    %2647 = vmatpush.msra.mxu0 %v2646
    %v2648 = vand.u32 %v147, 4294901760
    %v2649 = vsub.f32 %v147, %v2648
    %v2650 = vand.u32 %v2649, 4294901760
    %2651 = vmatpush.msra.mxu0 %v2650
    %v2652 = vand.u32 %v141, 4294901760
    %v2653 = vsub.f32 %v141, %v2652
    %v2654 = vand.u32 %v2653, 4294901760
    %2655 = vmatpush.msra.mxu0 %v2654
    %v2656 = vand.u32 %v135, 4294901760
    %v2657 = vsub.f32 %v135, %v2656
    %v2658 = vand.u32 %v2657, 4294901760
    %2659 = vmatpush.msra.mxu0 %v2658
    %v2660 = vand.u32 %v129, 4294901760
    %v2661 = vsub.f32 %v129, %v2660
    %v2662 = vand.u32 %v2661, 4294901760
    %2663 = vmatpush.msra.mxu0 %v2662
    %v2664 = vand.u32 %v123, 4294901760
    %v2665 = vsub.f32 %v123, %v2664
    %v2666 = vand.u32 %v2665, 4294901760
    %2667 = vmatpush.msra.mxu0 %v2666
    %v2668 = vand.u32 %v117, 4294901760
    %v2669 = vsub.f32 %v117, %v2668
    %v2670 = vand.u32 %v2669, 4294901760
    %2671 = vmatpush.msra.mxu0 %v2670
    %v2672 = vand.u32 %v111, 4294901760
    %v2673 = vsub.f32 %v111, %v2672
    %v2674 = vand.u32 %v2673, 4294901760
    %2675 = vmatpush.msra.mxu0 %v2674
    %v2676 = vand.u32 %v105, 4294901760
    %v2677 = vsub.f32 %v105, %v2676
    %v2678 = vand.u32 %v2677, 4294901760
    %2679 = vmatpush.msra.mxu0 %v2678
    %v2680 = vand.u32 %v99, 4294901760
    %v2681 = vsub.f32 %v99, %v2680
    %v2682 = vand.u32 %v2681, 4294901760
    %2683 = vmatpush.msra.mxu0 %v2682
    %v2684 = vand.u32 %v93, 4294901760
    %v2685 = vsub.f32 %v93, %v2684
    %v2686 = vand.u32 %v2685, 4294901760
    %2687 = vmatpush.msra.mxu0 %v2686
    %v2688 = vand.u32 %v87, 4294901760
    %v2689 = vsub.f32 %v87, %v2688
    %v2690 = vand.u32 %v2689, 4294901760
    %2691 = vmatpush.msra.mxu0 %v2690
    %v2692 = vand.u32 %v81, 4294901760
    %v2693 = vsub.f32 %v81, %v2692
    %v2694 = vand.u32 %v2693, 4294901760
    %2695 = vmatpush.msra.mxu0 %v2694
    %v2696 = vand.u32 %v75, 4294901760
    %v2697 = vsub.f32 %v75, %v2696
    %v2698 = vand.u32 %v2697, 4294901760
    %2699 = vmatpush.msra.mxu0 %v2698
    %v2700 = vand.u32 %v69, 4294901760
    %v2701 = vsub.f32 %v69, %v2700
    %v2702 = vand.u32 %v2701, 4294901760
    %2703 = vmatpush.msra.mxu0 %v2702
    %v2704 = vand.u32 %v63, 4294901760
    %v2705 = vsub.f32 %v63, %v2704
    %v2706 = vand.u32 %v2705, 4294901760
    %2707 = vmatpush.msra.mxu0 %v2706
    %v2708 = vand.u32 %v58, 4294901760
    %2709 = vmatmul.f32.gmra.mxu0 %v2708
    %v2710 = vpop.f32.mrf.mxu0
    %v2711 = vadd.f32 %v2642, %v2710
    %2712 = vdwg.mxu0
    %v2713 = vand.u32 %v153, 4294901760
    %2714 = vmatpush.msra.mxu0 %v2713
    %v2715 = vand.u32 %v147, 4294901760
    %2716 = vmatpush.msra.mxu0 %v2715
    %v2717 = vand.u32 %v141, 4294901760
    %2718 = vmatpush.msra.mxu0 %v2717
    %v2719 = vand.u32 %v135, 4294901760
    %2720 = vmatpush.msra.mxu0 %v2719
    %v2721 = vand.u32 %v129, 4294901760
    %2722 = vmatpush.msra.mxu0 %v2721
    %v2723 = vand.u32 %v123, 4294901760
    %2724 = vmatpush.msra.mxu0 %v2723
    %v2725 = vand.u32 %v117, 4294901760
    %2726 = vmatpush.msra.mxu0 %v2725
    %v2727 = vand.u32 %v111, 4294901760
    %2728 = vmatpush.msra.mxu0 %v2727
    %v2729 = vand.u32 %v105, 4294901760
    %2730 = vmatpush.msra.mxu0 %v2729
    %v2731 = vand.u32 %v99, 4294901760
    %2732 = vmatpush.msra.mxu0 %v2731
    %v2733 = vand.u32 %v93, 4294901760
    %2734 = vmatpush.msra.mxu0 %v2733
    %v2735 = vand.u32 %v87, 4294901760
    %2736 = vmatpush.msra.mxu0 %v2735
    %v2737 = vand.u32 %v81, 4294901760
    %2738 = vmatpush.msra.mxu0 %v2737
    %v2739 = vand.u32 %v75, 4294901760
    %2740 = vmatpush.msra.mxu0 %v2739
    %v2741 = vand.u32 %v69, 4294901760
    %2742 = vmatpush.msra.mxu0 %v2741
    %v2743 = vand.u32 %v63, 4294901760
    %2744 = vmatpush.msra.mxu0 %v2743
    %v2745 = vand.u32 %v58, 4294901760
    %2746 = vmatmul.f32.gmra.mxu0 %v2745
    %v2747 = vpop.f32.mrf.mxu0
    %v2748 = vadd.f32 %v2711, %v2747
    %2749 = vdwg.mxu0
    %v2750 = vand.u32 %v249, 4294901760
    %2751 = vmatpush.msra.mxu0 %v2750
    %v2752 = vand.u32 %v243, 4294901760
    %2753 = vmatpush.msra.mxu0 %v2752
    %v2754 = vand.u32 %v237, 4294901760
    %2755 = vmatpush.msra.mxu0 %v2754
    %v2756 = vand.u32 %v231, 4294901760
    %2757 = vmatpush.msra.mxu0 %v2756
    %v2758 = vand.u32 %v225, 4294901760
    %2759 = vmatpush.msra.mxu0 %v2758
    %v2760 = vand.u32 %v219, 4294901760
    %2761 = vmatpush.msra.mxu0 %v2760
    %v2762 = vand.u32 %v213, 4294901760
    %2763 = vmatpush.msra.mxu0 %v2762
    %v2764 = vand.u32 %v207, 4294901760
    %2765 = vmatpush.msra.mxu0 %v2764
    %v2766 = vand.u32 %v201, 4294901760
    %2767 = vmatpush.msra.mxu0 %v2766
    %v2768 = vand.u32 %v195, 4294901760
    %2769 = vmatpush.msra.mxu0 %v2768
    %v2770 = vand.u32 %v189, 4294901760
    %2771 = vmatpush.msra.mxu0 %v2770
    %v2772 = vand.u32 %v183, 4294901760
    %2773 = vmatpush.msra.mxu0 %v2772
    %v2774 = vand.u32 %v177, 4294901760
    %2775 = vmatpush.msra.mxu0 %v2774
    %v2776 = vand.u32 %v171, 4294901760
    %2777 = vmatpush.msra.mxu0 %v2776
    %v2778 = vand.u32 %v165, 4294901760
    %2779 = vmatpush.msra.mxu0 %v2778
    %v2780 = vand.u32 %v159, 4294901760
    %2781 = vmatpush.msra.mxu0 %v2780
    %v2782 = vand.u32 %v59, 4294901760
    %v2783 = vsub.f32 %v59, %v2782
    %v2784 = vand.u32 %v2783, 4294901760
    %v2785 = vsub.f32 %v2783, %v2784
    %v2786 = vand.u32 %v2785, 4294901760
    %2787 = vmatmul.f32.gmra.mxu0 %v2786
    %v2788 = vpop.f32.mrf.mxu0
    %v2789 = vadd.f32 %v2748, %v2788
    %2790 = vdwg.mxu0
    %v2791 = vand.u32 %v249, 4294901760
    %v2792 = vsub.f32 %v249, %v2791
    %v2793 = vand.u32 %v2792, 4294901760
    %v2794 = vsub.f32 %v2792, %v2793
    %v2795 = vand.u32 %v2794, 4294901760
    %2796 = vmatpush.msra.mxu0 %v2795
    %v2797 = vand.u32 %v243, 4294901760
    %v2798 = vsub.f32 %v243, %v2797
    %v2799 = vand.u32 %v2798, 4294901760
    %v2800 = vsub.f32 %v2798, %v2799
    %v2801 = vand.u32 %v2800, 4294901760
    %2802 = vmatpush.msra.mxu0 %v2801
    %v2803 = vand.u32 %v237, 4294901760
    %v2804 = vsub.f32 %v237, %v2803
    %v2805 = vand.u32 %v2804, 4294901760
    %v2806 = vsub.f32 %v2804, %v2805
    %v2807 = vand.u32 %v2806, 4294901760
    %2808 = vmatpush.msra.mxu0 %v2807
    %v2809 = vand.u32 %v231, 4294901760
    %v2810 = vsub.f32 %v231, %v2809
    %v2811 = vand.u32 %v2810, 4294901760
    %v2812 = vsub.f32 %v2810, %v2811
    %v2813 = vand.u32 %v2812, 4294901760
    %2814 = vmatpush.msra.mxu0 %v2813
    %v2815 = vand.u32 %v225, 4294901760
    %v2816 = vsub.f32 %v225, %v2815
    %v2817 = vand.u32 %v2816, 4294901760
    %v2818 = vsub.f32 %v2816, %v2817
    %v2819 = vand.u32 %v2818, 4294901760
    %2820 = vmatpush.msra.mxu0 %v2819
    %v2821 = vand.u32 %v219, 4294901760
    %v2822 = vsub.f32 %v219, %v2821
    %v2823 = vand.u32 %v2822, 4294901760
    %v2824 = vsub.f32 %v2822, %v2823
    %v2825 = vand.u32 %v2824, 4294901760
    %2826 = vmatpush.msra.mxu0 %v2825
    %v2827 = vand.u32 %v213, 4294901760
    %v2828 = vsub.f32 %v213, %v2827
    %v2829 = vand.u32 %v2828, 4294901760
    %v2830 = vsub.f32 %v2828, %v2829
    %v2831 = vand.u32 %v2830, 4294901760
    %2832 = vmatpush.msra.mxu0 %v2831
    %v2833 = vand.u32 %v207, 4294901760
    %v2834 = vsub.f32 %v207, %v2833
    %v2835 = vand.u32 %v2834, 4294901760
    %v2836 = vsub.f32 %v2834, %v2835
    %v2837 = vand.u32 %v2836, 4294901760
    %2838 = vmatpush.msra.mxu0 %v2837
    %v2839 = vand.u32 %v201, 4294901760
    %v2840 = vsub.f32 %v201, %v2839
    %v2841 = vand.u32 %v2840, 4294901760
    %v2842 = vsub.f32 %v2840, %v2841
    %v2843 = vand.u32 %v2842, 4294901760
    %2844 = vmatpush.msra.mxu0 %v2843
    %v2845 = vand.u32 %v195, 4294901760
    %v2846 = vsub.f32 %v195, %v2845
    %v2847 = vand.u32 %v2846, 4294901760
    %v2848 = vsub.f32 %v2846, %v2847
    %v2849 = vand.u32 %v2848, 4294901760
    %2850 = vmatpush.msra.mxu0 %v2849
    %v2851 = vand.u32 %v189, 4294901760
    %v2852 = vsub.f32 %v189, %v2851
    %v2853 = vand.u32 %v2852, 4294901760
    %v2854 = vsub.f32 %v2852, %v2853
    %v2855 = vand.u32 %v2854, 4294901760
    %2856 = vmatpush.msra.mxu0 %v2855
    %v2857 = vand.u32 %v183, 4294901760
    %v2858 = vsub.f32 %v183, %v2857
    %v2859 = vand.u32 %v2858, 4294901760
    %v2860 = vsub.f32 %v2858, %v2859
    %v2861 = vand.u32 %v2860, 4294901760
    %2862 = vmatpush.msra.mxu0 %v2861
    %v2863 = vand.u32 %v177, 4294901760
    %v2864 = vsub.f32 %v177, %v2863
    %v2865 = vand.u32 %v2864, 4294901760
    %v2866 = vsub.f32 %v2864, %v2865
    %v2867 = vand.u32 %v2866, 4294901760
    %2868 = vmatpush.msra.mxu0 %v2867
    %v2869 = vand.u32 %v171, 4294901760
    %v2870 = vsub.f32 %v171, %v2869
    %v2871 = vand.u32 %v2870, 4294901760
    %v2872 = vsub.f32 %v2870, %v2871
    %v2873 = vand.u32 %v2872, 4294901760
    %2874 = vmatpush.msra.mxu0 %v2873
    %v2875 = vand.u32 %v165, 4294901760
    %v2876 = vsub.f32 %v165, %v2875
    %v2877 = vand.u32 %v2876, 4294901760
    %v2878 = vsub.f32 %v2876, %v2877
    %v2879 = vand.u32 %v2878, 4294901760
    %2880 = vmatpush.msra.mxu0 %v2879
    %v2881 = vand.u32 %v159, 4294901760
    %v2882 = vsub.f32 %v159, %v2881
    %v2883 = vand.u32 %v2882, 4294901760
    %v2884 = vsub.f32 %v2882, %v2883
    %v2885 = vand.u32 %v2884, 4294901760
    %2886 = vmatpush.msra.mxu0 %v2885
    %v2887 = vand.u32 %v59, 4294901760
    %2888 = vmatmul.f32.gmra.mxu0 %v2887
    %v2889 = vpop.f32.mrf.mxu0
    %v2890 = vadd.f32 %v2789, %v2889
    %2891 = vdwg.mxu0
    %v2892 = vand.u32 %v249, 4294901760
    %v2893 = vsub.f32 %v249, %v2892
    %2894 = vmatpush.msra.mxu0 %v2893
    %v2895 = vand.u32 %v243, 4294901760
    %v2896 = vsub.f32 %v243, %v2895
    %2897 = vmatpush.msra.mxu0 %v2896
    %v2898 = vand.u32 %v237, 4294901760
    %v2899 = vsub.f32 %v237, %v2898
    %2900 = vmatpush.msra.mxu0 %v2899
    %v2901 = vand.u32 %v231, 4294901760
    %v2902 = vsub.f32 %v231, %v2901
    %2903 = vmatpush.msra.mxu0 %v2902
    %v2904 = vand.u32 %v225, 4294901760
    %v2905 = vsub.f32 %v225, %v2904
    %2906 = vmatpush.msra.mxu0 %v2905
    %v2907 = vand.u32 %v219, 4294901760
    %v2908 = vsub.f32 %v219, %v2907
    %2909 = vmatpush.msra.mxu0 %v2908
    %v2910 = vand.u32 %v213, 4294901760
    %v2911 = vsub.f32 %v213, %v2910
    %2912 = vmatpush.msra.mxu0 %v2911
    %v2913 = vand.u32 %v207, 4294901760
    %v2914 = vsub.f32 %v207, %v2913
    %2915 = vmatpush.msra.mxu0 %v2914
    %v2916 = vand.u32 %v201, 4294901760
    %v2917 = vsub.f32 %v201, %v2916
    %2918 = vmatpush.msra.mxu0 %v2917
    %v2919 = vand.u32 %v195, 4294901760
    %v2920 = vsub.f32 %v195, %v2919
    %2921 = vmatpush.msra.mxu0 %v2920
    %v2922 = vand.u32 %v189, 4294901760
    %v2923 = vsub.f32 %v189, %v2922
    %2924 = vmatpush.msra.mxu0 %v2923
    %v2925 = vand.u32 %v183, 4294901760
    %v2926 = vsub.f32 %v183, %v2925
    %2927 = vmatpush.msra.mxu0 %v2926
    %v2928 = vand.u32 %v177, 4294901760
    %v2929 = vsub.f32 %v177, %v2928
    %2930 = vmatpush.msra.mxu0 %v2929
    %v2931 = vand.u32 %v171, 4294901760
    %v2932 = vsub.f32 %v171, %v2931
    %2933 = vmatpush.msra.mxu0 %v2932
    %v2934 = vand.u32 %v165, 4294901760
    %v2935 = vsub.f32 %v165, %v2934
    %2936 = vmatpush.msra.mxu0 %v2935
    %v2937 = vand.u32 %v159, 4294901760
    %v2938 = vsub.f32 %v159, %v2937
    %2939 = vmatpush.msra.mxu0 %v2938
    %v2940 = vand.u32 %v59, 4294901760
    %v2941 = vsub.f32 %v59, %v2940
    %2942 = vmatmul.f32.gmra.mxu0 %v2941
    %v2943 = vpop.f32.mrf.mxu0
    %v2944 = vadd.f32 %v2890, %v2943
    %2945 = vdwg.mxu0
    %v2946 = vand.u32 %v249, 4294901760
    %2947 = vmatpush.msra.mxu0 %v2946
    %v2948 = vand.u32 %v243, 4294901760
    %2949 = vmatpush.msra.mxu0 %v2948
    %v2950 = vand.u32 %v237, 4294901760
    %2951 = vmatpush.msra.mxu0 %v2950
    %v2952 = vand.u32 %v231, 4294901760
    %2953 = vmatpush.msra.mxu0 %v2952
    %v2954 = vand.u32 %v225, 4294901760
    %2955 = vmatpush.msra.mxu0 %v2954
    %v2956 = vand.u32 %v219, 4294901760
    %2957 = vmatpush.msra.mxu0 %v2956
    %v2958 = vand.u32 %v213, 4294901760
    %2959 = vmatpush.msra.mxu0 %v2958
    %v2960 = vand.u32 %v207, 4294901760
    %2961 = vmatpush.msra.mxu0 %v2960
    %v2962 = vand.u32 %v201, 4294901760
    %2963 = vmatpush.msra.mxu0 %v2962
    %v2964 = vand.u32 %v195, 4294901760
    %2965 = vmatpush.msra.mxu0 %v2964
    %v2966 = vand.u32 %v189, 4294901760
    %2967 = vmatpush.msra.mxu0 %v2966
    %v2968 = vand.u32 %v183, 4294901760
    %2969 = vmatpush.msra.mxu0 %v2968
    %v2970 = vand.u32 %v177, 4294901760
    %2971 = vmatpush.msra.mxu0 %v2970
    %v2972 = vand.u32 %v171, 4294901760
    %2973 = vmatpush.msra.mxu0 %v2972
    %v2974 = vand.u32 %v165, 4294901760
    %2975 = vmatpush.msra.mxu0 %v2974
    %v2976 = vand.u32 %v159, 4294901760
    %2977 = vmatpush.msra.mxu0 %v2976
    %v2978 = vand.u32 %v59, 4294901760
    %v2979 = vsub.f32 %v59, %v2978
    %v2980 = vand.u32 %v2979, 4294901760
    %2981 = vmatmul.f32.gmra.mxu0 %v2980
    %v2982 = vpop.f32.mrf.mxu0
    %v2983 = vadd.f32 %v2944, %v2982
    %2984 = vdwg.mxu0
    %v2985 = vand.u32 %v249, 4294901760
    %v2986 = vsub.f32 %v249, %v2985
    %v2987 = vand.u32 %v2986, 4294901760
    %2988 = vmatpush.msra.mxu0 %v2987
    %v2989 = vand.u32 %v243, 4294901760
    %v2990 = vsub.f32 %v243, %v2989
    %v2991 = vand.u32 %v2990, 4294901760
    %2992 = vmatpush.msra.mxu0 %v2991
    %v2993 = vand.u32 %v237, 4294901760
    %v2994 = vsub.f32 %v237, %v2993
    %v2995 = vand.u32 %v2994, 4294901760
    %2996 = vmatpush.msra.mxu0 %v2995
    %v2997 = vand.u32 %v231, 4294901760
    %v2998 = vsub.f32 %v231, %v2997
    %v2999 = vand.u32 %v2998, 4294901760
    %3000 = vmatpush.msra.mxu0 %v2999
    %v3001 = vand.u32 %v225, 4294901760
    %v3002 = vsub.f32 %v225, %v3001
    %v3003 = vand.u32 %v3002, 4294901760
    %3004 = vmatpush.msra.mxu0 %v3003
    %v3005 = vand.u32 %v219, 4294901760
    %v3006 = vsub.f32 %v219, %v3005
    %v3007 = vand.u32 %v3006, 4294901760
    %3008 = vmatpush.msra.mxu0 %v3007
    %v3009 = vand.u32 %v213, 4294901760
    %v3010 = vsub.f32 %v213, %v3009
    %v3011 = vand.u32 %v3010, 4294901760
    %3012 = vmatpush.msra.mxu0 %v3011
    %v3013 = vand.u32 %v207, 4294901760
    %v3014 = vsub.f32 %v207, %v3013
    %v3015 = vand.u32 %v3014, 4294901760
    %3016 = vmatpush.msra.mxu0 %v3015
    %v3017 = vand.u32 %v201, 4294901760
    %v3018 = vsub.f32 %v201, %v3017
    %v3019 = vand.u32 %v3018, 4294901760
    %3020 = vmatpush.msra.mxu0 %v3019
    %v3021 = vand.u32 %v195, 4294901760
    %v3022 = vsub.f32 %v195, %v3021
    %v3023 = vand.u32 %v3022, 4294901760
    %3024 = vmatpush.msra.mxu0 %v3023
    %v3025 = vand.u32 %v189, 4294901760
    %v3026 = vsub.f32 %v189, %v3025
    %v3027 = vand.u32 %v3026, 4294901760
    %3028 = vmatpush.msra.mxu0 %v3027
    %v3029 = vand.u32 %v183, 4294901760
    %v3030 = vsub.f32 %v183, %v3029
    %v3031 = vand.u32 %v3030, 4294901760
    %3032 = vmatpush.msra.mxu0 %v3031
    %v3033 = vand.u32 %v177, 4294901760
    %v3034 = vsub.f32 %v177, %v3033
    %v3035 = vand.u32 %v3034, 4294901760
    %3036 = vmatpush.msra.mxu0 %v3035
    %v3037 = vand.u32 %v171, 4294901760
    %v3038 = vsub.f32 %v171, %v3037
    %v3039 = vand.u32 %v3038, 4294901760
    %3040 = vmatpush.msra.mxu0 %v3039
    %v3041 = vand.u32 %v165, 4294901760
    %v3042 = vsub.f32 %v165, %v3041
    %v3043 = vand.u32 %v3042, 4294901760
    %3044 = vmatpush.msra.mxu0 %v3043
    %v3045 = vand.u32 %v159, 4294901760
    %v3046 = vsub.f32 %v159, %v3045
    %v3047 = vand.u32 %v3046, 4294901760
    %3048 = vmatpush.msra.mxu0 %v3047
    %v3049 = vand.u32 %v59, 4294901760
    %3050 = vmatmul.f32.gmra.mxu0 %v3049
    %v3051 = vpop.f32.mrf.mxu0
    %v3052 = vadd.f32 %v2983, %v3051
    %3053 = vdwg.mxu0
    %v3054 = vand.u32 %v249, 4294901760
    %3055 = vmatpush.msra.mxu0 %v3054
    %v3056 = vand.u32 %v243, 4294901760
    %3057 = vmatpush.msra.mxu0 %v3056
    %v3058 = vand.u32 %v237, 4294901760
    %3059 = vmatpush.msra.mxu0 %v3058
    %v3060 = vand.u32 %v231, 4294901760
    %3061 = vmatpush.msra.mxu0 %v3060
    %v3062 = vand.u32 %v225, 4294901760
    %3063 = vmatpush.msra.mxu0 %v3062
    %v3064 = vand.u32 %v219, 4294901760
    %3065 = vmatpush.msra.mxu0 %v3064
    %v3066 = vand.u32 %v213, 4294901760
    %3067 = vmatpush.msra.mxu0 %v3066
    %v3068 = vand.u32 %v207, 4294901760
    %3069 = vmatpush.msra.mxu0 %v3068
    %v3070 = vand.u32 %v201, 4294901760
    %3071 = vmatpush.msra.mxu0 %v3070
    %v3072 = vand.u32 %v195, 4294901760
    %3073 = vmatpush.msra.mxu0 %v3072
    %v3074 = vand.u32 %v189, 4294901760
    %3075 = vmatpush.msra.mxu0 %v3074
    %v3076 = vand.u32 %v183, 4294901760
    %3077 = vmatpush.msra.mxu0 %v3076
    %v3078 = vand.u32 %v177, 4294901760
    %3079 = vmatpush.msra.mxu0 %v3078
    %v3080 = vand.u32 %v171, 4294901760
    %3081 = vmatpush.msra.mxu0 %v3080
    %v3082 = vand.u32 %v165, 4294901760
    %3083 = vmatpush.msra.mxu0 %v3082
    %v3084 = vand.u32 %v159, 4294901760
    %3085 = vmatpush.msra.mxu0 %v3084
    %v3086 = vand.u32 %v59, 4294901760
    %3087 = vmatmul.f32.gmra.mxu0 %v3086
    %v3088 = vpop.f32.mrf.mxu0
    %v3089 = vadd.f32 %v3052, %v3088
    %3090 = vdwg.mxu0
    %v3091 = vand.u32 %v345, 4294901760
    %3092 = vmatpush.msra.mxu0 %v3091
    %v3093 = vand.u32 %v339, 4294901760
    %3094 = vmatpush.msra.mxu0 %v3093
    %v3095 = vand.u32 %v333, 4294901760
    %3096 = vmatpush.msra.mxu0 %v3095
    %v3097 = vand.u32 %v327, 4294901760
    %3098 = vmatpush.msra.mxu0 %v3097
    %v3099 = vand.u32 %v321, 4294901760
    %3100 = vmatpush.msra.mxu0 %v3099
    %v3101 = vand.u32 %v315, 4294901760
    %3102 = vmatpush.msra.mxu0 %v3101
    %v3103 = vand.u32 %v309, 4294901760
    %3104 = vmatpush.msra.mxu0 %v3103
    %v3105 = vand.u32 %v303, 4294901760
    %3106 = vmatpush.msra.mxu0 %v3105
    %v3107 = vand.u32 %v297, 4294901760
    %3108 = vmatpush.msra.mxu0 %v3107
    %v3109 = vand.u32 %v291, 4294901760
    %3110 = vmatpush.msra.mxu0 %v3109
    %v3111 = vand.u32 %v285, 4294901760
    %3112 = vmatpush.msra.mxu0 %v3111
    %v3113 = vand.u32 %v279, 4294901760
    %3114 = vmatpush.msra.mxu0 %v3113
    %v3115 = vand.u32 %v273, 4294901760
    %3116 = vmatpush.msra.mxu0 %v3115
    %v3117 = vand.u32 %v267, 4294901760
    %3118 = vmatpush.msra.mxu0 %v3117
    %v3119 = vand.u32 %v261, 4294901760
    %3120 = vmatpush.msra.mxu0 %v3119
    %v3121 = vand.u32 %v255, 4294901760
    %3122 = vmatpush.msra.mxu0 %v3121
    %v3123 = vand.u32 %v60, 4294901760
    %v3124 = vsub.f32 %v60, %v3123
    %v3125 = vand.u32 %v3124, 4294901760
    %v3126 = vsub.f32 %v3124, %v3125
    %v3127 = vand.u32 %v3126, 4294901760
    %3128 = vmatmul.f32.gmra.mxu0 %v3127
    %v3129 = vpop.f32.mrf.mxu0
    %v3130 = vadd.f32 %v3089, %v3129
    %3131 = vdwg.mxu0
    %v3132 = vand.u32 %v345, 4294901760
    %v3133 = vsub.f32 %v345, %v3132
    %v3134 = vand.u32 %v3133, 4294901760
    %v3135 = vsub.f32 %v3133, %v3134
    %v3136 = vand.u32 %v3135, 4294901760
    %3137 = vmatpush.msra.mxu0 %v3136
    %v3138 = vand.u32 %v339, 4294901760
    %v3139 = vsub.f32 %v339, %v3138
    %v3140 = vand.u32 %v3139, 4294901760
    %v3141 = vsub.f32 %v3139, %v3140
    %v3142 = vand.u32 %v3141, 4294901760
    %3143 = vmatpush.msra.mxu0 %v3142
    %v3144 = vand.u32 %v333, 4294901760
    %v3145 = vsub.f32 %v333, %v3144
    %v3146 = vand.u32 %v3145, 4294901760
    %v3147 = vsub.f32 %v3145, %v3146
    %v3148 = vand.u32 %v3147, 4294901760
    %3149 = vmatpush.msra.mxu0 %v3148
    %v3150 = vand.u32 %v327, 4294901760
    %v3151 = vsub.f32 %v327, %v3150
    %v3152 = vand.u32 %v3151, 4294901760
    %v3153 = vsub.f32 %v3151, %v3152
    %v3154 = vand.u32 %v3153, 4294901760
    %3155 = vmatpush.msra.mxu0 %v3154
    %v3156 = vand.u32 %v321, 4294901760
    %v3157 = vsub.f32 %v321, %v3156
    %v3158 = vand.u32 %v3157, 4294901760
    %v3159 = vsub.f32 %v3157, %v3158
    %v3160 = vand.u32 %v3159, 4294901760
    %3161 = vmatpush.msra.mxu0 %v3160
    %v3162 = vand.u32 %v315, 4294901760
    %v3163 = vsub.f32 %v315, %v3162
    %v3164 = vand.u32 %v3163, 4294901760
    %v3165 = vsub.f32 %v3163, %v3164
    %v3166 = vand.u32 %v3165, 4294901760
    %3167 = vmatpush.msra.mxu0 %v3166
    %v3168 = vand.u32 %v309, 4294901760
    %v3169 = vsub.f32 %v309, %v3168
    %v3170 = vand.u32 %v3169, 4294901760
    %v3171 = vsub.f32 %v3169, %v3170
    %v3172 = vand.u32 %v3171, 4294901760
    %3173 = vmatpush.msra.mxu0 %v3172
    %v3174 = vand.u32 %v303, 4294901760
    %v3175 = vsub.f32 %v303, %v3174
    %v3176 = vand.u32 %v3175, 4294901760
    %v3177 = vsub.f32 %v3175, %v3176
    %v3178 = vand.u32 %v3177, 4294901760
    %3179 = vmatpush.msra.mxu0 %v3178
    %v3180 = vand.u32 %v297, 4294901760
    %v3181 = vsub.f32 %v297, %v3180
    %v3182 = vand.u32 %v3181, 4294901760
    %v3183 = vsub.f32 %v3181, %v3182
    %v3184 = vand.u32 %v3183, 4294901760
    %3185 = vmatpush.msra.mxu0 %v3184
    %v3186 = vand.u32 %v291, 4294901760
    %v3187 = vsub.f32 %v291, %v3186
    %v3188 = vand.u32 %v3187, 4294901760
    %v3189 = vsub.f32 %v3187, %v3188
    %v3190 = vand.u32 %v3189, 4294901760
    %3191 = vmatpush.msra.mxu0 %v3190
    %v3192 = vand.u32 %v285, 4294901760
    %v3193 = vsub.f32 %v285, %v3192
    %v3194 = vand.u32 %v3193, 4294901760
    %v3195 = vsub.f32 %v3193, %v3194
    %v3196 = vand.u32 %v3195, 4294901760
    %3197 = vmatpush.msra.mxu0 %v3196
    %v3198 = vand.u32 %v279, 4294901760
    %v3199 = vsub.f32 %v279, %v3198
    %v3200 = vand.u32 %v3199, 4294901760
    %v3201 = vsub.f32 %v3199, %v3200
    %v3202 = vand.u32 %v3201, 4294901760
    %3203 = vmatpush.msra.mxu0 %v3202
    %v3204 = vand.u32 %v273, 4294901760
    %v3205 = vsub.f32 %v273, %v3204
    %v3206 = vand.u32 %v3205, 4294901760
    %v3207 = vsub.f32 %v3205, %v3206
    %v3208 = vand.u32 %v3207, 4294901760
    %3209 = vmatpush.msra.mxu0 %v3208
    %v3210 = vand.u32 %v267, 4294901760
    %v3211 = vsub.f32 %v267, %v3210
    %v3212 = vand.u32 %v3211, 4294901760
    %v3213 = vsub.f32 %v3211, %v3212
    %v3214 = vand.u32 %v3213, 4294901760
    %3215 = vmatpush.msra.mxu0 %v3214
    %v3216 = vand.u32 %v261, 4294901760
    %v3217 = vsub.f32 %v261, %v3216
    %v3218 = vand.u32 %v3217, 4294901760
    %v3219 = vsub.f32 %v3217, %v3218
    %v3220 = vand.u32 %v3219, 4294901760
    %3221 = vmatpush.msra.mxu0 %v3220
    %v3222 = vand.u32 %v255, 4294901760
    %v3223 = vsub.f32 %v255, %v3222
    %v3224 = vand.u32 %v3223, 4294901760
    %v3225 = vsub.f32 %v3223, %v3224
    %v3226 = vand.u32 %v3225, 4294901760
    %3227 = vmatpush.msra.mxu0 %v3226
    %v3228 = vand.u32 %v60, 4294901760
    %3229 = vmatmul.f32.gmra.mxu0 %v3228
    %v3230 = vpop.f32.mrf.mxu0
    %v3231 = vadd.f32 %v3130, %v3230
    %3232 = vdwg.mxu0
    %v3233 = vand.u32 %v345, 4294901760
    %v3234 = vsub.f32 %v345, %v3233
    %3235 = vmatpush.msra.mxu0 %v3234
    %v3236 = vand.u32 %v339, 4294901760
    %v3237 = vsub.f32 %v339, %v3236
    %3238 = vmatpush.msra.mxu0 %v3237
    %v3239 = vand.u32 %v333, 4294901760
    %v3240 = vsub.f32 %v333, %v3239
    %3241 = vmatpush.msra.mxu0 %v3240
    %v3242 = vand.u32 %v327, 4294901760
    %v3243 = vsub.f32 %v327, %v3242
    %3244 = vmatpush.msra.mxu0 %v3243
    %v3245 = vand.u32 %v321, 4294901760
    %v3246 = vsub.f32 %v321, %v3245
    %3247 = vmatpush.msra.mxu0 %v3246
    %v3248 = vand.u32 %v315, 4294901760
    %v3249 = vsub.f32 %v315, %v3248
    %3250 = vmatpush.msra.mxu0 %v3249
    %v3251 = vand.u32 %v309, 4294901760
    %v3252 = vsub.f32 %v309, %v3251
    %3253 = vmatpush.msra.mxu0 %v3252
    %v3254 = vand.u32 %v303, 4294901760
    %v3255 = vsub.f32 %v303, %v3254
    %3256 = vmatpush.msra.mxu0 %v3255
    %v3257 = vand.u32 %v297, 4294901760
    %v3258 = vsub.f32 %v297, %v3257
    %3259 = vmatpush.msra.mxu0 %v3258
    %v3260 = vand.u32 %v291, 4294901760
    %v3261 = vsub.f32 %v291, %v3260
    %3262 = vmatpush.msra.mxu0 %v3261
    %v3263 = vand.u32 %v285, 4294901760
    %v3264 = vsub.f32 %v285, %v3263
    %3265 = vmatpush.msra.mxu0 %v3264
    %v3266 = vand.u32 %v279, 4294901760
    %v3267 = vsub.f32 %v279, %v3266
    %3268 = vmatpush.msra.mxu0 %v3267
    %v3269 = vand.u32 %v273, 4294901760
    %v3270 = vsub.f32 %v273, %v3269
    %3271 = vmatpush.msra.mxu0 %v3270
    %v3272 = vand.u32 %v267, 4294901760
    %v3273 = vsub.f32 %v267, %v3272
    %3274 = vmatpush.msra.mxu0 %v3273
    %v3275 = vand.u32 %v261, 4294901760
    %v3276 = vsub.f32 %v261, %v3275
    %3277 = vmatpush.msra.mxu0 %v3276
    %v3278 = vand.u32 %v255, 4294901760
    %v3279 = vsub.f32 %v255, %v3278
    %3280 = vmatpush.msra.mxu0 %v3279
    %v3281 = vand.u32 %v60, 4294901760
    %v3282 = vsub.f32 %v60, %v3281
    %3283 = vmatmul.f32.gmra.mxu0 %v3282
    %v3284 = vpop.f32.mrf.mxu0
    %v3285 = vadd.f32 %v3231, %v3284
    %3286 = vdwg.mxu0
    %v3287 = vand.u32 %v345, 4294901760
    %3288 = vmatpush.msra.mxu0 %v3287
    %v3289 = vand.u32 %v339, 4294901760
    %3290 = vmatpush.msra.mxu0 %v3289
    %v3291 = vand.u32 %v333, 4294901760
    %3292 = vmatpush.msra.mxu0 %v3291
    %v3293 = vand.u32 %v327, 4294901760
    %3294 = vmatpush.msra.mxu0 %v3293
    %v3295 = vand.u32 %v321, 4294901760
    %3296 = vmatpush.msra.mxu0 %v3295
    %v3297 = vand.u32 %v315, 4294901760
    %3298 = vmatpush.msra.mxu0 %v3297
    %v3299 = vand.u32 %v309, 4294901760
    %3300 = vmatpush.msra.mxu0 %v3299
    %v3301 = vand.u32 %v303, 4294901760
    %3302 = vmatpush.msra.mxu0 %v3301
    %v3303 = vand.u32 %v297, 4294901760
    %3304 = vmatpush.msra.mxu0 %v3303
    %v3305 = vand.u32 %v291, 4294901760
    %3306 = vmatpush.msra.mxu0 %v3305
    %v3307 = vand.u32 %v285, 4294901760
    %3308 = vmatpush.msra.mxu0 %v3307
    %v3309 = vand.u32 %v279, 4294901760
    %3310 = vmatpush.msra.mxu0 %v3309
    %v3311 = vand.u32 %v273, 4294901760
    %3312 = vmatpush.msra.mxu0 %v3311
    %v3313 = vand.u32 %v267, 4294901760
    %3314 = vmatpush.msra.mxu0 %v3313
    %v3315 = vand.u32 %v261, 4294901760
    %3316 = vmatpush.msra.mxu0 %v3315
    %v3317 = vand.u32 %v255, 4294901760
    %3318 = vmatpush.msra.mxu0 %v3317
    %v3319 = vand.u32 %v60, 4294901760
    %v3320 = vsub.f32 %v60, %v3319
    %v3321 = vand.u32 %v3320, 4294901760
    %3322 = vmatmul.f32.gmra.mxu0 %v3321
    %v3323 = vpop.f32.mrf.mxu0
    %v3324 = vadd.f32 %v3285, %v3323
    %3325 = vdwg.mxu0
    %v3326 = vand.u32 %v345, 4294901760
    %v3327 = vsub.f32 %v345, %v3326
    %v3328 = vand.u32 %v3327, 4294901760
    %3329 = vmatpush.msra.mxu0 %v3328
    %v3330 = vand.u32 %v339, 4294901760
    %v3331 = vsub.f32 %v339, %v3330
    %v3332 = vand.u32 %v3331, 4294901760
    %3333 = vmatpush.msra.mxu0 %v3332
    %v3334 = vand.u32 %v333, 4294901760
    %v3335 = vsub.f32 %v333, %v3334
    %v3336 = vand.u32 %v3335, 4294901760
    %3337 = vmatpush.msra.mxu0 %v3336
    %v3338 = vand.u32 %v327, 4294901760
    %v3339 = vsub.f32 %v327, %v3338
    %v3340 = vand.u32 %v3339, 4294901760
    %3341 = vmatpush.msra.mxu0 %v3340
    %v3342 = vand.u32 %v321, 4294901760
    %v3343 = vsub.f32 %v321, %v3342
    %v3344 = vand.u32 %v3343, 4294901760
    %3345 = vmatpush.msra.mxu0 %v3344
    %v3346 = vand.u32 %v315, 4294901760
    %v3347 = vsub.f32 %v315, %v3346
    %v3348 = vand.u32 %v3347, 4294901760
    %3349 = vmatpush.msra.mxu0 %v3348
    %v3350 = vand.u32 %v309, 4294901760
    %v3351 = vsub.f32 %v309, %v3350
    %v3352 = vand.u32 %v3351, 4294901760
    %3353 = vmatpush.msra.mxu0 %v3352
    %v3354 = vand.u32 %v303, 4294901760
    %v3355 = vsub.f32 %v303, %v3354
    %v3356 = vand.u32 %v3355, 4294901760
    %3357 = vmatpush.msra.mxu0 %v3356
    %v3358 = vand.u32 %v297, 4294901760
    %v3359 = vsub.f32 %v297, %v3358
    %v3360 = vand.u32 %v3359, 4294901760
    %3361 = vmatpush.msra.mxu0 %v3360
    %v3362 = vand.u32 %v291, 4294901760
    %v3363 = vsub.f32 %v291, %v3362
    %v3364 = vand.u32 %v3363, 4294901760
    %3365 = vmatpush.msra.mxu0 %v3364
    %v3366 = vand.u32 %v285, 4294901760
    %v3367 = vsub.f32 %v285, %v3366
    %v3368 = vand.u32 %v3367, 4294901760
    %3369 = vmatpush.msra.mxu0 %v3368
    %v3370 = vand.u32 %v279, 4294901760
    %v3371 = vsub.f32 %v279, %v3370
    %v3372 = vand.u32 %v3371, 4294901760
    %3373 = vmatpush.msra.mxu0 %v3372
    %v3374 = vand.u32 %v273, 4294901760
    %v3375 = vsub.f32 %v273, %v3374
    %v3376 = vand.u32 %v3375, 4294901760
    %3377 = vmatpush.msra.mxu0 %v3376
    %v3378 = vand.u32 %v267, 4294901760
    %v3379 = vsub.f32 %v267, %v3378
    %v3380 = vand.u32 %v3379, 4294901760
    %3381 = vmatpush.msra.mxu0 %v3380
    %v3382 = vand.u32 %v261, 4294901760
    %v3383 = vsub.f32 %v261, %v3382
    %v3384 = vand.u32 %v3383, 4294901760
    %3385 = vmatpush.msra.mxu0 %v3384
    %v3386 = vand.u32 %v255, 4294901760
    %v3387 = vsub.f32 %v255, %v3386
    %v3388 = vand.u32 %v3387, 4294901760
    %3389 = vmatpush.msra.mxu0 %v3388
    %v3390 = vand.u32 %v60, 4294901760
    %3391 = vmatmul.f32.gmra.mxu0 %v3390
    %v3392 = vpop.f32.mrf.mxu0
    %v3393 = vadd.f32 %v3324, %v3392
    %3394 = vdwg.mxu0
    %v3395 = vand.u32 %v345, 4294901760
    %3396 = vmatpush.msra.mxu0 %v3395
    %v3397 = vand.u32 %v339, 4294901760
    %3398 = vmatpush.msra.mxu0 %v3397
    %v3399 = vand.u32 %v333, 4294901760
    %3400 = vmatpush.msra.mxu0 %v3399
    %v3401 = vand.u32 %v327, 4294901760
    %3402 = vmatpush.msra.mxu0 %v3401
    %v3403 = vand.u32 %v321, 4294901760
    %3404 = vmatpush.msra.mxu0 %v3403
    %v3405 = vand.u32 %v315, 4294901760
    %3406 = vmatpush.msra.mxu0 %v3405
    %v3407 = vand.u32 %v309, 4294901760
    %3408 = vmatpush.msra.mxu0 %v3407
    %v3409 = vand.u32 %v303, 4294901760
    %3410 = vmatpush.msra.mxu0 %v3409
    %v3411 = vand.u32 %v297, 4294901760
    %3412 = vmatpush.msra.mxu0 %v3411
    %v3413 = vand.u32 %v291, 4294901760
    %3414 = vmatpush.msra.mxu0 %v3413
    %v3415 = vand.u32 %v285, 4294901760
    %3416 = vmatpush.msra.mxu0 %v3415
    %v3417 = vand.u32 %v279, 4294901760
    %3418 = vmatpush.msra.mxu0 %v3417
    %v3419 = vand.u32 %v273, 4294901760
    %3420 = vmatpush.msra.mxu0 %v3419
    %v3421 = vand.u32 %v267, 4294901760
    %3422 = vmatpush.msra.mxu0 %v3421
    %v3423 = vand.u32 %v261, 4294901760
    %3424 = vmatpush.msra.mxu0 %v3423
    %v3425 = vand.u32 %v255, 4294901760
    %3426 = vmatpush.msra.mxu0 %v3425
    %v3427 = vand.u32 %v60, 4294901760
    %3428 = vmatmul.f32.gmra.mxu0 %v3427
    %v3429 = vpop.f32.mrf.mxu0
    %v3430 = vadd.f32 %v3393, %v3429
    %3431 = vdwg.mxu0
    %v3432 = vand.u32 %v154, 4294901760
    %3433 = vmatpush.msra.mxu0 %v3432
    %v3434 = vand.u32 %v148, 4294901760
    %3435 = vmatpush.msra.mxu0 %v3434
    %v3436 = vand.u32 %v142, 4294901760
    %3437 = vmatpush.msra.mxu0 %v3436
    %v3438 = vand.u32 %v136, 4294901760
    %3439 = vmatpush.msra.mxu0 %v3438
    %v3440 = vand.u32 %v130, 4294901760
    %3441 = vmatpush.msra.mxu0 %v3440
    %v3442 = vand.u32 %v124, 4294901760
    %3443 = vmatpush.msra.mxu0 %v3442
    %v3444 = vand.u32 %v118, 4294901760
    %3445 = vmatpush.msra.mxu0 %v3444
    %v3446 = vand.u32 %v112, 4294901760
    %3447 = vmatpush.msra.mxu0 %v3446
    %v3448 = vand.u32 %v106, 4294901760
    %3449 = vmatpush.msra.mxu0 %v3448
    %v3450 = vand.u32 %v100, 4294901760
    %3451 = vmatpush.msra.mxu0 %v3450
    %v3452 = vand.u32 %v94, 4294901760
    %3453 = vmatpush.msra.mxu0 %v3452
    %v3454 = vand.u32 %v88, 4294901760
    %3455 = vmatpush.msra.mxu0 %v3454
    %v3456 = vand.u32 %v82, 4294901760
    %3457 = vmatpush.msra.mxu0 %v3456
    %v3458 = vand.u32 %v76, 4294901760
    %3459 = vmatpush.msra.mxu0 %v3458
    %v3460 = vand.u32 %v70, 4294901760
    %3461 = vmatpush.msra.mxu0 %v3460
    %v3462 = vand.u32 %v64, 4294901760
    %3463 = vmatpush.msra.mxu0 %v3462
    %v3464 = vand.u32 %v58, 4294901760
    %v3465 = vsub.f32 %v58, %v3464
    %v3466 = vand.u32 %v3465, 4294901760
    %v3467 = vsub.f32 %v3465, %v3466
    %v3468 = vand.u32 %v3467, 4294901760
    %3469 = vmatmul.f32.gmra.mxu0 %v3468
    %v3470 = vpop.f32.mrf.mxu0
    %v3471 = vadd.f32 %v354, %v3470
    %3472 = vdwg.mxu0
    %v3473 = vand.u32 %v154, 4294901760
    %v3474 = vsub.f32 %v154, %v3473
    %v3475 = vand.u32 %v3474, 4294901760
    %v3476 = vsub.f32 %v3474, %v3475
    %v3477 = vand.u32 %v3476, 4294901760
    %3478 = vmatpush.msra.mxu0 %v3477
    %v3479 = vand.u32 %v148, 4294901760
    %v3480 = vsub.f32 %v148, %v3479
    %v3481 = vand.u32 %v3480, 4294901760
    %v3482 = vsub.f32 %v3480, %v3481
    %v3483 = vand.u32 %v3482, 4294901760
    %3484 = vmatpush.msra.mxu0 %v3483
    %v3485 = vand.u32 %v142, 4294901760
    %v3486 = vsub.f32 %v142, %v3485
    %v3487 = vand.u32 %v3486, 4294901760
    %v3488 = vsub.f32 %v3486, %v3487
    %v3489 = vand.u32 %v3488, 4294901760
    %3490 = vmatpush.msra.mxu0 %v3489
    %v3491 = vand.u32 %v136, 4294901760
    %v3492 = vsub.f32 %v136, %v3491
    %v3493 = vand.u32 %v3492, 4294901760
    %v3494 = vsub.f32 %v3492, %v3493
    %v3495 = vand.u32 %v3494, 4294901760
    %3496 = vmatpush.msra.mxu0 %v3495
    %v3497 = vand.u32 %v130, 4294901760
    %v3498 = vsub.f32 %v130, %v3497
    %v3499 = vand.u32 %v3498, 4294901760
    %v3500 = vsub.f32 %v3498, %v3499
    %v3501 = vand.u32 %v3500, 4294901760
    %3502 = vmatpush.msra.mxu0 %v3501
    %v3503 = vand.u32 %v124, 4294901760
    %v3504 = vsub.f32 %v124, %v3503
    %v3505 = vand.u32 %v3504, 4294901760
    %v3506 = vsub.f32 %v3504, %v3505
    %v3507 = vand.u32 %v3506, 4294901760
    %3508 = vmatpush.msra.mxu0 %v3507
    %v3509 = vand.u32 %v118, 4294901760
    %v3510 = vsub.f32 %v118, %v3509
    %v3511 = vand.u32 %v3510, 4294901760
    %v3512 = vsub.f32 %v3510, %v3511
    %v3513 = vand.u32 %v3512, 4294901760
    %3514 = vmatpush.msra.mxu0 %v3513
    %v3515 = vand.u32 %v112, 4294901760
    %v3516 = vsub.f32 %v112, %v3515
    %v3517 = vand.u32 %v3516, 4294901760
    %v3518 = vsub.f32 %v3516, %v3517
    %v3519 = vand.u32 %v3518, 4294901760
    %3520 = vmatpush.msra.mxu0 %v3519
    %v3521 = vand.u32 %v106, 4294901760
    %v3522 = vsub.f32 %v106, %v3521
    %v3523 = vand.u32 %v3522, 4294901760
    %v3524 = vsub.f32 %v3522, %v3523
    %v3525 = vand.u32 %v3524, 4294901760
    %3526 = vmatpush.msra.mxu0 %v3525
    %v3527 = vand.u32 %v100, 4294901760
    %v3528 = vsub.f32 %v100, %v3527
    %v3529 = vand.u32 %v3528, 4294901760
    %v3530 = vsub.f32 %v3528, %v3529
    %v3531 = vand.u32 %v3530, 4294901760
    %3532 = vmatpush.msra.mxu0 %v3531
    %v3533 = vand.u32 %v94, 4294901760
    %v3534 = vsub.f32 %v94, %v3533
    %v3535 = vand.u32 %v3534, 4294901760
    %v3536 = vsub.f32 %v3534, %v3535
    %v3537 = vand.u32 %v3536, 4294901760
    %3538 = vmatpush.msra.mxu0 %v3537
    %v3539 = vand.u32 %v88, 4294901760
    %v3540 = vsub.f32 %v88, %v3539
    %v3541 = vand.u32 %v3540, 4294901760
    %v3542 = vsub.f32 %v3540, %v3541
    %v3543 = vand.u32 %v3542, 4294901760
    %3544 = vmatpush.msra.mxu0 %v3543
    %v3545 = vand.u32 %v82, 4294901760
    %v3546 = vsub.f32 %v82, %v3545
    %v3547 = vand.u32 %v3546, 4294901760
    %v3548 = vsub.f32 %v3546, %v3547
    %v3549 = vand.u32 %v3548, 4294901760
    %3550 = vmatpush.msra.mxu0 %v3549
    %v3551 = vand.u32 %v76, 4294901760
    %v3552 = vsub.f32 %v76, %v3551
    %v3553 = vand.u32 %v3552, 4294901760
    %v3554 = vsub.f32 %v3552, %v3553
    %v3555 = vand.u32 %v3554, 4294901760
    %3556 = vmatpush.msra.mxu0 %v3555
    %v3557 = vand.u32 %v70, 4294901760
    %v3558 = vsub.f32 %v70, %v3557
    %v3559 = vand.u32 %v3558, 4294901760
    %v3560 = vsub.f32 %v3558, %v3559
    %v3561 = vand.u32 %v3560, 4294901760
    %3562 = vmatpush.msra.mxu0 %v3561
    %v3563 = vand.u32 %v64, 4294901760
    %v3564 = vsub.f32 %v64, %v3563
    %v3565 = vand.u32 %v3564, 4294901760
    %v3566 = vsub.f32 %v3564, %v3565
    %v3567 = vand.u32 %v3566, 4294901760
    %3568 = vmatpush.msra.mxu0 %v3567
    %v3569 = vand.u32 %v58, 4294901760
    %3570 = vmatmul.f32.gmra.mxu0 %v3569
    %v3571 = vpop.f32.mrf.mxu0
    %v3572 = vadd.f32 %v3471, %v3571
    %3573 = vdwg.mxu0
    %v3574 = vand.u32 %v154, 4294901760
    %v3575 = vsub.f32 %v154, %v3574
    %3576 = vmatpush.msra.mxu0 %v3575
    %v3577 = vand.u32 %v148, 4294901760
    %v3578 = vsub.f32 %v148, %v3577
    %3579 = vmatpush.msra.mxu0 %v3578
    %v3580 = vand.u32 %v142, 4294901760
    %v3581 = vsub.f32 %v142, %v3580
    %3582 = vmatpush.msra.mxu0 %v3581
    %v3583 = vand.u32 %v136, 4294901760
    %v3584 = vsub.f32 %v136, %v3583
    %3585 = vmatpush.msra.mxu0 %v3584
    %v3586 = vand.u32 %v130, 4294901760
    %v3587 = vsub.f32 %v130, %v3586
    %3588 = vmatpush.msra.mxu0 %v3587
    %v3589 = vand.u32 %v124, 4294901760
    %v3590 = vsub.f32 %v124, %v3589
    %3591 = vmatpush.msra.mxu0 %v3590
    %v3592 = vand.u32 %v118, 4294901760
    %v3593 = vsub.f32 %v118, %v3592
    %3594 = vmatpush.msra.mxu0 %v3593
    %v3595 = vand.u32 %v112, 4294901760
    %v3596 = vsub.f32 %v112, %v3595
    %3597 = vmatpush.msra.mxu0 %v3596
    %v3598 = vand.u32 %v106, 4294901760
    %v3599 = vsub.f32 %v106, %v3598
    %3600 = vmatpush.msra.mxu0 %v3599
    %v3601 = vand.u32 %v100, 4294901760
    %v3602 = vsub.f32 %v100, %v3601
    %3603 = vmatpush.msra.mxu0 %v3602
    %v3604 = vand.u32 %v94, 4294901760
    %v3605 = vsub.f32 %v94, %v3604
    %3606 = vmatpush.msra.mxu0 %v3605
    %v3607 = vand.u32 %v88, 4294901760
    %v3608 = vsub.f32 %v88, %v3607
    %3609 = vmatpush.msra.mxu0 %v3608
    %v3610 = vand.u32 %v82, 4294901760
    %v3611 = vsub.f32 %v82, %v3610
    %3612 = vmatpush.msra.mxu0 %v3611
    %v3613 = vand.u32 %v76, 4294901760
    %v3614 = vsub.f32 %v76, %v3613
    %3615 = vmatpush.msra.mxu0 %v3614
    %v3616 = vand.u32 %v70, 4294901760
    %v3617 = vsub.f32 %v70, %v3616
    %3618 = vmatpush.msra.mxu0 %v3617
    %v3619 = vand.u32 %v64, 4294901760
    %v3620 = vsub.f32 %v64, %v3619
    %3621 = vmatpush.msra.mxu0 %v3620
    %v3622 = vand.u32 %v58, 4294901760
    %v3623 = vsub.f32 %v58, %v3622
    %3624 = vmatmul.f32.gmra.mxu0 %v3623
    %v3625 = vpop.f32.mrf.mxu0
    %v3626 = vadd.f32 %v3572, %v3625
    %3627 = vdwg.mxu0
    %v3628 = vand.u32 %v154, 4294901760
    %3629 = vmatpush.msra.mxu0 %v3628
    %v3630 = vand.u32 %v148, 4294901760
    %3631 = vmatpush.msra.mxu0 %v3630
    %v3632 = vand.u32 %v142, 4294901760
    %3633 = vmatpush.msra.mxu0 %v3632
    %v3634 = vand.u32 %v136, 4294901760
    %3635 = vmatpush.msra.mxu0 %v3634
    %v3636 = vand.u32 %v130, 4294901760
    %3637 = vmatpush.msra.mxu0 %v3636
    %v3638 = vand.u32 %v124, 4294901760
    %3639 = vmatpush.msra.mxu0 %v3638
    %v3640 = vand.u32 %v118, 4294901760
    %3641 = vmatpush.msra.mxu0 %v3640
    %v3642 = vand.u32 %v112, 4294901760
    %3643 = vmatpush.msra.mxu0 %v3642
    %v3644 = vand.u32 %v106, 4294901760
    %3645 = vmatpush.msra.mxu0 %v3644
    %v3646 = vand.u32 %v100, 4294901760
    %3647 = vmatpush.msra.mxu0 %v3646
    %v3648 = vand.u32 %v94, 4294901760
    %3649 = vmatpush.msra.mxu0 %v3648
    %v3650 = vand.u32 %v88, 4294901760
    %3651 = vmatpush.msra.mxu0 %v3650
    %v3652 = vand.u32 %v82, 4294901760
    %3653 = vmatpush.msra.mxu0 %v3652
    %v3654 = vand.u32 %v76, 4294901760
    %3655 = vmatpush.msra.mxu0 %v3654
    %v3656 = vand.u32 %v70, 4294901760
    %3657 = vmatpush.msra.mxu0 %v3656
    %v3658 = vand.u32 %v64, 4294901760
    %3659 = vmatpush.msra.mxu0 %v3658
    %v3660 = vand.u32 %v58, 4294901760
    %v3661 = vsub.f32 %v58, %v3660
    %v3662 = vand.u32 %v3661, 4294901760
    %3663 = vmatmul.f32.gmra.mxu0 %v3662
    %v3664 = vpop.f32.mrf.mxu0
    %v3665 = vadd.f32 %v3626, %v3664
    %3666 = vdwg.mxu0
    %v3667 = vand.u32 %v154, 4294901760
    %v3668 = vsub.f32 %v154, %v3667
    %v3669 = vand.u32 %v3668, 4294901760
    %3670 = vmatpush.msra.mxu0 %v3669
    %v3671 = vand.u32 %v148, 4294901760
    %v3672 = vsub.f32 %v148, %v3671
    %v3673 = vand.u32 %v3672, 4294901760
    %3674 = vmatpush.msra.mxu0 %v3673
    %v3675 = vand.u32 %v142, 4294901760
    %v3676 = vsub.f32 %v142, %v3675
    %v3677 = vand.u32 %v3676, 4294901760
    %3678 = vmatpush.msra.mxu0 %v3677
    %v3679 = vand.u32 %v136, 4294901760
    %v3680 = vsub.f32 %v136, %v3679
    %v3681 = vand.u32 %v3680, 4294901760
    %3682 = vmatpush.msra.mxu0 %v3681
    %v3683 = vand.u32 %v130, 4294901760
    %v3684 = vsub.f32 %v130, %v3683
    %v3685 = vand.u32 %v3684, 4294901760
    %3686 = vmatpush.msra.mxu0 %v3685
    %v3687 = vand.u32 %v124, 4294901760
    %v3688 = vsub.f32 %v124, %v3687
    %v3689 = vand.u32 %v3688, 4294901760
    %3690 = vmatpush.msra.mxu0 %v3689
    %v3691 = vand.u32 %v118, 4294901760
    %v3692 = vsub.f32 %v118, %v3691
    %v3693 = vand.u32 %v3692, 4294901760
    %3694 = vmatpush.msra.mxu0 %v3693
    %v3695 = vand.u32 %v112, 4294901760
    %v3696 = vsub.f32 %v112, %v3695
    %v3697 = vand.u32 %v3696, 4294901760
    %3698 = vmatpush.msra.mxu0 %v3697
    %v3699 = vand.u32 %v106, 4294901760
    %v3700 = vsub.f32 %v106, %v3699
    %v3701 = vand.u32 %v3700, 4294901760
    %3702 = vmatpush.msra.mxu0 %v3701
    %v3703 = vand.u32 %v100, 4294901760
    %v3704 = vsub.f32 %v100, %v3703
    %v3705 = vand.u32 %v3704, 4294901760
    %3706 = vmatpush.msra.mxu0 %v3705
    %v3707 = vand.u32 %v94, 4294901760
    %v3708 = vsub.f32 %v94, %v3707
    %v3709 = vand.u32 %v3708, 4294901760
    %3710 = vmatpush.msra.mxu0 %v3709
    %v3711 = vand.u32 %v88, 4294901760
    %v3712 = vsub.f32 %v88, %v3711
    %v3713 = vand.u32 %v3712, 4294901760
    %3714 = vmatpush.msra.mxu0 %v3713
    %v3715 = vand.u32 %v82, 4294901760
    %v3716 = vsub.f32 %v82, %v3715
    %v3717 = vand.u32 %v3716, 4294901760
    %3718 = vmatpush.msra.mxu0 %v3717
    %v3719 = vand.u32 %v76, 4294901760
    %v3720 = vsub.f32 %v76, %v3719
    %v3721 = vand.u32 %v3720, 4294901760
    %3722 = vmatpush.msra.mxu0 %v3721
    %v3723 = vand.u32 %v70, 4294901760
    %v3724 = vsub.f32 %v70, %v3723
    %v3725 = vand.u32 %v3724, 4294901760
    %3726 = vmatpush.msra.mxu0 %v3725
    %v3727 = vand.u32 %v64, 4294901760
    %v3728 = vsub.f32 %v64, %v3727
    %v3729 = vand.u32 %v3728, 4294901760
    %3730 = vmatpush.msra.mxu0 %v3729
    %v3731 = vand.u32 %v58, 4294901760
    %3732 = vmatmul.f32.gmra.mxu0 %v3731
    %v3733 = vpop.f32.mrf.mxu0
    %v3734 = vadd.f32 %v3665, %v3733
    %3735 = vdwg.mxu0
    %v3736 = vand.u32 %v154, 4294901760
    %3737 = vmatpush.msra.mxu0 %v3736
    %v3738 = vand.u32 %v148, 4294901760
    %3739 = vmatpush.msra.mxu0 %v3738
    %v3740 = vand.u32 %v142, 4294901760
    %3741 = vmatpush.msra.mxu0 %v3740
    %v3742 = vand.u32 %v136, 4294901760
    %3743 = vmatpush.msra.mxu0 %v3742
    %v3744 = vand.u32 %v130, 4294901760
    %3745 = vmatpush.msra.mxu0 %v3744
    %v3746 = vand.u32 %v124, 4294901760
    %3747 = vmatpush.msra.mxu0 %v3746
    %v3748 = vand.u32 %v118, 4294901760
    %3749 = vmatpush.msra.mxu0 %v3748
    %v3750 = vand.u32 %v112, 4294901760
    %3751 = vmatpush.msra.mxu0 %v3750
    %v3752 = vand.u32 %v106, 4294901760
    %3753 = vmatpush.msra.mxu0 %v3752
    %v3754 = vand.u32 %v100, 4294901760
    %3755 = vmatpush.msra.mxu0 %v3754
    %v3756 = vand.u32 %v94, 4294901760
    %3757 = vmatpush.msra.mxu0 %v3756
    %v3758 = vand.u32 %v88, 4294901760
    %3759 = vmatpush.msra.mxu0 %v3758
    %v3760 = vand.u32 %v82, 4294901760
    %3761 = vmatpush.msra.mxu0 %v3760
    %v3762 = vand.u32 %v76, 4294901760
    %3763 = vmatpush.msra.mxu0 %v3762
    %v3764 = vand.u32 %v70, 4294901760
    %3765 = vmatpush.msra.mxu0 %v3764
    %v3766 = vand.u32 %v64, 4294901760
    %3767 = vmatpush.msra.mxu0 %v3766
    %v3768 = vand.u32 %v58, 4294901760
    %3769 = vmatmul.f32.gmra.mxu0 %v3768
    %v3770 = vpop.f32.mrf.mxu0
    %v3771 = vadd.f32 %v3734, %v3770
    %3772 = vdwg.mxu0
    %v3773 = vand.u32 %v250, 4294901760
    %3774 = vmatpush.msra.mxu0 %v3773
    %v3775 = vand.u32 %v244, 4294901760
    %3776 = vmatpush.msra.mxu0 %v3775
    %v3777 = vand.u32 %v238, 4294901760
    %3778 = vmatpush.msra.mxu0 %v3777
    %v3779 = vand.u32 %v232, 4294901760
    %3780 = vmatpush.msra.mxu0 %v3779
    %v3781 = vand.u32 %v226, 4294901760
    %3782 = vmatpush.msra.mxu0 %v3781
    %v3783 = vand.u32 %v220, 4294901760
    %3784 = vmatpush.msra.mxu0 %v3783
    %v3785 = vand.u32 %v214, 4294901760
    %3786 = vmatpush.msra.mxu0 %v3785
    %v3787 = vand.u32 %v208, 4294901760
    %3788 = vmatpush.msra.mxu0 %v3787
    %v3789 = vand.u32 %v202, 4294901760
    %3790 = vmatpush.msra.mxu0 %v3789
    %v3791 = vand.u32 %v196, 4294901760
    %3792 = vmatpush.msra.mxu0 %v3791
    %v3793 = vand.u32 %v190, 4294901760
    %3794 = vmatpush.msra.mxu0 %v3793
    %v3795 = vand.u32 %v184, 4294901760
    %3796 = vmatpush.msra.mxu0 %v3795
    %v3797 = vand.u32 %v178, 4294901760
    %3798 = vmatpush.msra.mxu0 %v3797
    %v3799 = vand.u32 %v172, 4294901760
    %3800 = vmatpush.msra.mxu0 %v3799
    %v3801 = vand.u32 %v166, 4294901760
    %3802 = vmatpush.msra.mxu0 %v3801
    %v3803 = vand.u32 %v160, 4294901760
    %3804 = vmatpush.msra.mxu0 %v3803
    %v3805 = vand.u32 %v59, 4294901760
    %v3806 = vsub.f32 %v59, %v3805
    %v3807 = vand.u32 %v3806, 4294901760
    %v3808 = vsub.f32 %v3806, %v3807
    %v3809 = vand.u32 %v3808, 4294901760
    %3810 = vmatmul.f32.gmra.mxu0 %v3809
    %v3811 = vpop.f32.mrf.mxu0
    %v3812 = vadd.f32 %v3771, %v3811
    %3813 = vdwg.mxu0
    %v3814 = vand.u32 %v250, 4294901760
    %v3815 = vsub.f32 %v250, %v3814
    %v3816 = vand.u32 %v3815, 4294901760
    %v3817 = vsub.f32 %v3815, %v3816
    %v3818 = vand.u32 %v3817, 4294901760
    %3819 = vmatpush.msra.mxu0 %v3818
    %v3820 = vand.u32 %v244, 4294901760
    %v3821 = vsub.f32 %v244, %v3820
    %v3822 = vand.u32 %v3821, 4294901760
    %v3823 = vsub.f32 %v3821, %v3822
    %v3824 = vand.u32 %v3823, 4294901760
    %3825 = vmatpush.msra.mxu0 %v3824
    %v3826 = vand.u32 %v238, 4294901760
    %v3827 = vsub.f32 %v238, %v3826
    %v3828 = vand.u32 %v3827, 4294901760
    %v3829 = vsub.f32 %v3827, %v3828
    %v3830 = vand.u32 %v3829, 4294901760
    %3831 = vmatpush.msra.mxu0 %v3830
    %v3832 = vand.u32 %v232, 4294901760
    %v3833 = vsub.f32 %v232, %v3832
    %v3834 = vand.u32 %v3833, 4294901760
    %v3835 = vsub.f32 %v3833, %v3834
    %v3836 = vand.u32 %v3835, 4294901760
    %3837 = vmatpush.msra.mxu0 %v3836
    %v3838 = vand.u32 %v226, 4294901760
    %v3839 = vsub.f32 %v226, %v3838
    %v3840 = vand.u32 %v3839, 4294901760
    %v3841 = vsub.f32 %v3839, %v3840
    %v3842 = vand.u32 %v3841, 4294901760
    %3843 = vmatpush.msra.mxu0 %v3842
    %v3844 = vand.u32 %v220, 4294901760
    %v3845 = vsub.f32 %v220, %v3844
    %v3846 = vand.u32 %v3845, 4294901760
    %v3847 = vsub.f32 %v3845, %v3846
    %v3848 = vand.u32 %v3847, 4294901760
    %3849 = vmatpush.msra.mxu0 %v3848
    %v3850 = vand.u32 %v214, 4294901760
    %v3851 = vsub.f32 %v214, %v3850
    %v3852 = vand.u32 %v3851, 4294901760
    %v3853 = vsub.f32 %v3851, %v3852
    %v3854 = vand.u32 %v3853, 4294901760
    %3855 = vmatpush.msra.mxu0 %v3854
    %v3856 = vand.u32 %v208, 4294901760
    %v3857 = vsub.f32 %v208, %v3856
    %v3858 = vand.u32 %v3857, 4294901760
    %v3859 = vsub.f32 %v3857, %v3858
    %v3860 = vand.u32 %v3859, 4294901760
    %3861 = vmatpush.msra.mxu0 %v3860
    %v3862 = vand.u32 %v202, 4294901760
    %v3863 = vsub.f32 %v202, %v3862
    %v3864 = vand.u32 %v3863, 4294901760
    %v3865 = vsub.f32 %v3863, %v3864
    %v3866 = vand.u32 %v3865, 4294901760
    %3867 = vmatpush.msra.mxu0 %v3866
    %v3868 = vand.u32 %v196, 4294901760
    %v3869 = vsub.f32 %v196, %v3868
    %v3870 = vand.u32 %v3869, 4294901760
    %v3871 = vsub.f32 %v3869, %v3870
    %v3872 = vand.u32 %v3871, 4294901760
    %3873 = vmatpush.msra.mxu0 %v3872
    %v3874 = vand.u32 %v190, 4294901760
    %v3875 = vsub.f32 %v190, %v3874
    %v3876 = vand.u32 %v3875, 4294901760
    %v3877 = vsub.f32 %v3875, %v3876
    %v3878 = vand.u32 %v3877, 4294901760
    %3879 = vmatpush.msra.mxu0 %v3878
    %v3880 = vand.u32 %v184, 4294901760
    %v3881 = vsub.f32 %v184, %v3880
    %v3882 = vand.u32 %v3881, 4294901760
    %v3883 = vsub.f32 %v3881, %v3882
    %v3884 = vand.u32 %v3883, 4294901760
    %3885 = vmatpush.msra.mxu0 %v3884
    %v3886 = vand.u32 %v178, 4294901760
    %v3887 = vsub.f32 %v178, %v3886
    %v3888 = vand.u32 %v3887, 4294901760
    %v3889 = vsub.f32 %v3887, %v3888
    %v3890 = vand.u32 %v3889, 4294901760
    %3891 = vmatpush.msra.mxu0 %v3890
    %v3892 = vand.u32 %v172, 4294901760
    %v3893 = vsub.f32 %v172, %v3892
    %v3894 = vand.u32 %v3893, 4294901760
    %v3895 = vsub.f32 %v3893, %v3894
    %v3896 = vand.u32 %v3895, 4294901760
    %3897 = vmatpush.msra.mxu0 %v3896
    %v3898 = vand.u32 %v166, 4294901760
    %v3899 = vsub.f32 %v166, %v3898
    %v3900 = vand.u32 %v3899, 4294901760
    %v3901 = vsub.f32 %v3899, %v3900
    %v3902 = vand.u32 %v3901, 4294901760
    %3903 = vmatpush.msra.mxu0 %v3902
    %v3904 = vand.u32 %v160, 4294901760
    %v3905 = vsub.f32 %v160, %v3904
    %v3906 = vand.u32 %v3905, 4294901760
    %v3907 = vsub.f32 %v3905, %v3906
    %v3908 = vand.u32 %v3907, 4294901760
    %3909 = vmatpush.msra.mxu0 %v3908
    %v3910 = vand.u32 %v59, 4294901760
    %3911 = vmatmul.f32.gmra.mxu0 %v3910
    %v3912 = vpop.f32.mrf.mxu0
    %v3913 = vadd.f32 %v3812, %v3912
    %3914 = vdwg.mxu0
    %v3915 = vand.u32 %v250, 4294901760
    %v3916 = vsub.f32 %v250, %v3915
    %3917 = vmatpush.msra.mxu0 %v3916
    %v3918 = vand.u32 %v244, 4294901760
    %v3919 = vsub.f32 %v244, %v3918
    %3920 = vmatpush.msra.mxu0 %v3919
    %v3921 = vand.u32 %v238, 4294901760
    %v3922 = vsub.f32 %v238, %v3921
    %3923 = vmatpush.msra.mxu0 %v3922
    %v3924 = vand.u32 %v232, 4294901760
    %v3925 = vsub.f32 %v232, %v3924
    %3926 = vmatpush.msra.mxu0 %v3925
    %v3927 = vand.u32 %v226, 4294901760
    %v3928 = vsub.f32 %v226, %v3927
    %3929 = vmatpush.msra.mxu0 %v3928
    %v3930 = vand.u32 %v220, 4294901760
    %v3931 = vsub.f32 %v220, %v3930
    %3932 = vmatpush.msra.mxu0 %v3931
    %v3933 = vand.u32 %v214, 4294901760
    %v3934 = vsub.f32 %v214, %v3933
    %3935 = vmatpush.msra.mxu0 %v3934
    %v3936 = vand.u32 %v208, 4294901760
    %v3937 = vsub.f32 %v208, %v3936
    %3938 = vmatpush.msra.mxu0 %v3937
    %v3939 = vand.u32 %v202, 4294901760
    %v3940 = vsub.f32 %v202, %v3939
    %3941 = vmatpush.msra.mxu0 %v3940
    %v3942 = vand.u32 %v196, 4294901760
    %v3943 = vsub.f32 %v196, %v3942
    %3944 = vmatpush.msra.mxu0 %v3943
    %v3945 = vand.u32 %v190, 4294901760
    %v3946 = vsub.f32 %v190, %v3945
    %3947 = vmatpush.msra.mxu0 %v3946
    %v3948 = vand.u32 %v184, 4294901760
    %v3949 = vsub.f32 %v184, %v3948
    %3950 = vmatpush.msra.mxu0 %v3949
    %v3951 = vand.u32 %v178, 4294901760
    %v3952 = vsub.f32 %v178, %v3951
    %3953 = vmatpush.msra.mxu0 %v3952
    %v3954 = vand.u32 %v172, 4294901760
    %v3955 = vsub.f32 %v172, %v3954
    %3956 = vmatpush.msra.mxu0 %v3955
    %v3957 = vand.u32 %v166, 4294901760
    %v3958 = vsub.f32 %v166, %v3957
    %3959 = vmatpush.msra.mxu0 %v3958
    %v3960 = vand.u32 %v160, 4294901760
    %v3961 = vsub.f32 %v160, %v3960
    %3962 = vmatpush.msra.mxu0 %v3961
    %v3963 = vand.u32 %v59, 4294901760
    %v3964 = vsub.f32 %v59, %v3963
    %3965 = vmatmul.f32.gmra.mxu0 %v3964
    %v3966 = vpop.f32.mrf.mxu0
    %v3967 = vadd.f32 %v3913, %v3966
    %3968 = vdwg.mxu0
    %v3969 = vand.u32 %v250, 4294901760
    %3970 = vmatpush.msra.mxu0 %v3969
    %v3971 = vand.u32 %v244, 4294901760
    %3972 = vmatpush.msra.mxu0 %v3971
    %v3973 = vand.u32 %v238, 4294901760
    %3974 = vmatpush.msra.mxu0 %v3973
    %v3975 = vand.u32 %v232, 4294901760
    %3976 = vmatpush.msra.mxu0 %v3975
    %v3977 = vand.u32 %v226, 4294901760
    %3978 = vmatpush.msra.mxu0 %v3977
    %v3979 = vand.u32 %v220, 4294901760
    %3980 = vmatpush.msra.mxu0 %v3979
    %v3981 = vand.u32 %v214, 4294901760
    %3982 = vmatpush.msra.mxu0 %v3981
    %v3983 = vand.u32 %v208, 4294901760
    %3984 = vmatpush.msra.mxu0 %v3983
    %v3985 = vand.u32 %v202, 4294901760
    %3986 = vmatpush.msra.mxu0 %v3985
    %v3987 = vand.u32 %v196, 4294901760
    %3988 = vmatpush.msra.mxu0 %v3987
    %v3989 = vand.u32 %v190, 4294901760
    %3990 = vmatpush.msra.mxu0 %v3989
    %v3991 = vand.u32 %v184, 4294901760
    %3992 = vmatpush.msra.mxu0 %v3991
    %v3993 = vand.u32 %v178, 4294901760
    %3994 = vmatpush.msra.mxu0 %v3993
    %v3995 = vand.u32 %v172, 4294901760
    %3996 = vmatpush.msra.mxu0 %v3995
    %v3997 = vand.u32 %v166, 4294901760
    %3998 = vmatpush.msra.mxu0 %v3997
    %v3999 = vand.u32 %v160, 4294901760
    %4000 = vmatpush.msra.mxu0 %v3999
    %v4001 = vand.u32 %v59, 4294901760
    %v4002 = vsub.f32 %v59, %v4001
    %v4003 = vand.u32 %v4002, 4294901760
    %4004 = vmatmul.f32.gmra.mxu0 %v4003
    %v4005 = vpop.f32.mrf.mxu0
    %v4006 = vadd.f32 %v3967, %v4005
    %4007 = vdwg.mxu0
    %v4008 = vand.u32 %v250, 4294901760
    %v4009 = vsub.f32 %v250, %v4008
    %v4010 = vand.u32 %v4009, 4294901760
    %4011 = vmatpush.msra.mxu0 %v4010
    %v4012 = vand.u32 %v244, 4294901760
    %v4013 = vsub.f32 %v244, %v4012
    %v4014 = vand.u32 %v4013, 4294901760
    %4015 = vmatpush.msra.mxu0 %v4014
    %v4016 = vand.u32 %v238, 4294901760
    %v4017 = vsub.f32 %v238, %v4016
    %v4018 = vand.u32 %v4017, 4294901760
    %4019 = vmatpush.msra.mxu0 %v4018
    %v4020 = vand.u32 %v232, 4294901760
    %v4021 = vsub.f32 %v232, %v4020
    %v4022 = vand.u32 %v4021, 4294901760
    %4023 = vmatpush.msra.mxu0 %v4022
    %v4024 = vand.u32 %v226, 4294901760
    %v4025 = vsub.f32 %v226, %v4024
    %v4026 = vand.u32 %v4025, 4294901760
    %4027 = vmatpush.msra.mxu0 %v4026
    %v4028 = vand.u32 %v220, 4294901760
    %v4029 = vsub.f32 %v220, %v4028
    %v4030 = vand.u32 %v4029, 4294901760
    %4031 = vmatpush.msra.mxu0 %v4030
    %v4032 = vand.u32 %v214, 4294901760
    %v4033 = vsub.f32 %v214, %v4032
    %v4034 = vand.u32 %v4033, 4294901760
    %4035 = vmatpush.msra.mxu0 %v4034
    %v4036 = vand.u32 %v208, 4294901760
    %v4037 = vsub.f32 %v208, %v4036
    %v4038 = vand.u32 %v4037, 4294901760
    %4039 = vmatpush.msra.mxu0 %v4038
    %v4040 = vand.u32 %v202, 4294901760
    %v4041 = vsub.f32 %v202, %v4040
    %v4042 = vand.u32 %v4041, 4294901760
    %4043 = vmatpush.msra.mxu0 %v4042
    %v4044 = vand.u32 %v196, 4294901760
    %v4045 = vsub.f32 %v196, %v4044
    %v4046 = vand.u32 %v4045, 4294901760
    %4047 = vmatpush.msra.mxu0 %v4046
    %v4048 = vand.u32 %v190, 4294901760
    %v4049 = vsub.f32 %v190, %v4048
    %v4050 = vand.u32 %v4049, 4294901760
    %4051 = vmatpush.msra.mxu0 %v4050
    %v4052 = vand.u32 %v184, 4294901760
    %v4053 = vsub.f32 %v184, %v4052
    %v4054 = vand.u32 %v4053, 4294901760
    %4055 = vmatpush.msra.mxu0 %v4054
    %v4056 = vand.u32 %v178, 4294901760
    %v4057 = vsub.f32 %v178, %v4056
    %v4058 = vand.u32 %v4057, 4294901760
    %4059 = vmatpush.msra.mxu0 %v4058
    %v4060 = vand.u32 %v172, 4294901760
    %v4061 = vsub.f32 %v172, %v4060
    %v4062 = vand.u32 %v4061, 4294901760
    %4063 = vmatpush.msra.mxu0 %v4062
    %v4064 = vand.u32 %v166, 4294901760
    %v4065 = vsub.f32 %v166, %v4064
    %v4066 = vand.u32 %v4065, 4294901760
    %4067 = vmatpush.msra.mxu0 %v4066
    %v4068 = vand.u32 %v160, 4294901760
    %v4069 = vsub.f32 %v160, %v4068
    %v4070 = vand.u32 %v4069, 4294901760
    %4071 = vmatpush.msra.mxu0 %v4070
    %v4072 = vand.u32 %v59, 4294901760
    %4073 = vmatmul.f32.gmra.mxu0 %v4072
    %v4074 = vpop.f32.mrf.mxu0
    %v4075 = vadd.f32 %v4006, %v4074
    %4076 = vdwg.mxu0
    %v4077 = vand.u32 %v250, 4294901760
    %4078 = vmatpush.msra.mxu0 %v4077
    %v4079 = vand.u32 %v244, 4294901760
    %4080 = vmatpush.msra.mxu0 %v4079
    %v4081 = vand.u32 %v238, 4294901760
    %4082 = vmatpush.msra.mxu0 %v4081
    %v4083 = vand.u32 %v232, 4294901760
    %4084 = vmatpush.msra.mxu0 %v4083
    %v4085 = vand.u32 %v226, 4294901760
    %4086 = vmatpush.msra.mxu0 %v4085
    %v4087 = vand.u32 %v220, 4294901760
    %4088 = vmatpush.msra.mxu0 %v4087
    %v4089 = vand.u32 %v214, 4294901760
    %4090 = vmatpush.msra.mxu0 %v4089
    %v4091 = vand.u32 %v208, 4294901760
    %4092 = vmatpush.msra.mxu0 %v4091
    %v4093 = vand.u32 %v202, 4294901760
    %4094 = vmatpush.msra.mxu0 %v4093
    %v4095 = vand.u32 %v196, 4294901760
    %4096 = vmatpush.msra.mxu0 %v4095
    %v4097 = vand.u32 %v190, 4294901760
    %4098 = vmatpush.msra.mxu0 %v4097
    %v4099 = vand.u32 %v184, 4294901760
    %4100 = vmatpush.msra.mxu0 %v4099
    %v4101 = vand.u32 %v178, 4294901760
    %4102 = vmatpush.msra.mxu0 %v4101
    %v4103 = vand.u32 %v172, 4294901760
    %4104 = vmatpush.msra.mxu0 %v4103
    %v4105 = vand.u32 %v166, 4294901760
    %4106 = vmatpush.msra.mxu0 %v4105
    %v4107 = vand.u32 %v160, 4294901760
    %4108 = vmatpush.msra.mxu0 %v4107
    %v4109 = vand.u32 %v59, 4294901760
    %4110 = vmatmul.f32.gmra.mxu0 %v4109
    %v4111 = vpop.f32.mrf.mxu0
    %v4112 = vadd.f32 %v4075, %v4111
    %4113 = vdwg.mxu0
    %v4114 = vand.u32 %v346, 4294901760
    %4115 = vmatpush.msra.mxu0 %v4114
    %v4116 = vand.u32 %v340, 4294901760
    %4117 = vmatpush.msra.mxu0 %v4116
    %v4118 = vand.u32 %v334, 4294901760
    %4119 = vmatpush.msra.mxu0 %v4118
    %v4120 = vand.u32 %v328, 4294901760
    %4121 = vmatpush.msra.mxu0 %v4120
    %v4122 = vand.u32 %v322, 4294901760
    %4123 = vmatpush.msra.mxu0 %v4122
    %v4124 = vand.u32 %v316, 4294901760
    %4125 = vmatpush.msra.mxu0 %v4124
    %v4126 = vand.u32 %v310, 4294901760
    %4127 = vmatpush.msra.mxu0 %v4126
    %v4128 = vand.u32 %v304, 4294901760
    %4129 = vmatpush.msra.mxu0 %v4128
    %v4130 = vand.u32 %v298, 4294901760
    %4131 = vmatpush.msra.mxu0 %v4130
    %v4132 = vand.u32 %v292, 4294901760
    %4133 = vmatpush.msra.mxu0 %v4132
    %v4134 = vand.u32 %v286, 4294901760
    %4135 = vmatpush.msra.mxu0 %v4134
    %v4136 = vand.u32 %v280, 4294901760
    %4137 = vmatpush.msra.mxu0 %v4136
    %v4138 = vand.u32 %v274, 4294901760
    %4139 = vmatpush.msra.mxu0 %v4138
    %v4140 = vand.u32 %v268, 4294901760
    %4141 = vmatpush.msra.mxu0 %v4140
    %v4142 = vand.u32 %v262, 4294901760
    %4143 = vmatpush.msra.mxu0 %v4142
    %v4144 = vand.u32 %v256, 4294901760
    %4145 = vmatpush.msra.mxu0 %v4144
    %v4146 = vand.u32 %v60, 4294901760
    %v4147 = vsub.f32 %v60, %v4146
    %v4148 = vand.u32 %v4147, 4294901760
    %v4149 = vsub.f32 %v4147, %v4148
    %v4150 = vand.u32 %v4149, 4294901760
    %4151 = vmatmul.f32.gmra.mxu0 %v4150
    %v4152 = vpop.f32.mrf.mxu0
    %v4153 = vadd.f32 %v4112, %v4152
    %4154 = vdwg.mxu0
    %v4155 = vand.u32 %v346, 4294901760
    %v4156 = vsub.f32 %v346, %v4155
    %v4157 = vand.u32 %v4156, 4294901760
    %v4158 = vsub.f32 %v4156, %v4157
    %v4159 = vand.u32 %v4158, 4294901760
    %4160 = vmatpush.msra.mxu0 %v4159
    %v4161 = vand.u32 %v340, 4294901760
    %v4162 = vsub.f32 %v340, %v4161
    %v4163 = vand.u32 %v4162, 4294901760
    %v4164 = vsub.f32 %v4162, %v4163
    %v4165 = vand.u32 %v4164, 4294901760
    %4166 = vmatpush.msra.mxu0 %v4165
    %v4167 = vand.u32 %v334, 4294901760
    %v4168 = vsub.f32 %v334, %v4167
    %v4169 = vand.u32 %v4168, 4294901760
    %v4170 = vsub.f32 %v4168, %v4169
    %v4171 = vand.u32 %v4170, 4294901760
    %4172 = vmatpush.msra.mxu0 %v4171
    %v4173 = vand.u32 %v328, 4294901760
    %v4174 = vsub.f32 %v328, %v4173
    %v4175 = vand.u32 %v4174, 4294901760
    %v4176 = vsub.f32 %v4174, %v4175
    %v4177 = vand.u32 %v4176, 4294901760
    %4178 = vmatpush.msra.mxu0 %v4177
    %v4179 = vand.u32 %v322, 4294901760
    %v4180 = vsub.f32 %v322, %v4179
    %v4181 = vand.u32 %v4180, 4294901760
    %v4182 = vsub.f32 %v4180, %v4181
    %v4183 = vand.u32 %v4182, 4294901760
    %4184 = vmatpush.msra.mxu0 %v4183
    %v4185 = vand.u32 %v316, 4294901760
    %v4186 = vsub.f32 %v316, %v4185
    %v4187 = vand.u32 %v4186, 4294901760
    %v4188 = vsub.f32 %v4186, %v4187
    %v4189 = vand.u32 %v4188, 4294901760
    %4190 = vmatpush.msra.mxu0 %v4189
    %v4191 = vand.u32 %v310, 4294901760
    %v4192 = vsub.f32 %v310, %v4191
    %v4193 = vand.u32 %v4192, 4294901760
    %v4194 = vsub.f32 %v4192, %v4193
    %v4195 = vand.u32 %v4194, 4294901760
    %4196 = vmatpush.msra.mxu0 %v4195
    %v4197 = vand.u32 %v304, 4294901760
    %v4198 = vsub.f32 %v304, %v4197
    %v4199 = vand.u32 %v4198, 4294901760
    %v4200 = vsub.f32 %v4198, %v4199
    %v4201 = vand.u32 %v4200, 4294901760
    %4202 = vmatpush.msra.mxu0 %v4201
    %v4203 = vand.u32 %v298, 4294901760
    %v4204 = vsub.f32 %v298, %v4203
    %v4205 = vand.u32 %v4204, 4294901760
    %v4206 = vsub.f32 %v4204, %v4205
    %v4207 = vand.u32 %v4206, 4294901760
    %4208 = vmatpush.msra.mxu0 %v4207
    %v4209 = vand.u32 %v292, 4294901760
    %v4210 = vsub.f32 %v292, %v4209
    %v4211 = vand.u32 %v4210, 4294901760
    %v4212 = vsub.f32 %v4210, %v4211
    %v4213 = vand.u32 %v4212, 4294901760
    %4214 = vmatpush.msra.mxu0 %v4213
    %v4215 = vand.u32 %v286, 4294901760
    %v4216 = vsub.f32 %v286, %v4215
    %v4217 = vand.u32 %v4216, 4294901760
    %v4218 = vsub.f32 %v4216, %v4217
    %v4219 = vand.u32 %v4218, 4294901760
    %4220 = vmatpush.msra.mxu0 %v4219
    %v4221 = vand.u32 %v280, 4294901760
    %v4222 = vsub.f32 %v280, %v4221
    %v4223 = vand.u32 %v4222, 4294901760
    %v4224 = vsub.f32 %v4222, %v4223
    %v4225 = vand.u32 %v4224, 4294901760
    %4226 = vmatpush.msra.mxu0 %v4225
    %v4227 = vand.u32 %v274, 4294901760
    %v4228 = vsub.f32 %v274, %v4227
    %v4229 = vand.u32 %v4228, 4294901760
    %v4230 = vsub.f32 %v4228, %v4229
    %v4231 = vand.u32 %v4230, 4294901760
    %4232 = vmatpush.msra.mxu0 %v4231
    %v4233 = vand.u32 %v268, 4294901760
    %v4234 = vsub.f32 %v268, %v4233
    %v4235 = vand.u32 %v4234, 4294901760
    %v4236 = vsub.f32 %v4234, %v4235
    %v4237 = vand.u32 %v4236, 4294901760
    %4238 = vmatpush.msra.mxu0 %v4237
    %v4239 = vand.u32 %v262, 4294901760
    %v4240 = vsub.f32 %v262, %v4239
    %v4241 = vand.u32 %v4240, 4294901760
    %v4242 = vsub.f32 %v4240, %v4241
    %v4243 = vand.u32 %v4242, 4294901760
    %4244 = vmatpush.msra.mxu0 %v4243
    %v4245 = vand.u32 %v256, 4294901760
    %v4246 = vsub.f32 %v256, %v4245
    %v4247 = vand.u32 %v4246, 4294901760
    %v4248 = vsub.f32 %v4246, %v4247
    %v4249 = vand.u32 %v4248, 4294901760
    %4250 = vmatpush.msra.mxu0 %v4249
    %v4251 = vand.u32 %v60, 4294901760
    %4252 = vmatmul.f32.gmra.mxu0 %v4251
    %v4253 = vpop.f32.mrf.mxu0
    %v4254 = vadd.f32 %v4153, %v4253
    %4255 = vdwg.mxu0
    %v4256 = vand.u32 %v346, 4294901760
    %v4257 = vsub.f32 %v346, %v4256
    %4258 = vmatpush.msra.mxu0 %v4257
    %v4259 = vand.u32 %v340, 4294901760
    %v4260 = vsub.f32 %v340, %v4259
    %4261 = vmatpush.msra.mxu0 %v4260
    %v4262 = vand.u32 %v334, 4294901760
    %v4263 = vsub.f32 %v334, %v4262
    %4264 = vmatpush.msra.mxu0 %v4263
    %v4265 = vand.u32 %v328, 4294901760
    %v4266 = vsub.f32 %v328, %v4265
    %4267 = vmatpush.msra.mxu0 %v4266
    %v4268 = vand.u32 %v322, 4294901760
    %v4269 = vsub.f32 %v322, %v4268
    %4270 = vmatpush.msra.mxu0 %v4269
    %v4271 = vand.u32 %v316, 4294901760
    %v4272 = vsub.f32 %v316, %v4271
    %4273 = vmatpush.msra.mxu0 %v4272
    %v4274 = vand.u32 %v310, 4294901760
    %v4275 = vsub.f32 %v310, %v4274
    %4276 = vmatpush.msra.mxu0 %v4275
    %v4277 = vand.u32 %v304, 4294901760
    %v4278 = vsub.f32 %v304, %v4277
    %4279 = vmatpush.msra.mxu0 %v4278
    %v4280 = vand.u32 %v298, 4294901760
    %v4281 = vsub.f32 %v298, %v4280
    %4282 = vmatpush.msra.mxu0 %v4281
    %v4283 = vand.u32 %v292, 4294901760
    %v4284 = vsub.f32 %v292, %v4283
    %4285 = vmatpush.msra.mxu0 %v4284
    %v4286 = vand.u32 %v286, 4294901760
    %v4287 = vsub.f32 %v286, %v4286
    %4288 = vmatpush.msra.mxu0 %v4287
    %v4289 = vand.u32 %v280, 4294901760
    %v4290 = vsub.f32 %v280, %v4289
    %4291 = vmatpush.msra.mxu0 %v4290
    %v4292 = vand.u32 %v274, 4294901760
    %v4293 = vsub.f32 %v274, %v4292
    %4294 = vmatpush.msra.mxu0 %v4293
    %v4295 = vand.u32 %v268, 4294901760
    %v4296 = vsub.f32 %v268, %v4295
    %4297 = vmatpush.msra.mxu0 %v4296
    %v4298 = vand.u32 %v262, 4294901760
    %v4299 = vsub.f32 %v262, %v4298
    %4300 = vmatpush.msra.mxu0 %v4299
    %v4301 = vand.u32 %v256, 4294901760
    %v4302 = vsub.f32 %v256, %v4301
    %4303 = vmatpush.msra.mxu0 %v4302
    %v4304 = vand.u32 %v60, 4294901760
    %v4305 = vsub.f32 %v60, %v4304
    %4306 = vmatmul.f32.gmra.mxu0 %v4305
    %v4307 = vpop.f32.mrf.mxu0
    %v4308 = vadd.f32 %v4254, %v4307
    %4309 = vdwg.mxu0
    %v4310 = vand.u32 %v346, 4294901760
    %4311 = vmatpush.msra.mxu0 %v4310
    %v4312 = vand.u32 %v340, 4294901760
    %4313 = vmatpush.msra.mxu0 %v4312
    %v4314 = vand.u32 %v334, 4294901760
    %4315 = vmatpush.msra.mxu0 %v4314
    %v4316 = vand.u32 %v328, 4294901760
    %4317 = vmatpush.msra.mxu0 %v4316
    %v4318 = vand.u32 %v322, 4294901760
    %4319 = vmatpush.msra.mxu0 %v4318
    %v4320 = vand.u32 %v316, 4294901760
    %4321 = vmatpush.msra.mxu0 %v4320
    %v4322 = vand.u32 %v310, 4294901760
    %4323 = vmatpush.msra.mxu0 %v4322
    %v4324 = vand.u32 %v304, 4294901760
    %4325 = vmatpush.msra.mxu0 %v4324
    %v4326 = vand.u32 %v298, 4294901760
    %4327 = vmatpush.msra.mxu0 %v4326
    %v4328 = vand.u32 %v292, 4294901760
    %4329 = vmatpush.msra.mxu0 %v4328
    %v4330 = vand.u32 %v286, 4294901760
    %4331 = vmatpush.msra.mxu0 %v4330
    %v4332 = vand.u32 %v280, 4294901760
    %4333 = vmatpush.msra.mxu0 %v4332
    %v4334 = vand.u32 %v274, 4294901760
    %4335 = vmatpush.msra.mxu0 %v4334
    %v4336 = vand.u32 %v268, 4294901760
    %4337 = vmatpush.msra.mxu0 %v4336
    %v4338 = vand.u32 %v262, 4294901760
    %4339 = vmatpush.msra.mxu0 %v4338
    %v4340 = vand.u32 %v256, 4294901760
    %4341 = vmatpush.msra.mxu0 %v4340
    %v4342 = vand.u32 %v60, 4294901760
    %v4343 = vsub.f32 %v60, %v4342
    %v4344 = vand.u32 %v4343, 4294901760
    %4345 = vmatmul.f32.gmra.mxu0 %v4344
    %v4346 = vpop.f32.mrf.mxu0
    %v4347 = vadd.f32 %v4308, %v4346
    %4348 = vdwg.mxu0
    %v4349 = vand.u32 %v346, 4294901760
    %v4350 = vsub.f32 %v346, %v4349
    %v4351 = vand.u32 %v4350, 4294901760
    %4352 = vmatpush.msra.mxu0 %v4351
    %v4353 = vand.u32 %v340, 4294901760
    %v4354 = vsub.f32 %v340, %v4353
    %v4355 = vand.u32 %v4354, 4294901760
    %4356 = vmatpush.msra.mxu0 %v4355
    %v4357 = vand.u32 %v334, 4294901760
    %v4358 = vsub.f32 %v334, %v4357
    %v4359 = vand.u32 %v4358, 4294901760
    %4360 = vmatpush.msra.mxu0 %v4359
    %v4361 = vand.u32 %v328, 4294901760
    %v4362 = vsub.f32 %v328, %v4361
    %v4363 = vand.u32 %v4362, 4294901760
    %4364 = vmatpush.msra.mxu0 %v4363
    %v4365 = vand.u32 %v322, 4294901760
    %v4366 = vsub.f32 %v322, %v4365
    %v4367 = vand.u32 %v4366, 4294901760
    %4368 = vmatpush.msra.mxu0 %v4367
    %v4369 = vand.u32 %v316, 4294901760
    %v4370 = vsub.f32 %v316, %v4369
    %v4371 = vand.u32 %v4370, 4294901760
    %4372 = vmatpush.msra.mxu0 %v4371
    %v4373 = vand.u32 %v310, 4294901760
    %v4374 = vsub.f32 %v310, %v4373
    %v4375 = vand.u32 %v4374, 4294901760
    %4376 = vmatpush.msra.mxu0 %v4375
    %v4377 = vand.u32 %v304, 4294901760
    %v4378 = vsub.f32 %v304, %v4377
    %v4379 = vand.u32 %v4378, 4294901760
    %4380 = vmatpush.msra.mxu0 %v4379
    %v4381 = vand.u32 %v298, 4294901760
    %v4382 = vsub.f32 %v298, %v4381
    %v4383 = vand.u32 %v4382, 4294901760
    %4384 = vmatpush.msra.mxu0 %v4383
    %v4385 = vand.u32 %v292, 4294901760
    %v4386 = vsub.f32 %v292, %v4385
    %v4387 = vand.u32 %v4386, 4294901760
    %4388 = vmatpush.msra.mxu0 %v4387
    %v4389 = vand.u32 %v286, 4294901760
    %v4390 = vsub.f32 %v286, %v4389
    %v4391 = vand.u32 %v4390, 4294901760
    %4392 = vmatpush.msra.mxu0 %v4391
    %v4393 = vand.u32 %v280, 4294901760
    %v4394 = vsub.f32 %v280, %v4393
    %v4395 = vand.u32 %v4394, 4294901760
    %4396 = vmatpush.msra.mxu0 %v4395
    %v4397 = vand.u32 %v274, 4294901760
    %v4398 = vsub.f32 %v274, %v4397
    %v4399 = vand.u32 %v4398, 4294901760
    %4400 = vmatpush.msra.mxu0 %v4399
    %v4401 = vand.u32 %v268, 4294901760
    %v4402 = vsub.f32 %v268, %v4401
    %v4403 = vand.u32 %v4402, 4294901760
    %4404 = vmatpush.msra.mxu0 %v4403
    %v4405 = vand.u32 %v262, 4294901760
    %v4406 = vsub.f32 %v262, %v4405
    %v4407 = vand.u32 %v4406, 4294901760
    %4408 = vmatpush.msra.mxu0 %v4407
    %v4409 = vand.u32 %v256, 4294901760
    %v4410 = vsub.f32 %v256, %v4409
    %v4411 = vand.u32 %v4410, 4294901760
    %4412 = vmatpush.msra.mxu0 %v4411
    %v4413 = vand.u32 %v60, 4294901760
    %4414 = vmatmul.f32.gmra.mxu0 %v4413
    %v4415 = vpop.f32.mrf.mxu0
    %v4416 = vadd.f32 %v4347, %v4415
    %4417 = vdwg.mxu0
    %v4418 = vand.u32 %v346, 4294901760
    %4419 = vmatpush.msra.mxu0 %v4418
    %v4420 = vand.u32 %v340, 4294901760
    %4421 = vmatpush.msra.mxu0 %v4420
    %v4422 = vand.u32 %v334, 4294901760
    %4423 = vmatpush.msra.mxu0 %v4422
    %v4424 = vand.u32 %v328, 4294901760
    %4425 = vmatpush.msra.mxu0 %v4424
    %v4426 = vand.u32 %v322, 4294901760
    %4427 = vmatpush.msra.mxu0 %v4426
    %v4428 = vand.u32 %v316, 4294901760
    %4429 = vmatpush.msra.mxu0 %v4428
    %v4430 = vand.u32 %v310, 4294901760
    %4431 = vmatpush.msra.mxu0 %v4430
    %v4432 = vand.u32 %v304, 4294901760
    %4433 = vmatpush.msra.mxu0 %v4432
    %v4434 = vand.u32 %v298, 4294901760
    %4435 = vmatpush.msra.mxu0 %v4434
    %v4436 = vand.u32 %v292, 4294901760
    %4437 = vmatpush.msra.mxu0 %v4436
    %v4438 = vand.u32 %v286, 4294901760
    %4439 = vmatpush.msra.mxu0 %v4438
    %v4440 = vand.u32 %v280, 4294901760
    %4441 = vmatpush.msra.mxu0 %v4440
    %v4442 = vand.u32 %v274, 4294901760
    %4443 = vmatpush.msra.mxu0 %v4442
    %v4444 = vand.u32 %v268, 4294901760
    %4445 = vmatpush.msra.mxu0 %v4444
    %v4446 = vand.u32 %v262, 4294901760
    %4447 = vmatpush.msra.mxu0 %v4446
    %v4448 = vand.u32 %v256, 4294901760
    %4449 = vmatpush.msra.mxu0 %v4448
    %v4450 = vand.u32 %v60, 4294901760
    %4451 = vmatmul.f32.gmra.mxu0 %v4450
    %v4452 = vpop.f32.mrf.mxu0
    %v4453 = vadd.f32 %v4416, %v4452
    %4454 = vdwg.mxu0
    %v4455 = vand.u32 %v155, 4294901760
    %4456 = vmatpush.msra.mxu0 %v4455
    %v4457 = vand.u32 %v149, 4294901760
    %4458 = vmatpush.msra.mxu0 %v4457
    %v4459 = vand.u32 %v143, 4294901760
    %4460 = vmatpush.msra.mxu0 %v4459
    %v4461 = vand.u32 %v137, 4294901760
    %4462 = vmatpush.msra.mxu0 %v4461
    %v4463 = vand.u32 %v131, 4294901760
    %4464 = vmatpush.msra.mxu0 %v4463
    %v4465 = vand.u32 %v125, 4294901760
    %4466 = vmatpush.msra.mxu0 %v4465
    %v4467 = vand.u32 %v119, 4294901760
    %4468 = vmatpush.msra.mxu0 %v4467
    %v4469 = vand.u32 %v113, 4294901760
    %4470 = vmatpush.msra.mxu0 %v4469
    %v4471 = vand.u32 %v107, 4294901760
    %4472 = vmatpush.msra.mxu0 %v4471
    %v4473 = vand.u32 %v101, 4294901760
    %4474 = vmatpush.msra.mxu0 %v4473
    %v4475 = vand.u32 %v95, 4294901760
    %4476 = vmatpush.msra.mxu0 %v4475
    %v4477 = vand.u32 %v89, 4294901760
    %4478 = vmatpush.msra.mxu0 %v4477
    %v4479 = vand.u32 %v83, 4294901760
    %4480 = vmatpush.msra.mxu0 %v4479
    %v4481 = vand.u32 %v77, 4294901760
    %4482 = vmatpush.msra.mxu0 %v4481
    %v4483 = vand.u32 %v71, 4294901760
    %4484 = vmatpush.msra.mxu0 %v4483
    %v4485 = vand.u32 %v65, 4294901760
    %4486 = vmatpush.msra.mxu0 %v4485
    %v4487 = vand.u32 %v58, 4294901760
    %v4488 = vsub.f32 %v58, %v4487
    %v4489 = vand.u32 %v4488, 4294901760
    %v4490 = vsub.f32 %v4488, %v4489
    %v4491 = vand.u32 %v4490, 4294901760
    %4492 = vmatmul.f32.gmra.mxu0 %v4491
    %v4493 = vpop.f32.mrf.mxu0
    %v4494 = vadd.f32 %v355, %v4493
    %4495 = vdwg.mxu0
    %v4496 = vand.u32 %v155, 4294901760
    %v4497 = vsub.f32 %v155, %v4496
    %v4498 = vand.u32 %v4497, 4294901760
    %v4499 = vsub.f32 %v4497, %v4498
    %v4500 = vand.u32 %v4499, 4294901760
    %4501 = vmatpush.msra.mxu0 %v4500
    %v4502 = vand.u32 %v149, 4294901760
    %v4503 = vsub.f32 %v149, %v4502
    %v4504 = vand.u32 %v4503, 4294901760
    %v4505 = vsub.f32 %v4503, %v4504
    %v4506 = vand.u32 %v4505, 4294901760
    %4507 = vmatpush.msra.mxu0 %v4506
    %v4508 = vand.u32 %v143, 4294901760
    %v4509 = vsub.f32 %v143, %v4508
    %v4510 = vand.u32 %v4509, 4294901760
    %v4511 = vsub.f32 %v4509, %v4510
    %v4512 = vand.u32 %v4511, 4294901760
    %4513 = vmatpush.msra.mxu0 %v4512
    %v4514 = vand.u32 %v137, 4294901760
    %v4515 = vsub.f32 %v137, %v4514
    %v4516 = vand.u32 %v4515, 4294901760
    %v4517 = vsub.f32 %v4515, %v4516
    %v4518 = vand.u32 %v4517, 4294901760
    %4519 = vmatpush.msra.mxu0 %v4518
    %v4520 = vand.u32 %v131, 4294901760
    %v4521 = vsub.f32 %v131, %v4520
    %v4522 = vand.u32 %v4521, 4294901760
    %v4523 = vsub.f32 %v4521, %v4522
    %v4524 = vand.u32 %v4523, 4294901760
    %4525 = vmatpush.msra.mxu0 %v4524
    %v4526 = vand.u32 %v125, 4294901760
    %v4527 = vsub.f32 %v125, %v4526
    %v4528 = vand.u32 %v4527, 4294901760
    %v4529 = vsub.f32 %v4527, %v4528
    %v4530 = vand.u32 %v4529, 4294901760
    %4531 = vmatpush.msra.mxu0 %v4530
    %v4532 = vand.u32 %v119, 4294901760
    %v4533 = vsub.f32 %v119, %v4532
    %v4534 = vand.u32 %v4533, 4294901760
    %v4535 = vsub.f32 %v4533, %v4534
    %v4536 = vand.u32 %v4535, 4294901760
    %4537 = vmatpush.msra.mxu0 %v4536
    %v4538 = vand.u32 %v113, 4294901760
    %v4539 = vsub.f32 %v113, %v4538
    %v4540 = vand.u32 %v4539, 4294901760
    %v4541 = vsub.f32 %v4539, %v4540
    %v4542 = vand.u32 %v4541, 4294901760
    %4543 = vmatpush.msra.mxu0 %v4542
    %v4544 = vand.u32 %v107, 4294901760
    %v4545 = vsub.f32 %v107, %v4544
    %v4546 = vand.u32 %v4545, 4294901760
    %v4547 = vsub.f32 %v4545, %v4546
    %v4548 = vand.u32 %v4547, 4294901760
    %4549 = vmatpush.msra.mxu0 %v4548
    %v4550 = vand.u32 %v101, 4294901760
    %v4551 = vsub.f32 %v101, %v4550
    %v4552 = vand.u32 %v4551, 4294901760
    %v4553 = vsub.f32 %v4551, %v4552
    %v4554 = vand.u32 %v4553, 4294901760
    %4555 = vmatpush.msra.mxu0 %v4554
    %v4556 = vand.u32 %v95, 4294901760
    %v4557 = vsub.f32 %v95, %v4556
    %v4558 = vand.u32 %v4557, 4294901760
    %v4559 = vsub.f32 %v4557, %v4558
    %v4560 = vand.u32 %v4559, 4294901760
    %4561 = vmatpush.msra.mxu0 %v4560
    %v4562 = vand.u32 %v89, 4294901760
    %v4563 = vsub.f32 %v89, %v4562
    %v4564 = vand.u32 %v4563, 4294901760
    %v4565 = vsub.f32 %v4563, %v4564
    %v4566 = vand.u32 %v4565, 4294901760
    %4567 = vmatpush.msra.mxu0 %v4566
    %v4568 = vand.u32 %v83, 4294901760
    %v4569 = vsub.f32 %v83, %v4568
    %v4570 = vand.u32 %v4569, 4294901760
    %v4571 = vsub.f32 %v4569, %v4570
    %v4572 = vand.u32 %v4571, 4294901760
    %4573 = vmatpush.msra.mxu0 %v4572
    %v4574 = vand.u32 %v77, 4294901760
    %v4575 = vsub.f32 %v77, %v4574
    %v4576 = vand.u32 %v4575, 4294901760
    %v4577 = vsub.f32 %v4575, %v4576
    %v4578 = vand.u32 %v4577, 4294901760
    %4579 = vmatpush.msra.mxu0 %v4578
    %v4580 = vand.u32 %v71, 4294901760
    %v4581 = vsub.f32 %v71, %v4580
    %v4582 = vand.u32 %v4581, 4294901760
    %v4583 = vsub.f32 %v4581, %v4582
    %v4584 = vand.u32 %v4583, 4294901760
    %4585 = vmatpush.msra.mxu0 %v4584
    %v4586 = vand.u32 %v65, 4294901760
    %v4587 = vsub.f32 %v65, %v4586
    %v4588 = vand.u32 %v4587, 4294901760
    %v4589 = vsub.f32 %v4587, %v4588
    %v4590 = vand.u32 %v4589, 4294901760
    %4591 = vmatpush.msra.mxu0 %v4590
    %v4592 = vand.u32 %v58, 4294901760
    %4593 = vmatmul.f32.gmra.mxu0 %v4592
    %v4594 = vpop.f32.mrf.mxu0
    %v4595 = vadd.f32 %v4494, %v4594
    %4596 = vdwg.mxu0
    %v4597 = vand.u32 %v155, 4294901760
    %v4598 = vsub.f32 %v155, %v4597
    %4599 = vmatpush.msra.mxu0 %v4598
    %v4600 = vand.u32 %v149, 4294901760
    %v4601 = vsub.f32 %v149, %v4600
    %4602 = vmatpush.msra.mxu0 %v4601
    %v4603 = vand.u32 %v143, 4294901760
    %v4604 = vsub.f32 %v143, %v4603
    %4605 = vmatpush.msra.mxu0 %v4604
    %v4606 = vand.u32 %v137, 4294901760
    %v4607 = vsub.f32 %v137, %v4606
    %4608 = vmatpush.msra.mxu0 %v4607
    %v4609 = vand.u32 %v131, 4294901760
    %v4610 = vsub.f32 %v131, %v4609
    %4611 = vmatpush.msra.mxu0 %v4610
    %v4612 = vand.u32 %v125, 4294901760
    %v4613 = vsub.f32 %v125, %v4612
    %4614 = vmatpush.msra.mxu0 %v4613
    %v4615 = vand.u32 %v119, 4294901760
    %v4616 = vsub.f32 %v119, %v4615
    %4617 = vmatpush.msra.mxu0 %v4616
    %v4618 = vand.u32 %v113, 4294901760
    %v4619 = vsub.f32 %v113, %v4618
    %4620 = vmatpush.msra.mxu0 %v4619
    %v4621 = vand.u32 %v107, 4294901760
    %v4622 = vsub.f32 %v107, %v4621
    %4623 = vmatpush.msra.mxu0 %v4622
    %v4624 = vand.u32 %v101, 4294901760
    %v4625 = vsub.f32 %v101, %v4624
    %4626 = vmatpush.msra.mxu0 %v4625
    %v4627 = vand.u32 %v95, 4294901760
    %v4628 = vsub.f32 %v95, %v4627
    %4629 = vmatpush.msra.mxu0 %v4628
    %v4630 = vand.u32 %v89, 4294901760
    %v4631 = vsub.f32 %v89, %v4630
    %4632 = vmatpush.msra.mxu0 %v4631
    %v4633 = vand.u32 %v83, 4294901760
    %v4634 = vsub.f32 %v83, %v4633
    %4635 = vmatpush.msra.mxu0 %v4634
    %v4636 = vand.u32 %v77, 4294901760
    %v4637 = vsub.f32 %v77, %v4636
    %4638 = vmatpush.msra.mxu0 %v4637
    %v4639 = vand.u32 %v71, 4294901760
    %v4640 = vsub.f32 %v71, %v4639
    %4641 = vmatpush.msra.mxu0 %v4640
    %v4642 = vand.u32 %v65, 4294901760
    %v4643 = vsub.f32 %v65, %v4642
    %4644 = vmatpush.msra.mxu0 %v4643
    %v4645 = vand.u32 %v58, 4294901760
    %v4646 = vsub.f32 %v58, %v4645
    %4647 = vmatmul.f32.gmra.mxu0 %v4646
    %v4648 = vpop.f32.mrf.mxu0
    %v4649 = vadd.f32 %v4595, %v4648
    %4650 = vdwg.mxu0
    %v4651 = vand.u32 %v155, 4294901760
    %4652 = vmatpush.msra.mxu0 %v4651
    %v4653 = vand.u32 %v149, 4294901760
    %4654 = vmatpush.msra.mxu0 %v4653
    %v4655 = vand.u32 %v143, 4294901760
    %4656 = vmatpush.msra.mxu0 %v4655
    %v4657 = vand.u32 %v137, 4294901760
    %4658 = vmatpush.msra.mxu0 %v4657
    %v4659 = vand.u32 %v131, 4294901760
    %4660 = vmatpush.msra.mxu0 %v4659
    %v4661 = vand.u32 %v125, 4294901760
    %4662 = vmatpush.msra.mxu0 %v4661
    %v4663 = vand.u32 %v119, 4294901760
    %4664 = vmatpush.msra.mxu0 %v4663
    %v4665 = vand.u32 %v113, 4294901760
    %4666 = vmatpush.msra.mxu0 %v4665
    %v4667 = vand.u32 %v107, 4294901760
    %4668 = vmatpush.msra.mxu0 %v4667
    %v4669 = vand.u32 %v101, 4294901760
    %4670 = vmatpush.msra.mxu0 %v4669
    %v4671 = vand.u32 %v95, 4294901760
    %4672 = vmatpush.msra.mxu0 %v4671
    %v4673 = vand.u32 %v89, 4294901760
    %4674 = vmatpush.msra.mxu0 %v4673
    %v4675 = vand.u32 %v83, 4294901760
    %4676 = vmatpush.msra.mxu0 %v4675
    %v4677 = vand.u32 %v77, 4294901760
    %4678 = vmatpush.msra.mxu0 %v4677
    %v4679 = vand.u32 %v71, 4294901760
    %4680 = vmatpush.msra.mxu0 %v4679
    %v4681 = vand.u32 %v65, 4294901760
    %4682 = vmatpush.msra.mxu0 %v4681
    %v4683 = vand.u32 %v58, 4294901760
    %v4684 = vsub.f32 %v58, %v4683
    %v4685 = vand.u32 %v4684, 4294901760
    %4686 = vmatmul.f32.gmra.mxu0 %v4685
    %v4687 = vpop.f32.mrf.mxu0
    %v4688 = vadd.f32 %v4649, %v4687
    %4689 = vdwg.mxu0
    %v4690 = vand.u32 %v155, 4294901760
    %v4691 = vsub.f32 %v155, %v4690
    %v4692 = vand.u32 %v4691, 4294901760
    %4693 = vmatpush.msra.mxu0 %v4692
    %v4694 = vand.u32 %v149, 4294901760
    %v4695 = vsub.f32 %v149, %v4694
    %v4696 = vand.u32 %v4695, 4294901760
    %4697 = vmatpush.msra.mxu0 %v4696
    %v4698 = vand.u32 %v143, 4294901760
    %v4699 = vsub.f32 %v143, %v4698
    %v4700 = vand.u32 %v4699, 4294901760
    %4701 = vmatpush.msra.mxu0 %v4700
    %v4702 = vand.u32 %v137, 4294901760
    %v4703 = vsub.f32 %v137, %v4702
    %v4704 = vand.u32 %v4703, 4294901760
    %4705 = vmatpush.msra.mxu0 %v4704
    %v4706 = vand.u32 %v131, 4294901760
    %v4707 = vsub.f32 %v131, %v4706
    %v4708 = vand.u32 %v4707, 4294901760
    %4709 = vmatpush.msra.mxu0 %v4708
    %v4710 = vand.u32 %v125, 4294901760
    %v4711 = vsub.f32 %v125, %v4710
    %v4712 = vand.u32 %v4711, 4294901760
    %4713 = vmatpush.msra.mxu0 %v4712
    %v4714 = vand.u32 %v119, 4294901760
    %v4715 = vsub.f32 %v119, %v4714
    %v4716 = vand.u32 %v4715, 4294901760
    %4717 = vmatpush.msra.mxu0 %v4716
    %v4718 = vand.u32 %v113, 4294901760
    %v4719 = vsub.f32 %v113, %v4718
    %v4720 = vand.u32 %v4719, 4294901760
    %4721 = vmatpush.msra.mxu0 %v4720
    %v4722 = vand.u32 %v107, 4294901760
    %v4723 = vsub.f32 %v107, %v4722
    %v4724 = vand.u32 %v4723, 4294901760
    %4725 = vmatpush.msra.mxu0 %v4724
    %v4726 = vand.u32 %v101, 4294901760
    %v4727 = vsub.f32 %v101, %v4726
    %v4728 = vand.u32 %v4727, 4294901760
    %4729 = vmatpush.msra.mxu0 %v4728
    %v4730 = vand.u32 %v95, 4294901760
    %v4731 = vsub.f32 %v95, %v4730
    %v4732 = vand.u32 %v4731, 4294901760
    %4733 = vmatpush.msra.mxu0 %v4732
    %v4734 = vand.u32 %v89, 4294901760
    %v4735 = vsub.f32 %v89, %v4734
    %v4736 = vand.u32 %v4735, 4294901760
    %4737 = vmatpush.msra.mxu0 %v4736
    %v4738 = vand.u32 %v83, 4294901760
    %v4739 = vsub.f32 %v83, %v4738
    %v4740 = vand.u32 %v4739, 4294901760
    %4741 = vmatpush.msra.mxu0 %v4740
    %v4742 = vand.u32 %v77, 4294901760
    %v4743 = vsub.f32 %v77, %v4742
    %v4744 = vand.u32 %v4743, 4294901760
    %4745 = vmatpush.msra.mxu0 %v4744
    %v4746 = vand.u32 %v71, 4294901760
    %v4747 = vsub.f32 %v71, %v4746
    %v4748 = vand.u32 %v4747, 4294901760
    %4749 = vmatpush.msra.mxu0 %v4748
    %v4750 = vand.u32 %v65, 4294901760
    %v4751 = vsub.f32 %v65, %v4750
    %v4752 = vand.u32 %v4751, 4294901760
    %4753 = vmatpush.msra.mxu0 %v4752
    %v4754 = vand.u32 %v58, 4294901760
    %4755 = vmatmul.f32.gmra.mxu0 %v4754
    %v4756 = vpop.f32.mrf.mxu0
    %v4757 = vadd.f32 %v4688, %v4756
    %4758 = vdwg.mxu0
    %v4759 = vand.u32 %v155, 4294901760
    %4760 = vmatpush.msra.mxu0 %v4759
    %v4761 = vand.u32 %v149, 4294901760
    %4762 = vmatpush.msra.mxu0 %v4761
    %v4763 = vand.u32 %v143, 4294901760
    %4764 = vmatpush.msra.mxu0 %v4763
    %v4765 = vand.u32 %v137, 4294901760
    %4766 = vmatpush.msra.mxu0 %v4765
    %v4767 = vand.u32 %v131, 4294901760
    %4768 = vmatpush.msra.mxu0 %v4767
    %v4769 = vand.u32 %v125, 4294901760
    %4770 = vmatpush.msra.mxu0 %v4769
    %v4771 = vand.u32 %v119, 4294901760
    %4772 = vmatpush.msra.mxu0 %v4771
    %v4773 = vand.u32 %v113, 4294901760
    %4774 = vmatpush.msra.mxu0 %v4773
    %v4775 = vand.u32 %v107, 4294901760
    %4776 = vmatpush.msra.mxu0 %v4775
    %v4777 = vand.u32 %v101, 4294901760
    %4778 = vmatpush.msra.mxu0 %v4777
    %v4779 = vand.u32 %v95, 4294901760
    %4780 = vmatpush.msra.mxu0 %v4779
    %v4781 = vand.u32 %v89, 4294901760
    %4782 = vmatpush.msra.mxu0 %v4781
    %v4783 = vand.u32 %v83, 4294901760
    %4784 = vmatpush.msra.mxu0 %v4783
    %v4785 = vand.u32 %v77, 4294901760
    %4786 = vmatpush.msra.mxu0 %v4785
    %v4787 = vand.u32 %v71, 4294901760
    %4788 = vmatpush.msra.mxu0 %v4787
    %v4789 = vand.u32 %v65, 4294901760
    %4790 = vmatpush.msra.mxu0 %v4789
    %v4791 = vand.u32 %v58, 4294901760
    %4792 = vmatmul.f32.gmra.mxu0 %v4791
    %v4793 = vpop.f32.mrf.mxu0
    %v4794 = vadd.f32 %v4757, %v4793
    %4795 = vdwg.mxu0
    %v4796 = vand.u32 %v251, 4294901760
    %4797 = vmatpush.msra.mxu0 %v4796
    %v4798 = vand.u32 %v245, 4294901760
    %4799 = vmatpush.msra.mxu0 %v4798
    %v4800 = vand.u32 %v239, 4294901760
    %4801 = vmatpush.msra.mxu0 %v4800
    %v4802 = vand.u32 %v233, 4294901760
    %4803 = vmatpush.msra.mxu0 %v4802
    %v4804 = vand.u32 %v227, 4294901760
    %4805 = vmatpush.msra.mxu0 %v4804
    %v4806 = vand.u32 %v221, 4294901760
    %4807 = vmatpush.msra.mxu0 %v4806
    %v4808 = vand.u32 %v215, 4294901760
    %4809 = vmatpush.msra.mxu0 %v4808
    %v4810 = vand.u32 %v209, 4294901760
    %4811 = vmatpush.msra.mxu0 %v4810
    %v4812 = vand.u32 %v203, 4294901760
    %4813 = vmatpush.msra.mxu0 %v4812
    %v4814 = vand.u32 %v197, 4294901760
    %4815 = vmatpush.msra.mxu0 %v4814
    %v4816 = vand.u32 %v191, 4294901760
    %4817 = vmatpush.msra.mxu0 %v4816
    %v4818 = vand.u32 %v185, 4294901760
    %4819 = vmatpush.msra.mxu0 %v4818
    %v4820 = vand.u32 %v179, 4294901760
    %4821 = vmatpush.msra.mxu0 %v4820
    %v4822 = vand.u32 %v173, 4294901760
    %4823 = vmatpush.msra.mxu0 %v4822
    %v4824 = vand.u32 %v167, 4294901760
    %4825 = vmatpush.msra.mxu0 %v4824
    %v4826 = vand.u32 %v161, 4294901760
    %4827 = vmatpush.msra.mxu0 %v4826
    %v4828 = vand.u32 %v59, 4294901760
    %v4829 = vsub.f32 %v59, %v4828
    %v4830 = vand.u32 %v4829, 4294901760
    %v4831 = vsub.f32 %v4829, %v4830
    %v4832 = vand.u32 %v4831, 4294901760
    %4833 = vmatmul.f32.gmra.mxu0 %v4832
    %v4834 = vpop.f32.mrf.mxu0
    %v4835 = vadd.f32 %v4794, %v4834
    %4836 = vdwg.mxu0
    %v4837 = vand.u32 %v251, 4294901760
    %v4838 = vsub.f32 %v251, %v4837
    %v4839 = vand.u32 %v4838, 4294901760
    %v4840 = vsub.f32 %v4838, %v4839
    %v4841 = vand.u32 %v4840, 4294901760
    %4842 = vmatpush.msra.mxu0 %v4841
    %v4843 = vand.u32 %v245, 4294901760
    %v4844 = vsub.f32 %v245, %v4843
    %v4845 = vand.u32 %v4844, 4294901760
    %v4846 = vsub.f32 %v4844, %v4845
    %v4847 = vand.u32 %v4846, 4294901760
    %4848 = vmatpush.msra.mxu0 %v4847
    %v4849 = vand.u32 %v239, 4294901760
    %v4850 = vsub.f32 %v239, %v4849
    %v4851 = vand.u32 %v4850, 4294901760
    %v4852 = vsub.f32 %v4850, %v4851
    %v4853 = vand.u32 %v4852, 4294901760
    %4854 = vmatpush.msra.mxu0 %v4853
    %v4855 = vand.u32 %v233, 4294901760
    %v4856 = vsub.f32 %v233, %v4855
    %v4857 = vand.u32 %v4856, 4294901760
    %v4858 = vsub.f32 %v4856, %v4857
    %v4859 = vand.u32 %v4858, 4294901760
    %4860 = vmatpush.msra.mxu0 %v4859
    %v4861 = vand.u32 %v227, 4294901760
    %v4862 = vsub.f32 %v227, %v4861
    %v4863 = vand.u32 %v4862, 4294901760
    %v4864 = vsub.f32 %v4862, %v4863
    %v4865 = vand.u32 %v4864, 4294901760
    %4866 = vmatpush.msra.mxu0 %v4865
    %v4867 = vand.u32 %v221, 4294901760
    %v4868 = vsub.f32 %v221, %v4867
    %v4869 = vand.u32 %v4868, 4294901760
    %v4870 = vsub.f32 %v4868, %v4869
    %v4871 = vand.u32 %v4870, 4294901760
    %4872 = vmatpush.msra.mxu0 %v4871
    %v4873 = vand.u32 %v215, 4294901760
    %v4874 = vsub.f32 %v215, %v4873
    %v4875 = vand.u32 %v4874, 4294901760
    %v4876 = vsub.f32 %v4874, %v4875
    %v4877 = vand.u32 %v4876, 4294901760
    %4878 = vmatpush.msra.mxu0 %v4877
    %v4879 = vand.u32 %v209, 4294901760
    %v4880 = vsub.f32 %v209, %v4879
    %v4881 = vand.u32 %v4880, 4294901760
    %v4882 = vsub.f32 %v4880, %v4881
    %v4883 = vand.u32 %v4882, 4294901760
    %4884 = vmatpush.msra.mxu0 %v4883
    %v4885 = vand.u32 %v203, 4294901760
    %v4886 = vsub.f32 %v203, %v4885
    %v4887 = vand.u32 %v4886, 4294901760
    %v4888 = vsub.f32 %v4886, %v4887
    %v4889 = vand.u32 %v4888, 4294901760
    %4890 = vmatpush.msra.mxu0 %v4889
    %v4891 = vand.u32 %v197, 4294901760
    %v4892 = vsub.f32 %v197, %v4891
    %v4893 = vand.u32 %v4892, 4294901760
    %v4894 = vsub.f32 %v4892, %v4893
    %v4895 = vand.u32 %v4894, 4294901760
    %4896 = vmatpush.msra.mxu0 %v4895
    %v4897 = vand.u32 %v191, 4294901760
    %v4898 = vsub.f32 %v191, %v4897
    %v4899 = vand.u32 %v4898, 4294901760
    %v4900 = vsub.f32 %v4898, %v4899
    %v4901 = vand.u32 %v4900, 4294901760
    %4902 = vmatpush.msra.mxu0 %v4901
    %v4903 = vand.u32 %v185, 4294901760
    %v4904 = vsub.f32 %v185, %v4903
    %v4905 = vand.u32 %v4904, 4294901760
    %v4906 = vsub.f32 %v4904, %v4905
    %v4907 = vand.u32 %v4906, 4294901760
    %4908 = vmatpush.msra.mxu0 %v4907
    %v4909 = vand.u32 %v179, 4294901760
    %v4910 = vsub.f32 %v179, %v4909
    %v4911 = vand.u32 %v4910, 4294901760
    %v4912 = vsub.f32 %v4910, %v4911
    %v4913 = vand.u32 %v4912, 4294901760
    %4914 = vmatpush.msra.mxu0 %v4913
    %v4915 = vand.u32 %v173, 4294901760
    %v4916 = vsub.f32 %v173, %v4915
    %v4917 = vand.u32 %v4916, 4294901760
    %v4918 = vsub.f32 %v4916, %v4917
    %v4919 = vand.u32 %v4918, 4294901760
    %4920 = vmatpush.msra.mxu0 %v4919
    %v4921 = vand.u32 %v167, 4294901760
    %v4922 = vsub.f32 %v167, %v4921
    %v4923 = vand.u32 %v4922, 4294901760
    %v4924 = vsub.f32 %v4922, %v4923
    %v4925 = vand.u32 %v4924, 4294901760
    %4926 = vmatpush.msra.mxu0 %v4925
    %v4927 = vand.u32 %v161, 4294901760
    %v4928 = vsub.f32 %v161, %v4927
    %v4929 = vand.u32 %v4928, 4294901760
    %v4930 = vsub.f32 %v4928, %v4929
    %v4931 = vand.u32 %v4930, 4294901760
    %4932 = vmatpush.msra.mxu0 %v4931
    %v4933 = vand.u32 %v59, 4294901760
    %4934 = vmatmul.f32.gmra.mxu0 %v4933
    %v4935 = vpop.f32.mrf.mxu0
    %v4936 = vadd.f32 %v4835, %v4935
    %4937 = vdwg.mxu0
    %v4938 = vand.u32 %v251, 4294901760
    %v4939 = vsub.f32 %v251, %v4938
    %4940 = vmatpush.msra.mxu0 %v4939
    %v4941 = vand.u32 %v245, 4294901760
    %v4942 = vsub.f32 %v245, %v4941
    %4943 = vmatpush.msra.mxu0 %v4942
    %v4944 = vand.u32 %v239, 4294901760
    %v4945 = vsub.f32 %v239, %v4944
    %4946 = vmatpush.msra.mxu0 %v4945
    %v4947 = vand.u32 %v233, 4294901760
    %v4948 = vsub.f32 %v233, %v4947
    %4949 = vmatpush.msra.mxu0 %v4948
    %v4950 = vand.u32 %v227, 4294901760
    %v4951 = vsub.f32 %v227, %v4950
    %4952 = vmatpush.msra.mxu0 %v4951
    %v4953 = vand.u32 %v221, 4294901760
    %v4954 = vsub.f32 %v221, %v4953
    %4955 = vmatpush.msra.mxu0 %v4954
    %v4956 = vand.u32 %v215, 4294901760
    %v4957 = vsub.f32 %v215, %v4956
    %4958 = vmatpush.msra.mxu0 %v4957
    %v4959 = vand.u32 %v209, 4294901760
    %v4960 = vsub.f32 %v209, %v4959
    %4961 = vmatpush.msra.mxu0 %v4960
    %v4962 = vand.u32 %v203, 4294901760
    %v4963 = vsub.f32 %v203, %v4962
    %4964 = vmatpush.msra.mxu0 %v4963
    %v4965 = vand.u32 %v197, 4294901760
    %v4966 = vsub.f32 %v197, %v4965
    %4967 = vmatpush.msra.mxu0 %v4966
    %v4968 = vand.u32 %v191, 4294901760
    %v4969 = vsub.f32 %v191, %v4968
    %4970 = vmatpush.msra.mxu0 %v4969
    %v4971 = vand.u32 %v185, 4294901760
    %v4972 = vsub.f32 %v185, %v4971
    %4973 = vmatpush.msra.mxu0 %v4972
    %v4974 = vand.u32 %v179, 4294901760
    %v4975 = vsub.f32 %v179, %v4974
    %4976 = vmatpush.msra.mxu0 %v4975
    %v4977 = vand.u32 %v173, 4294901760
    %v4978 = vsub.f32 %v173, %v4977
    %4979 = vmatpush.msra.mxu0 %v4978
    %v4980 = vand.u32 %v167, 4294901760
    %v4981 = vsub.f32 %v167, %v4980
    %4982 = vmatpush.msra.mxu0 %v4981
    %v4983 = vand.u32 %v161, 4294901760
    %v4984 = vsub.f32 %v161, %v4983
    %4985 = vmatpush.msra.mxu0 %v4984
    %v4986 = vand.u32 %v59, 4294901760
    %v4987 = vsub.f32 %v59, %v4986
    %4988 = vmatmul.f32.gmra.mxu0 %v4987
    %v4989 = vpop.f32.mrf.mxu0
    %v4990 = vadd.f32 %v4936, %v4989
    %4991 = vdwg.mxu0
    %v4992 = vand.u32 %v251, 4294901760
    %4993 = vmatpush.msra.mxu0 %v4992
    %v4994 = vand.u32 %v245, 4294901760
    %4995 = vmatpush.msra.mxu0 %v4994
    %v4996 = vand.u32 %v239, 4294901760
    %4997 = vmatpush.msra.mxu0 %v4996
    %v4998 = vand.u32 %v233, 4294901760
    %4999 = vmatpush.msra.mxu0 %v4998
    %v5000 = vand.u32 %v227, 4294901760
    %5001 = vmatpush.msra.mxu0 %v5000
    %v5002 = vand.u32 %v221, 4294901760
    %5003 = vmatpush.msra.mxu0 %v5002
    %v5004 = vand.u32 %v215, 4294901760
    %5005 = vmatpush.msra.mxu0 %v5004
    %v5006 = vand.u32 %v209, 4294901760
    %5007 = vmatpush.msra.mxu0 %v5006
    %v5008 = vand.u32 %v203, 4294901760
    %5009 = vmatpush.msra.mxu0 %v5008
    %v5010 = vand.u32 %v197, 4294901760
    %5011 = vmatpush.msra.mxu0 %v5010
    %v5012 = vand.u32 %v191, 4294901760
    %5013 = vmatpush.msra.mxu0 %v5012
    %v5014 = vand.u32 %v185, 4294901760
    %5015 = vmatpush.msra.mxu0 %v5014
    %v5016 = vand.u32 %v179, 4294901760
    %5017 = vmatpush.msra.mxu0 %v5016
    %v5018 = vand.u32 %v173, 4294901760
    %5019 = vmatpush.msra.mxu0 %v5018
    %v5020 = vand.u32 %v167, 4294901760
    %5021 = vmatpush.msra.mxu0 %v5020
    %v5022 = vand.u32 %v161, 4294901760
    %5023 = vmatpush.msra.mxu0 %v5022
    %v5024 = vand.u32 %v59, 4294901760
    %v5025 = vsub.f32 %v59, %v5024
    %v5026 = vand.u32 %v5025, 4294901760
    %5027 = vmatmul.f32.gmra.mxu0 %v5026
    %v5028 = vpop.f32.mrf.mxu0
    %v5029 = vadd.f32 %v4990, %v5028
    %5030 = vdwg.mxu0
    %v5031 = vand.u32 %v251, 4294901760
    %v5032 = vsub.f32 %v251, %v5031
    %v5033 = vand.u32 %v5032, 4294901760
    %5034 = vmatpush.msra.mxu0 %v5033
    %v5035 = vand.u32 %v245, 4294901760
    %v5036 = vsub.f32 %v245, %v5035
    %v5037 = vand.u32 %v5036, 4294901760
    %5038 = vmatpush.msra.mxu0 %v5037
    %v5039 = vand.u32 %v239, 4294901760
    %v5040 = vsub.f32 %v239, %v5039
    %v5041 = vand.u32 %v5040, 4294901760
    %5042 = vmatpush.msra.mxu0 %v5041
    %v5043 = vand.u32 %v233, 4294901760
    %v5044 = vsub.f32 %v233, %v5043
    %v5045 = vand.u32 %v5044, 4294901760
    %5046 = vmatpush.msra.mxu0 %v5045
    %v5047 = vand.u32 %v227, 4294901760
    %v5048 = vsub.f32 %v227, %v5047
    %v5049 = vand.u32 %v5048, 4294901760
    %5050 = vmatpush.msra.mxu0 %v5049
    %v5051 = vand.u32 %v221, 4294901760
    %v5052 = vsub.f32 %v221, %v5051
    %v5053 = vand.u32 %v5052, 4294901760
    %5054 = vmatpush.msra.mxu0 %v5053
    %v5055 = vand.u32 %v215, 4294901760
    %v5056 = vsub.f32 %v215, %v5055
    %v5057 = vand.u32 %v5056, 4294901760
    %5058 = vmatpush.msra.mxu0 %v5057
    %v5059 = vand.u32 %v209, 4294901760
    %v5060 = vsub.f32 %v209, %v5059
    %v5061 = vand.u32 %v5060, 4294901760
    %5062 = vmatpush.msra.mxu0 %v5061
    %v5063 = vand.u32 %v203, 4294901760
    %v5064 = vsub.f32 %v203, %v5063
    %v5065 = vand.u32 %v5064, 4294901760
    %5066 = vmatpush.msra.mxu0 %v5065
    %v5067 = vand.u32 %v197, 4294901760
    %v5068 = vsub.f32 %v197, %v5067
    %v5069 = vand.u32 %v5068, 4294901760
    %5070 = vmatpush.msra.mxu0 %v5069
    %v5071 = vand.u32 %v191, 4294901760
    %v5072 = vsub.f32 %v191, %v5071
    %v5073 = vand.u32 %v5072, 4294901760
    %5074 = vmatpush.msra.mxu0 %v5073
    %v5075 = vand.u32 %v185, 4294901760
    %v5076 = vsub.f32 %v185, %v5075
    %v5077 = vand.u32 %v5076, 4294901760
    %5078 = vmatpush.msra.mxu0 %v5077
    %v5079 = vand.u32 %v179, 4294901760
    %v5080 = vsub.f32 %v179, %v5079
    %v5081 = vand.u32 %v5080, 4294901760
    %5082 = vmatpush.msra.mxu0 %v5081
    %v5083 = vand.u32 %v173, 4294901760
    %v5084 = vsub.f32 %v173, %v5083
    %v5085 = vand.u32 %v5084, 4294901760
    %5086 = vmatpush.msra.mxu0 %v5085
    %v5087 = vand.u32 %v167, 4294901760
    %v5088 = vsub.f32 %v167, %v5087
    %v5089 = vand.u32 %v5088, 4294901760
    %5090 = vmatpush.msra.mxu0 %v5089
    %v5091 = vand.u32 %v161, 4294901760
    %v5092 = vsub.f32 %v161, %v5091
    %v5093 = vand.u32 %v5092, 4294901760
    %5094 = vmatpush.msra.mxu0 %v5093
    %v5095 = vand.u32 %v59, 4294901760
    %5096 = vmatmul.f32.gmra.mxu0 %v5095
    %v5097 = vpop.f32.mrf.mxu0
    %v5098 = vadd.f32 %v5029, %v5097
    %5099 = vdwg.mxu0
    %v5100 = vand.u32 %v251, 4294901760
    %5101 = vmatpush.msra.mxu0 %v5100
    %v5102 = vand.u32 %v245, 4294901760
    %5103 = vmatpush.msra.mxu0 %v5102
    %v5104 = vand.u32 %v239, 4294901760
    %5105 = vmatpush.msra.mxu0 %v5104
    %v5106 = vand.u32 %v233, 4294901760
    %5107 = vmatpush.msra.mxu0 %v5106
    %v5108 = vand.u32 %v227, 4294901760
    %5109 = vmatpush.msra.mxu0 %v5108
    %v5110 = vand.u32 %v221, 4294901760
    %5111 = vmatpush.msra.mxu0 %v5110
    %v5112 = vand.u32 %v215, 4294901760
    %5113 = vmatpush.msra.mxu0 %v5112
    %v5114 = vand.u32 %v209, 4294901760
    %5115 = vmatpush.msra.mxu0 %v5114
    %v5116 = vand.u32 %v203, 4294901760
    %5117 = vmatpush.msra.mxu0 %v5116
    %v5118 = vand.u32 %v197, 4294901760
    %5119 = vmatpush.msra.mxu0 %v5118
    %v5120 = vand.u32 %v191, 4294901760
    %5121 = vmatpush.msra.mxu0 %v5120
    %v5122 = vand.u32 %v185, 4294901760
    %5123 = vmatpush.msra.mxu0 %v5122
    %v5124 = vand.u32 %v179, 4294901760
    %5125 = vmatpush.msra.mxu0 %v5124
    %v5126 = vand.u32 %v173, 4294901760
    %5127 = vmatpush.msra.mxu0 %v5126
    %v5128 = vand.u32 %v167, 4294901760
    %5129 = vmatpush.msra.mxu0 %v5128
    %v5130 = vand.u32 %v161, 4294901760
    %5131 = vmatpush.msra.mxu0 %v5130
    %v5132 = vand.u32 %v59, 4294901760
    %5133 = vmatmul.f32.gmra.mxu0 %v5132
    %v5134 = vpop.f32.mrf.mxu0
    %v5135 = vadd.f32 %v5098, %v5134
    %5136 = vdwg.mxu0
    %v5137 = vand.u32 %v347, 4294901760
    %5138 = vmatpush.msra.mxu0 %v5137
    %v5139 = vand.u32 %v341, 4294901760
    %5140 = vmatpush.msra.mxu0 %v5139
    %v5141 = vand.u32 %v335, 4294901760
    %5142 = vmatpush.msra.mxu0 %v5141
    %v5143 = vand.u32 %v329, 4294901760
    %5144 = vmatpush.msra.mxu0 %v5143
    %v5145 = vand.u32 %v323, 4294901760
    %5146 = vmatpush.msra.mxu0 %v5145
    %v5147 = vand.u32 %v317, 4294901760
    %5148 = vmatpush.msra.mxu0 %v5147
    %v5149 = vand.u32 %v311, 4294901760
    %5150 = vmatpush.msra.mxu0 %v5149
    %v5151 = vand.u32 %v305, 4294901760
    %5152 = vmatpush.msra.mxu0 %v5151
    %v5153 = vand.u32 %v299, 4294901760
    %5154 = vmatpush.msra.mxu0 %v5153
    %v5155 = vand.u32 %v293, 4294901760
    %5156 = vmatpush.msra.mxu0 %v5155
    %v5157 = vand.u32 %v287, 4294901760
    %5158 = vmatpush.msra.mxu0 %v5157
    %v5159 = vand.u32 %v281, 4294901760
    %5160 = vmatpush.msra.mxu0 %v5159
    %v5161 = vand.u32 %v275, 4294901760
    %5162 = vmatpush.msra.mxu0 %v5161
    %v5163 = vand.u32 %v269, 4294901760
    %5164 = vmatpush.msra.mxu0 %v5163
    %v5165 = vand.u32 %v263, 4294901760
    %5166 = vmatpush.msra.mxu0 %v5165
    %v5167 = vand.u32 %v257, 4294901760
    %5168 = vmatpush.msra.mxu0 %v5167
    %v5169 = vand.u32 %v60, 4294901760
    %v5170 = vsub.f32 %v60, %v5169
    %v5171 = vand.u32 %v5170, 4294901760
    %v5172 = vsub.f32 %v5170, %v5171
    %v5173 = vand.u32 %v5172, 4294901760
    %5174 = vmatmul.f32.gmra.mxu0 %v5173
    %v5175 = vpop.f32.mrf.mxu0
    %v5176 = vadd.f32 %v5135, %v5175
    %5177 = vdwg.mxu0
    %v5178 = vand.u32 %v347, 4294901760
    %v5179 = vsub.f32 %v347, %v5178
    %v5180 = vand.u32 %v5179, 4294901760
    %v5181 = vsub.f32 %v5179, %v5180
    %v5182 = vand.u32 %v5181, 4294901760
    %5183 = vmatpush.msra.mxu0 %v5182
    %v5184 = vand.u32 %v341, 4294901760
    %v5185 = vsub.f32 %v341, %v5184
    %v5186 = vand.u32 %v5185, 4294901760
    %v5187 = vsub.f32 %v5185, %v5186
    %v5188 = vand.u32 %v5187, 4294901760
    %5189 = vmatpush.msra.mxu0 %v5188
    %v5190 = vand.u32 %v335, 4294901760
    %v5191 = vsub.f32 %v335, %v5190
    %v5192 = vand.u32 %v5191, 4294901760
    %v5193 = vsub.f32 %v5191, %v5192
    %v5194 = vand.u32 %v5193, 4294901760
    %5195 = vmatpush.msra.mxu0 %v5194
    %v5196 = vand.u32 %v329, 4294901760
    %v5197 = vsub.f32 %v329, %v5196
    %v5198 = vand.u32 %v5197, 4294901760
    %v5199 = vsub.f32 %v5197, %v5198
    %v5200 = vand.u32 %v5199, 4294901760
    %5201 = vmatpush.msra.mxu0 %v5200
    %v5202 = vand.u32 %v323, 4294901760
    %v5203 = vsub.f32 %v323, %v5202
    %v5204 = vand.u32 %v5203, 4294901760
    %v5205 = vsub.f32 %v5203, %v5204
    %v5206 = vand.u32 %v5205, 4294901760
    %5207 = vmatpush.msra.mxu0 %v5206
    %v5208 = vand.u32 %v317, 4294901760
    %v5209 = vsub.f32 %v317, %v5208
    %v5210 = vand.u32 %v5209, 4294901760
    %v5211 = vsub.f32 %v5209, %v5210
    %v5212 = vand.u32 %v5211, 4294901760
    %5213 = vmatpush.msra.mxu0 %v5212
    %v5214 = vand.u32 %v311, 4294901760
    %v5215 = vsub.f32 %v311, %v5214
    %v5216 = vand.u32 %v5215, 4294901760
    %v5217 = vsub.f32 %v5215, %v5216
    %v5218 = vand.u32 %v5217, 4294901760
    %5219 = vmatpush.msra.mxu0 %v5218
    %v5220 = vand.u32 %v305, 4294901760
    %v5221 = vsub.f32 %v305, %v5220
    %v5222 = vand.u32 %v5221, 4294901760
    %v5223 = vsub.f32 %v5221, %v5222
    %v5224 = vand.u32 %v5223, 4294901760
    %5225 = vmatpush.msra.mxu0 %v5224
    %v5226 = vand.u32 %v299, 4294901760
    %v5227 = vsub.f32 %v299, %v5226
    %v5228 = vand.u32 %v5227, 4294901760
    %v5229 = vsub.f32 %v5227, %v5228
    %v5230 = vand.u32 %v5229, 4294901760
    %5231 = vmatpush.msra.mxu0 %v5230
    %v5232 = vand.u32 %v293, 4294901760
    %v5233 = vsub.f32 %v293, %v5232
    %v5234 = vand.u32 %v5233, 4294901760
    %v5235 = vsub.f32 %v5233, %v5234
    %v5236 = vand.u32 %v5235, 4294901760
    %5237 = vmatpush.msra.mxu0 %v5236
    %v5238 = vand.u32 %v287, 4294901760
    %v5239 = vsub.f32 %v287, %v5238
    %v5240 = vand.u32 %v5239, 4294901760
    %v5241 = vsub.f32 %v5239, %v5240
    %v5242 = vand.u32 %v5241, 4294901760
    %5243 = vmatpush.msra.mxu0 %v5242
    %v5244 = vand.u32 %v281, 4294901760
    %v5245 = vsub.f32 %v281, %v5244
    %v5246 = vand.u32 %v5245, 4294901760
    %v5247 = vsub.f32 %v5245, %v5246
    %v5248 = vand.u32 %v5247, 4294901760
    %5249 = vmatpush.msra.mxu0 %v5248
    %v5250 = vand.u32 %v275, 4294901760
    %v5251 = vsub.f32 %v275, %v5250
    %v5252 = vand.u32 %v5251, 4294901760
    %v5253 = vsub.f32 %v5251, %v5252
    %v5254 = vand.u32 %v5253, 4294901760
    %5255 = vmatpush.msra.mxu0 %v5254
    %v5256 = vand.u32 %v269, 4294901760
    %v5257 = vsub.f32 %v269, %v5256
    %v5258 = vand.u32 %v5257, 4294901760
    %v5259 = vsub.f32 %v5257, %v5258
    %v5260 = vand.u32 %v5259, 4294901760
    %5261 = vmatpush.msra.mxu0 %v5260
    %v5262 = vand.u32 %v263, 4294901760
    %v5263 = vsub.f32 %v263, %v5262
    %v5264 = vand.u32 %v5263, 4294901760
    %v5265 = vsub.f32 %v5263, %v5264
    %v5266 = vand.u32 %v5265, 4294901760
    %5267 = vmatpush.msra.mxu0 %v5266
    %v5268 = vand.u32 %v257, 4294901760
    %v5269 = vsub.f32 %v257, %v5268
    %v5270 = vand.u32 %v5269, 4294901760
    %v5271 = vsub.f32 %v5269, %v5270
    %v5272 = vand.u32 %v5271, 4294901760
    %5273 = vmatpush.msra.mxu0 %v5272
    %v5274 = vand.u32 %v60, 4294901760
    %5275 = vmatmul.f32.gmra.mxu0 %v5274
    %v5276 = vpop.f32.mrf.mxu0
    %v5277 = vadd.f32 %v5176, %v5276
    %5278 = vdwg.mxu0
    %v5279 = vand.u32 %v347, 4294901760
    %v5280 = vsub.f32 %v347, %v5279
    %5281 = vmatpush.msra.mxu0 %v5280
    %v5282 = vand.u32 %v341, 4294901760
    %v5283 = vsub.f32 %v341, %v5282
    %5284 = vmatpush.msra.mxu0 %v5283
    %v5285 = vand.u32 %v335, 4294901760
    %v5286 = vsub.f32 %v335, %v5285
    %5287 = vmatpush.msra.mxu0 %v5286
    %v5288 = vand.u32 %v329, 4294901760
    %v5289 = vsub.f32 %v329, %v5288
    %5290 = vmatpush.msra.mxu0 %v5289
    %v5291 = vand.u32 %v323, 4294901760
    %v5292 = vsub.f32 %v323, %v5291
    %5293 = vmatpush.msra.mxu0 %v5292
    %v5294 = vand.u32 %v317, 4294901760
    %v5295 = vsub.f32 %v317, %v5294
    %5296 = vmatpush.msra.mxu0 %v5295
    %v5297 = vand.u32 %v311, 4294901760
    %v5298 = vsub.f32 %v311, %v5297
    %5299 = vmatpush.msra.mxu0 %v5298
    %v5300 = vand.u32 %v305, 4294901760
    %v5301 = vsub.f32 %v305, %v5300
    %5302 = vmatpush.msra.mxu0 %v5301
    %v5303 = vand.u32 %v299, 4294901760
    %v5304 = vsub.f32 %v299, %v5303
    %5305 = vmatpush.msra.mxu0 %v5304
    %v5306 = vand.u32 %v293, 4294901760
    %v5307 = vsub.f32 %v293, %v5306
    %5308 = vmatpush.msra.mxu0 %v5307
    %v5309 = vand.u32 %v287, 4294901760
    %v5310 = vsub.f32 %v287, %v5309
    %5311 = vmatpush.msra.mxu0 %v5310
    %v5312 = vand.u32 %v281, 4294901760
    %v5313 = vsub.f32 %v281, %v5312
    %5314 = vmatpush.msra.mxu0 %v5313
    %v5315 = vand.u32 %v275, 4294901760
    %v5316 = vsub.f32 %v275, %v5315
    %5317 = vmatpush.msra.mxu0 %v5316
    %v5318 = vand.u32 %v269, 4294901760
    %v5319 = vsub.f32 %v269, %v5318
    %5320 = vmatpush.msra.mxu0 %v5319
    %v5321 = vand.u32 %v263, 4294901760
    %v5322 = vsub.f32 %v263, %v5321
    %5323 = vmatpush.msra.mxu0 %v5322
    %v5324 = vand.u32 %v257, 4294901760
    %v5325 = vsub.f32 %v257, %v5324
    %5326 = vmatpush.msra.mxu0 %v5325
    %v5327 = vand.u32 %v60, 4294901760
    %v5328 = vsub.f32 %v60, %v5327
    %5329 = vmatmul.f32.gmra.mxu0 %v5328
    %v5330 = vpop.f32.mrf.mxu0
    %v5331 = vadd.f32 %v5277, %v5330
    %5332 = vdwg.mxu0
    %v5333 = vand.u32 %v347, 4294901760
    %5334 = vmatpush.msra.mxu0 %v5333
    %v5335 = vand.u32 %v341, 4294901760
    %5336 = vmatpush.msra.mxu0 %v5335
    %v5337 = vand.u32 %v335, 4294901760
    %5338 = vmatpush.msra.mxu0 %v5337
    %v5339 = vand.u32 %v329, 4294901760
    %5340 = vmatpush.msra.mxu0 %v5339
    %v5341 = vand.u32 %v323, 4294901760
    %5342 = vmatpush.msra.mxu0 %v5341
    %v5343 = vand.u32 %v317, 4294901760
    %5344 = vmatpush.msra.mxu0 %v5343
    %v5345 = vand.u32 %v311, 4294901760
    %5346 = vmatpush.msra.mxu0 %v5345
    %v5347 = vand.u32 %v305, 4294901760
    %5348 = vmatpush.msra.mxu0 %v5347
    %v5349 = vand.u32 %v299, 4294901760
    %5350 = vmatpush.msra.mxu0 %v5349
    %v5351 = vand.u32 %v293, 4294901760
    %5352 = vmatpush.msra.mxu0 %v5351
    %v5353 = vand.u32 %v287, 4294901760
    %5354 = vmatpush.msra.mxu0 %v5353
    %v5355 = vand.u32 %v281, 4294901760
    %5356 = vmatpush.msra.mxu0 %v5355
    %v5357 = vand.u32 %v275, 4294901760
    %5358 = vmatpush.msra.mxu0 %v5357
    %v5359 = vand.u32 %v269, 4294901760
    %5360 = vmatpush.msra.mxu0 %v5359
    %v5361 = vand.u32 %v263, 4294901760
    %5362 = vmatpush.msra.mxu0 %v5361
    %v5363 = vand.u32 %v257, 4294901760
    %5364 = vmatpush.msra.mxu0 %v5363
    %v5365 = vand.u32 %v60, 4294901760
    %v5366 = vsub.f32 %v60, %v5365
    %v5367 = vand.u32 %v5366, 4294901760
    %5368 = vmatmul.f32.gmra.mxu0 %v5367
    %v5369 = vpop.f32.mrf.mxu0
    %v5370 = vadd.f32 %v5331, %v5369
    %5371 = vdwg.mxu0
    %v5372 = vand.u32 %v347, 4294901760
    %v5373 = vsub.f32 %v347, %v5372
    %v5374 = vand.u32 %v5373, 4294901760
    %5375 = vmatpush.msra.mxu0 %v5374
    %v5376 = vand.u32 %v341, 4294901760
    %v5377 = vsub.f32 %v341, %v5376
    %v5378 = vand.u32 %v5377, 4294901760
    %5379 = vmatpush.msra.mxu0 %v5378
    %v5380 = vand.u32 %v335, 4294901760
    %v5381 = vsub.f32 %v335, %v5380
    %v5382 = vand.u32 %v5381, 4294901760
    %5383 = vmatpush.msra.mxu0 %v5382
    %v5384 = vand.u32 %v329, 4294901760
    %v5385 = vsub.f32 %v329, %v5384
    %v5386 = vand.u32 %v5385, 4294901760
    %5387 = vmatpush.msra.mxu0 %v5386
    %v5388 = vand.u32 %v323, 4294901760
    %v5389 = vsub.f32 %v323, %v5388
    %v5390 = vand.u32 %v5389, 4294901760
    %5391 = vmatpush.msra.mxu0 %v5390
    %v5392 = vand.u32 %v317, 4294901760
    %v5393 = vsub.f32 %v317, %v5392
    %v5394 = vand.u32 %v5393, 4294901760
    %5395 = vmatpush.msra.mxu0 %v5394
    %v5396 = vand.u32 %v311, 4294901760
    %v5397 = vsub.f32 %v311, %v5396
    %v5398 = vand.u32 %v5397, 4294901760
    %5399 = vmatpush.msra.mxu0 %v5398
    %v5400 = vand.u32 %v305, 4294901760
    %v5401 = vsub.f32 %v305, %v5400
    %v5402 = vand.u32 %v5401, 4294901760
    %5403 = vmatpush.msra.mxu0 %v5402
    %v5404 = vand.u32 %v299, 4294901760
    %v5405 = vsub.f32 %v299, %v5404
    %v5406 = vand.u32 %v5405, 4294901760
    %5407 = vmatpush.msra.mxu0 %v5406
    %v5408 = vand.u32 %v293, 4294901760
    %v5409 = vsub.f32 %v293, %v5408
    %v5410 = vand.u32 %v5409, 4294901760
    %5411 = vmatpush.msra.mxu0 %v5410
    %v5412 = vand.u32 %v287, 4294901760
    %v5413 = vsub.f32 %v287, %v5412
    %v5414 = vand.u32 %v5413, 4294901760
    %5415 = vmatpush.msra.mxu0 %v5414
    %v5416 = vand.u32 %v281, 4294901760
    %v5417 = vsub.f32 %v281, %v5416
    %v5418 = vand.u32 %v5417, 4294901760
    %5419 = vmatpush.msra.mxu0 %v5418
    %v5420 = vand.u32 %v275, 4294901760
    %v5421 = vsub.f32 %v275, %v5420
    %v5422 = vand.u32 %v5421, 4294901760
    %5423 = vmatpush.msra.mxu0 %v5422
    %v5424 = vand.u32 %v269, 4294901760
    %v5425 = vsub.f32 %v269, %v5424
    %v5426 = vand.u32 %v5425, 4294901760
    %5427 = vmatpush.msra.mxu0 %v5426
    %v5428 = vand.u32 %v263, 4294901760
    %v5429 = vsub.f32 %v263, %v5428
    %v5430 = vand.u32 %v5429, 4294901760
    %5431 = vmatpush.msra.mxu0 %v5430
    %v5432 = vand.u32 %v257, 4294901760
    %v5433 = vsub.f32 %v257, %v5432
    %v5434 = vand.u32 %v5433, 4294901760
    %5435 = vmatpush.msra.mxu0 %v5434
    %v5436 = vand.u32 %v60, 4294901760
    %5437 = vmatmul.f32.gmra.mxu0 %v5436
    %v5438 = vpop.f32.mrf.mxu0
    %v5439 = vadd.f32 %v5370, %v5438
    %5440 = vdwg.mxu0
    %v5441 = vand.u32 %v347, 4294901760
    %5442 = vmatpush.msra.mxu0 %v5441
    %v5443 = vand.u32 %v341, 4294901760
    %5444 = vmatpush.msra.mxu0 %v5443
    %v5445 = vand.u32 %v335, 4294901760
    %5446 = vmatpush.msra.mxu0 %v5445
    %v5447 = vand.u32 %v329, 4294901760
    %5448 = vmatpush.msra.mxu0 %v5447
    %v5449 = vand.u32 %v323, 4294901760
    %5450 = vmatpush.msra.mxu0 %v5449
    %v5451 = vand.u32 %v317, 4294901760
    %5452 = vmatpush.msra.mxu0 %v5451
    %v5453 = vand.u32 %v311, 4294901760
    %5454 = vmatpush.msra.mxu0 %v5453
    %v5455 = vand.u32 %v305, 4294901760
    %5456 = vmatpush.msra.mxu0 %v5455
    %v5457 = vand.u32 %v299, 4294901760
    %5458 = vmatpush.msra.mxu0 %v5457
    %v5459 = vand.u32 %v293, 4294901760
    %5460 = vmatpush.msra.mxu0 %v5459
    %v5461 = vand.u32 %v287, 4294901760
    %5462 = vmatpush.msra.mxu0 %v5461
    %v5463 = vand.u32 %v281, 4294901760
    %5464 = vmatpush.msra.mxu0 %v5463
    %v5465 = vand.u32 %v275, 4294901760
    %5466 = vmatpush.msra.mxu0 %v5465
    %v5467 = vand.u32 %v269, 4294901760
    %5468 = vmatpush.msra.mxu0 %v5467
    %v5469 = vand.u32 %v263, 4294901760
    %5470 = vmatpush.msra.mxu0 %v5469
    %v5471 = vand.u32 %v257, 4294901760
    %5472 = vmatpush.msra.mxu0 %v5471
    %v5473 = vand.u32 %v60, 4294901760
    %5474 = vmatmul.f32.gmra.mxu0 %v5473
    %v5475 = vpop.f32.mrf.mxu0
    %v5476 = vadd.f32 %v5439, %v5475
    %5477 = vdwg.mxu0
    %v5478 = vand.u32 %v156, 4294901760
    %5479 = vmatpush.msra.mxu0 %v5478
    %v5480 = vand.u32 %v150, 4294901760
    %5481 = vmatpush.msra.mxu0 %v5480
    %v5482 = vand.u32 %v144, 4294901760
    %5483 = vmatpush.msra.mxu0 %v5482
    %v5484 = vand.u32 %v138, 4294901760
    %5485 = vmatpush.msra.mxu0 %v5484
    %v5486 = vand.u32 %v132, 4294901760
    %5487 = vmatpush.msra.mxu0 %v5486
    %v5488 = vand.u32 %v126, 4294901760
    %5489 = vmatpush.msra.mxu0 %v5488
    %v5490 = vand.u32 %v120, 4294901760
    %5491 = vmatpush.msra.mxu0 %v5490
    %v5492 = vand.u32 %v114, 4294901760
    %5493 = vmatpush.msra.mxu0 %v5492
    %v5494 = vand.u32 %v108, 4294901760
    %5495 = vmatpush.msra.mxu0 %v5494
    %v5496 = vand.u32 %v102, 4294901760
    %5497 = vmatpush.msra.mxu0 %v5496
    %v5498 = vand.u32 %v96, 4294901760
    %5499 = vmatpush.msra.mxu0 %v5498
    %v5500 = vand.u32 %v90, 4294901760
    %5501 = vmatpush.msra.mxu0 %v5500
    %v5502 = vand.u32 %v84, 4294901760
    %5503 = vmatpush.msra.mxu0 %v5502
    %v5504 = vand.u32 %v78, 4294901760
    %5505 = vmatpush.msra.mxu0 %v5504
    %v5506 = vand.u32 %v72, 4294901760
    %5507 = vmatpush.msra.mxu0 %v5506
    %v5508 = vand.u32 %v66, 4294901760
    %5509 = vmatpush.msra.mxu0 %v5508
    %v5510 = vand.u32 %v58, 4294901760
    %v5511 = vsub.f32 %v58, %v5510
    %v5512 = vand.u32 %v5511, 4294901760
    %v5513 = vsub.f32 %v5511, %v5512
    %v5514 = vand.u32 %v5513, 4294901760
    %5515 = vmatmul.f32.gmra.mxu0 %v5514
    %v5516 = vpop.f32.mrf.mxu0
    %v5517 = vadd.f32 %v356, %v5516
    %5518 = vdwg.mxu0
    %v5519 = vand.u32 %v156, 4294901760
    %v5520 = vsub.f32 %v156, %v5519
    %v5521 = vand.u32 %v5520, 4294901760
    %v5522 = vsub.f32 %v5520, %v5521
    %v5523 = vand.u32 %v5522, 4294901760
    %5524 = vmatpush.msra.mxu0 %v5523
    %v5525 = vand.u32 %v150, 4294901760
    %v5526 = vsub.f32 %v150, %v5525
    %v5527 = vand.u32 %v5526, 4294901760
    %v5528 = vsub.f32 %v5526, %v5527
    %v5529 = vand.u32 %v5528, 4294901760
    %5530 = vmatpush.msra.mxu0 %v5529
    %v5531 = vand.u32 %v144, 4294901760
    %v5532 = vsub.f32 %v144, %v5531
    %v5533 = vand.u32 %v5532, 4294901760
    %v5534 = vsub.f32 %v5532, %v5533
    %v5535 = vand.u32 %v5534, 4294901760
    %5536 = vmatpush.msra.mxu0 %v5535
    %v5537 = vand.u32 %v138, 4294901760
    %v5538 = vsub.f32 %v138, %v5537
    %v5539 = vand.u32 %v5538, 4294901760
    %v5540 = vsub.f32 %v5538, %v5539
    %v5541 = vand.u32 %v5540, 4294901760
    %5542 = vmatpush.msra.mxu0 %v5541
    %v5543 = vand.u32 %v132, 4294901760
    %v5544 = vsub.f32 %v132, %v5543
    %v5545 = vand.u32 %v5544, 4294901760
    %v5546 = vsub.f32 %v5544, %v5545
    %v5547 = vand.u32 %v5546, 4294901760
    %5548 = vmatpush.msra.mxu0 %v5547
    %v5549 = vand.u32 %v126, 4294901760
    %v5550 = vsub.f32 %v126, %v5549
    %v5551 = vand.u32 %v5550, 4294901760
    %v5552 = vsub.f32 %v5550, %v5551
    %v5553 = vand.u32 %v5552, 4294901760
    %5554 = vmatpush.msra.mxu0 %v5553
    %v5555 = vand.u32 %v120, 4294901760
    %v5556 = vsub.f32 %v120, %v5555
    %v5557 = vand.u32 %v5556, 4294901760
    %v5558 = vsub.f32 %v5556, %v5557
    %v5559 = vand.u32 %v5558, 4294901760
    %5560 = vmatpush.msra.mxu0 %v5559
    %v5561 = vand.u32 %v114, 4294901760
    %v5562 = vsub.f32 %v114, %v5561
    %v5563 = vand.u32 %v5562, 4294901760
    %v5564 = vsub.f32 %v5562, %v5563
    %v5565 = vand.u32 %v5564, 4294901760
    %5566 = vmatpush.msra.mxu0 %v5565
    %v5567 = vand.u32 %v108, 4294901760
    %v5568 = vsub.f32 %v108, %v5567
    %v5569 = vand.u32 %v5568, 4294901760
    %v5570 = vsub.f32 %v5568, %v5569
    %v5571 = vand.u32 %v5570, 4294901760
    %5572 = vmatpush.msra.mxu0 %v5571
    %v5573 = vand.u32 %v102, 4294901760
    %v5574 = vsub.f32 %v102, %v5573
    %v5575 = vand.u32 %v5574, 4294901760
    %v5576 = vsub.f32 %v5574, %v5575
    %v5577 = vand.u32 %v5576, 4294901760
    %5578 = vmatpush.msra.mxu0 %v5577
    %v5579 = vand.u32 %v96, 4294901760
    %v5580 = vsub.f32 %v96, %v5579
    %v5581 = vand.u32 %v5580, 4294901760
    %v5582 = vsub.f32 %v5580, %v5581
    %v5583 = vand.u32 %v5582, 4294901760
    %5584 = vmatpush.msra.mxu0 %v5583
    %v5585 = vand.u32 %v90, 4294901760
    %v5586 = vsub.f32 %v90, %v5585
    %v5587 = vand.u32 %v5586, 4294901760
    %v5588 = vsub.f32 %v5586, %v5587
    %v5589 = vand.u32 %v5588, 4294901760
    %5590 = vmatpush.msra.mxu0 %v5589
    %v5591 = vand.u32 %v84, 4294901760
    %v5592 = vsub.f32 %v84, %v5591
    %v5593 = vand.u32 %v5592, 4294901760
    %v5594 = vsub.f32 %v5592, %v5593
    %v5595 = vand.u32 %v5594, 4294901760
    %5596 = vmatpush.msra.mxu0 %v5595
    %v5597 = vand.u32 %v78, 4294901760
    %v5598 = vsub.f32 %v78, %v5597
    %v5599 = vand.u32 %v5598, 4294901760
    %v5600 = vsub.f32 %v5598, %v5599
    %v5601 = vand.u32 %v5600, 4294901760
    %5602 = vmatpush.msra.mxu0 %v5601
    %v5603 = vand.u32 %v72, 4294901760
    %v5604 = vsub.f32 %v72, %v5603
    %v5605 = vand.u32 %v5604, 4294901760
    %v5606 = vsub.f32 %v5604, %v5605
    %v5607 = vand.u32 %v5606, 4294901760
    %5608 = vmatpush.msra.mxu0 %v5607
    %v5609 = vand.u32 %v66, 4294901760
    %v5610 = vsub.f32 %v66, %v5609
    %v5611 = vand.u32 %v5610, 4294901760
    %v5612 = vsub.f32 %v5610, %v5611
    %v5613 = vand.u32 %v5612, 4294901760
    %5614 = vmatpush.msra.mxu0 %v5613
    %v5615 = vand.u32 %v58, 4294901760
    %5616 = vmatmul.f32.gmra.mxu0 %v5615
    %v5617 = vpop.f32.mrf.mxu0
    %v5618 = vadd.f32 %v5517, %v5617
    %5619 = vdwg.mxu0
    %v5620 = vand.u32 %v156, 4294901760
    %v5621 = vsub.f32 %v156, %v5620
    %5622 = vmatpush.msra.mxu0 %v5621
    %v5623 = vand.u32 %v150, 4294901760
    %v5624 = vsub.f32 %v150, %v5623
    %5625 = vmatpush.msra.mxu0 %v5624
    %v5626 = vand.u32 %v144, 4294901760
    %v5627 = vsub.f32 %v144, %v5626
    %5628 = vmatpush.msra.mxu0 %v5627
    %v5629 = vand.u32 %v138, 4294901760
    %v5630 = vsub.f32 %v138, %v5629
    %5631 = vmatpush.msra.mxu0 %v5630
    %v5632 = vand.u32 %v132, 4294901760
    %v5633 = vsub.f32 %v132, %v5632
    %5634 = vmatpush.msra.mxu0 %v5633
    %v5635 = vand.u32 %v126, 4294901760
    %v5636 = vsub.f32 %v126, %v5635
    %5637 = vmatpush.msra.mxu0 %v5636
    %v5638 = vand.u32 %v120, 4294901760
    %v5639 = vsub.f32 %v120, %v5638
    %5640 = vmatpush.msra.mxu0 %v5639
    %v5641 = vand.u32 %v114, 4294901760
    %v5642 = vsub.f32 %v114, %v5641
    %5643 = vmatpush.msra.mxu0 %v5642
    %v5644 = vand.u32 %v108, 4294901760
    %v5645 = vsub.f32 %v108, %v5644
    %5646 = vmatpush.msra.mxu0 %v5645
    %v5647 = vand.u32 %v102, 4294901760
    %v5648 = vsub.f32 %v102, %v5647
    %5649 = vmatpush.msra.mxu0 %v5648
    %v5650 = vand.u32 %v96, 4294901760
    %v5651 = vsub.f32 %v96, %v5650
    %5652 = vmatpush.msra.mxu0 %v5651
    %v5653 = vand.u32 %v90, 4294901760
    %v5654 = vsub.f32 %v90, %v5653
    %5655 = vmatpush.msra.mxu0 %v5654
    %v5656 = vand.u32 %v84, 4294901760
    %v5657 = vsub.f32 %v84, %v5656
    %5658 = vmatpush.msra.mxu0 %v5657
    %v5659 = vand.u32 %v78, 4294901760
    %v5660 = vsub.f32 %v78, %v5659
    %5661 = vmatpush.msra.mxu0 %v5660
    %v5662 = vand.u32 %v72, 4294901760
    %v5663 = vsub.f32 %v72, %v5662
    %5664 = vmatpush.msra.mxu0 %v5663
    %v5665 = vand.u32 %v66, 4294901760
    %v5666 = vsub.f32 %v66, %v5665
    %5667 = vmatpush.msra.mxu0 %v5666
    %v5668 = vand.u32 %v58, 4294901760
    %v5669 = vsub.f32 %v58, %v5668
    %5670 = vmatmul.f32.gmra.mxu0 %v5669
    %v5671 = vpop.f32.mrf.mxu0
    %v5672 = vadd.f32 %v5618, %v5671
    %5673 = vdwg.mxu0
    %v5674 = vand.u32 %v156, 4294901760
    %5675 = vmatpush.msra.mxu0 %v5674
    %v5676 = vand.u32 %v150, 4294901760
    %5677 = vmatpush.msra.mxu0 %v5676
    %v5678 = vand.u32 %v144, 4294901760
    %5679 = vmatpush.msra.mxu0 %v5678
    %v5680 = vand.u32 %v138, 4294901760
    %5681 = vmatpush.msra.mxu0 %v5680
    %v5682 = vand.u32 %v132, 4294901760
    %5683 = vmatpush.msra.mxu0 %v5682
    %v5684 = vand.u32 %v126, 4294901760
    %5685 = vmatpush.msra.mxu0 %v5684
    %v5686 = vand.u32 %v120, 4294901760
    %5687 = vmatpush.msra.mxu0 %v5686
    %v5688 = vand.u32 %v114, 4294901760
    %5689 = vmatpush.msra.mxu0 %v5688
    %v5690 = vand.u32 %v108, 4294901760
    %5691 = vmatpush.msra.mxu0 %v5690
    %v5692 = vand.u32 %v102, 4294901760
    %5693 = vmatpush.msra.mxu0 %v5692
    %v5694 = vand.u32 %v96, 4294901760
    %5695 = vmatpush.msra.mxu0 %v5694
    %v5696 = vand.u32 %v90, 4294901760
    %5697 = vmatpush.msra.mxu0 %v5696
    %v5698 = vand.u32 %v84, 4294901760
    %5699 = vmatpush.msra.mxu0 %v5698
    %v5700 = vand.u32 %v78, 4294901760
    %5701 = vmatpush.msra.mxu0 %v5700
    %v5702 = vand.u32 %v72, 4294901760
    %5703 = vmatpush.msra.mxu0 %v5702
    %v5704 = vand.u32 %v66, 4294901760
    %5705 = vmatpush.msra.mxu0 %v5704
    %v5706 = vand.u32 %v58, 4294901760
    %v5707 = vsub.f32 %v58, %v5706
    %v5708 = vand.u32 %v5707, 4294901760
    %5709 = vmatmul.f32.gmra.mxu0 %v5708
    %v5710 = vpop.f32.mrf.mxu0
    %v5711 = vadd.f32 %v5672, %v5710
    %5712 = vdwg.mxu0
    %v5713 = vand.u32 %v156, 4294901760
    %v5714 = vsub.f32 %v156, %v5713
    %v5715 = vand.u32 %v5714, 4294901760
    %5716 = vmatpush.msra.mxu0 %v5715
    %v5717 = vand.u32 %v150, 4294901760
    %v5718 = vsub.f32 %v150, %v5717
    %v5719 = vand.u32 %v5718, 4294901760
    %5720 = vmatpush.msra.mxu0 %v5719
    %v5721 = vand.u32 %v144, 4294901760
    %v5722 = vsub.f32 %v144, %v5721
    %v5723 = vand.u32 %v5722, 4294901760
    %5724 = vmatpush.msra.mxu0 %v5723
    %v5725 = vand.u32 %v138, 4294901760
    %v5726 = vsub.f32 %v138, %v5725
    %v5727 = vand.u32 %v5726, 4294901760
    %5728 = vmatpush.msra.mxu0 %v5727
    %v5729 = vand.u32 %v132, 4294901760
    %v5730 = vsub.f32 %v132, %v5729
    %v5731 = vand.u32 %v5730, 4294901760
    %5732 = vmatpush.msra.mxu0 %v5731
    %v5733 = vand.u32 %v126, 4294901760
    %v5734 = vsub.f32 %v126, %v5733
    %v5735 = vand.u32 %v5734, 4294901760
    %5736 = vmatpush.msra.mxu0 %v5735
    %v5737 = vand.u32 %v120, 4294901760
    %v5738 = vsub.f32 %v120, %v5737
    %v5739 = vand.u32 %v5738, 4294901760
    %5740 = vmatpush.msra.mxu0 %v5739
    %v5741 = vand.u32 %v114, 4294901760
    %v5742 = vsub.f32 %v114, %v5741
    %v5743 = vand.u32 %v5742, 4294901760
    %5744 = vmatpush.msra.mxu0 %v5743
    %v5745 = vand.u32 %v108, 4294901760
    %v5746 = vsub.f32 %v108, %v5745
    %v5747 = vand.u32 %v5746, 4294901760
    %5748 = vmatpush.msra.mxu0 %v5747
    %v5749 = vand.u32 %v102, 4294901760
    %v5750 = vsub.f32 %v102, %v5749
    %v5751 = vand.u32 %v5750, 4294901760
    %5752 = vmatpush.msra.mxu0 %v5751
    %v5753 = vand.u32 %v96, 4294901760
    %v5754 = vsub.f32 %v96, %v5753
    %v5755 = vand.u32 %v5754, 4294901760
    %5756 = vmatpush.msra.mxu0 %v5755
    %v5757 = vand.u32 %v90, 4294901760
    %v5758 = vsub.f32 %v90, %v5757
    %v5759 = vand.u32 %v5758, 4294901760
    %5760 = vmatpush.msra.mxu0 %v5759
    %v5761 = vand.u32 %v84, 4294901760
    %v5762 = vsub.f32 %v84, %v5761
    %v5763 = vand.u32 %v5762, 4294901760
    %5764 = vmatpush.msra.mxu0 %v5763
    %v5765 = vand.u32 %v78, 4294901760
    %v5766 = vsub.f32 %v78, %v5765
    %v5767 = vand.u32 %v5766, 4294901760
    %5768 = vmatpush.msra.mxu0 %v5767
    %v5769 = vand.u32 %v72, 4294901760
    %v5770 = vsub.f32 %v72, %v5769
    %v5771 = vand.u32 %v5770, 4294901760
    %5772 = vmatpush.msra.mxu0 %v5771
    %v5773 = vand.u32 %v66, 4294901760
    %v5774 = vsub.f32 %v66, %v5773
    %v5775 = vand.u32 %v5774, 4294901760
    %5776 = vmatpush.msra.mxu0 %v5775
    %v5777 = vand.u32 %v58, 4294901760
    %5778 = vmatmul.f32.gmra.mxu0 %v5777
    %v5779 = vpop.f32.mrf.mxu0
    %v5780 = vadd.f32 %v5711, %v5779
    %5781 = vdwg.mxu0
    %v5782 = vand.u32 %v156, 4294901760
    %5783 = vmatpush.msra.mxu0 %v5782
    %v5784 = vand.u32 %v150, 4294901760
    %5785 = vmatpush.msra.mxu0 %v5784
    %v5786 = vand.u32 %v144, 4294901760
    %5787 = vmatpush.msra.mxu0 %v5786
    %v5788 = vand.u32 %v138, 4294901760
    %5789 = vmatpush.msra.mxu0 %v5788
    %v5790 = vand.u32 %v132, 4294901760
    %5791 = vmatpush.msra.mxu0 %v5790
    %v5792 = vand.u32 %v126, 4294901760
    %5793 = vmatpush.msra.mxu0 %v5792
    %v5794 = vand.u32 %v120, 4294901760
    %5795 = vmatpush.msra.mxu0 %v5794
    %v5796 = vand.u32 %v114, 4294901760
    %5797 = vmatpush.msra.mxu0 %v5796
    %v5798 = vand.u32 %v108, 4294901760
    %5799 = vmatpush.msra.mxu0 %v5798
    %v5800 = vand.u32 %v102, 4294901760
    %5801 = vmatpush.msra.mxu0 %v5800
    %v5802 = vand.u32 %v96, 4294901760
    %5803 = vmatpush.msra.mxu0 %v5802
    %v5804 = vand.u32 %v90, 4294901760
    %5805 = vmatpush.msra.mxu0 %v5804
    %v5806 = vand.u32 %v84, 4294901760
    %5807 = vmatpush.msra.mxu0 %v5806
    %v5808 = vand.u32 %v78, 4294901760
    %5809 = vmatpush.msra.mxu0 %v5808
    %v5810 = vand.u32 %v72, 4294901760
    %5811 = vmatpush.msra.mxu0 %v5810
    %v5812 = vand.u32 %v66, 4294901760
    %5813 = vmatpush.msra.mxu0 %v5812
    %v5814 = vand.u32 %v58, 4294901760
    %5815 = vmatmul.f32.gmra.mxu0 %v5814
    %v5816 = vpop.f32.mrf.mxu0
    %v5817 = vadd.f32 %v5780, %v5816
    %5818 = vdwg.mxu0
    %v5819 = vand.u32 %v252, 4294901760
    %5820 = vmatpush.msra.mxu0 %v5819
    %v5821 = vand.u32 %v246, 4294901760
    %5822 = vmatpush.msra.mxu0 %v5821
    %v5823 = vand.u32 %v240, 4294901760
    %5824 = vmatpush.msra.mxu0 %v5823
    %v5825 = vand.u32 %v234, 4294901760
    %5826 = vmatpush.msra.mxu0 %v5825
    %v5827 = vand.u32 %v228, 4294901760
    %5828 = vmatpush.msra.mxu0 %v5827
    %v5829 = vand.u32 %v222, 4294901760
    %5830 = vmatpush.msra.mxu0 %v5829
    %v5831 = vand.u32 %v216, 4294901760
    %5832 = vmatpush.msra.mxu0 %v5831
    %v5833 = vand.u32 %v210, 4294901760
    %5834 = vmatpush.msra.mxu0 %v5833
    %v5835 = vand.u32 %v204, 4294901760
    %5836 = vmatpush.msra.mxu0 %v5835
    %v5837 = vand.u32 %v198, 4294901760
    %5838 = vmatpush.msra.mxu0 %v5837
    %v5839 = vand.u32 %v192, 4294901760
    %5840 = vmatpush.msra.mxu0 %v5839
    %v5841 = vand.u32 %v186, 4294901760
    %5842 = vmatpush.msra.mxu0 %v5841
    %v5843 = vand.u32 %v180, 4294901760
    %5844 = vmatpush.msra.mxu0 %v5843
    %v5845 = vand.u32 %v174, 4294901760
    %5846 = vmatpush.msra.mxu0 %v5845
    %v5847 = vand.u32 %v168, 4294901760
    %5848 = vmatpush.msra.mxu0 %v5847
    %v5849 = vand.u32 %v162, 4294901760
    %5850 = vmatpush.msra.mxu0 %v5849
    %v5851 = vand.u32 %v59, 4294901760
    %v5852 = vsub.f32 %v59, %v5851
    %v5853 = vand.u32 %v5852, 4294901760
    %v5854 = vsub.f32 %v5852, %v5853
    %v5855 = vand.u32 %v5854, 4294901760
    %5856 = vmatmul.f32.gmra.mxu0 %v5855
    %v5857 = vpop.f32.mrf.mxu0
    %v5858 = vadd.f32 %v5817, %v5857
    %5859 = vdwg.mxu0
    %v5860 = vand.u32 %v252, 4294901760
    %v5861 = vsub.f32 %v252, %v5860
    %v5862 = vand.u32 %v5861, 4294901760
    %v5863 = vsub.f32 %v5861, %v5862
    %v5864 = vand.u32 %v5863, 4294901760
    %5865 = vmatpush.msra.mxu0 %v5864
    %v5866 = vand.u32 %v246, 4294901760
    %v5867 = vsub.f32 %v246, %v5866
    %v5868 = vand.u32 %v5867, 4294901760
    %v5869 = vsub.f32 %v5867, %v5868
    %v5870 = vand.u32 %v5869, 4294901760
    %5871 = vmatpush.msra.mxu0 %v5870
    %v5872 = vand.u32 %v240, 4294901760
    %v5873 = vsub.f32 %v240, %v5872
    %v5874 = vand.u32 %v5873, 4294901760
    %v5875 = vsub.f32 %v5873, %v5874
    %v5876 = vand.u32 %v5875, 4294901760
    %5877 = vmatpush.msra.mxu0 %v5876
    %v5878 = vand.u32 %v234, 4294901760
    %v5879 = vsub.f32 %v234, %v5878
    %v5880 = vand.u32 %v5879, 4294901760
    %v5881 = vsub.f32 %v5879, %v5880
    %v5882 = vand.u32 %v5881, 4294901760
    %5883 = vmatpush.msra.mxu0 %v5882
    %v5884 = vand.u32 %v228, 4294901760
    %v5885 = vsub.f32 %v228, %v5884
    %v5886 = vand.u32 %v5885, 4294901760
    %v5887 = vsub.f32 %v5885, %v5886
    %v5888 = vand.u32 %v5887, 4294901760
    %5889 = vmatpush.msra.mxu0 %v5888
    %v5890 = vand.u32 %v222, 4294901760
    %v5891 = vsub.f32 %v222, %v5890
    %v5892 = vand.u32 %v5891, 4294901760
    %v5893 = vsub.f32 %v5891, %v5892
    %v5894 = vand.u32 %v5893, 4294901760
    %5895 = vmatpush.msra.mxu0 %v5894
    %v5896 = vand.u32 %v216, 4294901760
    %v5897 = vsub.f32 %v216, %v5896
    %v5898 = vand.u32 %v5897, 4294901760
    %v5899 = vsub.f32 %v5897, %v5898
    %v5900 = vand.u32 %v5899, 4294901760
    %5901 = vmatpush.msra.mxu0 %v5900
    %v5902 = vand.u32 %v210, 4294901760
    %v5903 = vsub.f32 %v210, %v5902
    %v5904 = vand.u32 %v5903, 4294901760
    %v5905 = vsub.f32 %v5903, %v5904
    %v5906 = vand.u32 %v5905, 4294901760
    %5907 = vmatpush.msra.mxu0 %v5906
    %v5908 = vand.u32 %v204, 4294901760
    %v5909 = vsub.f32 %v204, %v5908
    %v5910 = vand.u32 %v5909, 4294901760
    %v5911 = vsub.f32 %v5909, %v5910
    %v5912 = vand.u32 %v5911, 4294901760
    %5913 = vmatpush.msra.mxu0 %v5912
    %v5914 = vand.u32 %v198, 4294901760
    %v5915 = vsub.f32 %v198, %v5914
    %v5916 = vand.u32 %v5915, 4294901760
    %v5917 = vsub.f32 %v5915, %v5916
    %v5918 = vand.u32 %v5917, 4294901760
    %5919 = vmatpush.msra.mxu0 %v5918
    %v5920 = vand.u32 %v192, 4294901760
    %v5921 = vsub.f32 %v192, %v5920
    %v5922 = vand.u32 %v5921, 4294901760
    %v5923 = vsub.f32 %v5921, %v5922
    %v5924 = vand.u32 %v5923, 4294901760
    %5925 = vmatpush.msra.mxu0 %v5924
    %v5926 = vand.u32 %v186, 4294901760
    %v5927 = vsub.f32 %v186, %v5926
    %v5928 = vand.u32 %v5927, 4294901760
    %v5929 = vsub.f32 %v5927, %v5928
    %v5930 = vand.u32 %v5929, 4294901760
    %5931 = vmatpush.msra.mxu0 %v5930
    %v5932 = vand.u32 %v180, 4294901760
    %v5933 = vsub.f32 %v180, %v5932
    %v5934 = vand.u32 %v5933, 4294901760
    %v5935 = vsub.f32 %v5933, %v5934
    %v5936 = vand.u32 %v5935, 4294901760
    %5937 = vmatpush.msra.mxu0 %v5936
    %v5938 = vand.u32 %v174, 4294901760
    %v5939 = vsub.f32 %v174, %v5938
    %v5940 = vand.u32 %v5939, 4294901760
    %v5941 = vsub.f32 %v5939, %v5940
    %v5942 = vand.u32 %v5941, 4294901760
    %5943 = vmatpush.msra.mxu0 %v5942
    %v5944 = vand.u32 %v168, 4294901760
    %v5945 = vsub.f32 %v168, %v5944
    %v5946 = vand.u32 %v5945, 4294901760
    %v5947 = vsub.f32 %v5945, %v5946
    %v5948 = vand.u32 %v5947, 4294901760
    %5949 = vmatpush.msra.mxu0 %v5948
    %v5950 = vand.u32 %v162, 4294901760
    %v5951 = vsub.f32 %v162, %v5950
    %v5952 = vand.u32 %v5951, 4294901760
    %v5953 = vsub.f32 %v5951, %v5952
    %v5954 = vand.u32 %v5953, 4294901760
    %5955 = vmatpush.msra.mxu0 %v5954
    %v5956 = vand.u32 %v59, 4294901760
    %5957 = vmatmul.f32.gmra.mxu0 %v5956
    %v5958 = vpop.f32.mrf.mxu0
    %v5959 = vadd.f32 %v5858, %v5958
    %5960 = vdwg.mxu0
    %v5961 = vand.u32 %v252, 4294901760
    %v5962 = vsub.f32 %v252, %v5961
    %5963 = vmatpush.msra.mxu0 %v5962
    %v5964 = vand.u32 %v246, 4294901760
    %v5965 = vsub.f32 %v246, %v5964
    %5966 = vmatpush.msra.mxu0 %v5965
    %v5967 = vand.u32 %v240, 4294901760
    %v5968 = vsub.f32 %v240, %v5967
    %5969 = vmatpush.msra.mxu0 %v5968
    %v5970 = vand.u32 %v234, 4294901760
    %v5971 = vsub.f32 %v234, %v5970
    %5972 = vmatpush.msra.mxu0 %v5971
    %v5973 = vand.u32 %v228, 4294901760
    %v5974 = vsub.f32 %v228, %v5973
    %5975 = vmatpush.msra.mxu0 %v5974
    %v5976 = vand.u32 %v222, 4294901760
    %v5977 = vsub.f32 %v222, %v5976
    %5978 = vmatpush.msra.mxu0 %v5977
    %v5979 = vand.u32 %v216, 4294901760
    %v5980 = vsub.f32 %v216, %v5979
    %5981 = vmatpush.msra.mxu0 %v5980
    %v5982 = vand.u32 %v210, 4294901760
    %v5983 = vsub.f32 %v210, %v5982
    %5984 = vmatpush.msra.mxu0 %v5983
    %v5985 = vand.u32 %v204, 4294901760
    %v5986 = vsub.f32 %v204, %v5985
    %5987 = vmatpush.msra.mxu0 %v5986
    %v5988 = vand.u32 %v198, 4294901760
    %v5989 = vsub.f32 %v198, %v5988
    %5990 = vmatpush.msra.mxu0 %v5989
    %v5991 = vand.u32 %v192, 4294901760
    %v5992 = vsub.f32 %v192, %v5991
    %5993 = vmatpush.msra.mxu0 %v5992
    %v5994 = vand.u32 %v186, 4294901760
    %v5995 = vsub.f32 %v186, %v5994
    %5996 = vmatpush.msra.mxu0 %v5995
    %v5997 = vand.u32 %v180, 4294901760
    %v5998 = vsub.f32 %v180, %v5997
    %5999 = vmatpush.msra.mxu0 %v5998
    %v6000 = vand.u32 %v174, 4294901760
    %v6001 = vsub.f32 %v174, %v6000
    %6002 = vmatpush.msra.mxu0 %v6001
    %v6003 = vand.u32 %v168, 4294901760
    %v6004 = vsub.f32 %v168, %v6003
    %6005 = vmatpush.msra.mxu0 %v6004
    %v6006 = vand.u32 %v162, 4294901760
    %v6007 = vsub.f32 %v162, %v6006
    %6008 = vmatpush.msra.mxu0 %v6007
    %v6009 = vand.u32 %v59, 4294901760
    %v6010 = vsub.f32 %v59, %v6009
    %6011 = vmatmul.f32.gmra.mxu0 %v6010
    %v6012 = vpop.f32.mrf.mxu0
    %v6013 = vadd.f32 %v5959, %v6012
    %6014 = vdwg.mxu0
    %v6015 = vand.u32 %v252, 4294901760
    %6016 = vmatpush.msra.mxu0 %v6015
    %v6017 = vand.u32 %v246, 4294901760
    %6018 = vmatpush.msra.mxu0 %v6017
    %v6019 = vand.u32 %v240, 4294901760
    %6020 = vmatpush.msra.mxu0 %v6019
    %v6021 = vand.u32 %v234, 4294901760
    %6022 = vmatpush.msra.mxu0 %v6021
    %v6023 = vand.u32 %v228, 4294901760
    %6024 = vmatpush.msra.mxu0 %v6023
    %v6025 = vand.u32 %v222, 4294901760
    %6026 = vmatpush.msra.mxu0 %v6025
    %v6027 = vand.u32 %v216, 4294901760
    %6028 = vmatpush.msra.mxu0 %v6027
    %v6029 = vand.u32 %v210, 4294901760
    %6030 = vmatpush.msra.mxu0 %v6029
    %v6031 = vand.u32 %v204, 4294901760
    %6032 = vmatpush.msra.mxu0 %v6031
    %v6033 = vand.u32 %v198, 4294901760
    %6034 = vmatpush.msra.mxu0 %v6033
    %v6035 = vand.u32 %v192, 4294901760
    %6036 = vmatpush.msra.mxu0 %v6035
    %v6037 = vand.u32 %v186, 4294901760
    %6038 = vmatpush.msra.mxu0 %v6037
    %v6039 = vand.u32 %v180, 4294901760
    %6040 = vmatpush.msra.mxu0 %v6039
    %v6041 = vand.u32 %v174, 4294901760
    %6042 = vmatpush.msra.mxu0 %v6041
    %v6043 = vand.u32 %v168, 4294901760
    %6044 = vmatpush.msra.mxu0 %v6043
    %v6045 = vand.u32 %v162, 4294901760
    %6046 = vmatpush.msra.mxu0 %v6045
    %v6047 = vand.u32 %v59, 4294901760
    %v6048 = vsub.f32 %v59, %v6047
    %v6049 = vand.u32 %v6048, 4294901760
    %6050 = vmatmul.f32.gmra.mxu0 %v6049
    %v6051 = vpop.f32.mrf.mxu0
    %v6052 = vadd.f32 %v6013, %v6051
    %6053 = vdwg.mxu0
    %v6054 = vand.u32 %v252, 4294901760
    %v6055 = vsub.f32 %v252, %v6054
    %v6056 = vand.u32 %v6055, 4294901760
    %6057 = vmatpush.msra.mxu0 %v6056
    %v6058 = vand.u32 %v246, 4294901760
    %v6059 = vsub.f32 %v246, %v6058
    %v6060 = vand.u32 %v6059, 4294901760
    %6061 = vmatpush.msra.mxu0 %v6060
    %v6062 = vand.u32 %v240, 4294901760
    %v6063 = vsub.f32 %v240, %v6062
    %v6064 = vand.u32 %v6063, 4294901760
    %6065 = vmatpush.msra.mxu0 %v6064
    %v6066 = vand.u32 %v234, 4294901760
    %v6067 = vsub.f32 %v234, %v6066
    %v6068 = vand.u32 %v6067, 4294901760
    %6069 = vmatpush.msra.mxu0 %v6068
    %v6070 = vand.u32 %v228, 4294901760
    %v6071 = vsub.f32 %v228, %v6070
    %v6072 = vand.u32 %v6071, 4294901760
    %6073 = vmatpush.msra.mxu0 %v6072
    %v6074 = vand.u32 %v222, 4294901760
    %v6075 = vsub.f32 %v222, %v6074
    %v6076 = vand.u32 %v6075, 4294901760
    %6077 = vmatpush.msra.mxu0 %v6076
    %v6078 = vand.u32 %v216, 4294901760
    %v6079 = vsub.f32 %v216, %v6078
    %v6080 = vand.u32 %v6079, 4294901760
    %6081 = vmatpush.msra.mxu0 %v6080
    %v6082 = vand.u32 %v210, 4294901760
    %v6083 = vsub.f32 %v210, %v6082
    %v6084 = vand.u32 %v6083, 4294901760
    %6085 = vmatpush.msra.mxu0 %v6084
    %v6086 = vand.u32 %v204, 4294901760
    %v6087 = vsub.f32 %v204, %v6086
    %v6088 = vand.u32 %v6087, 4294901760
    %6089 = vmatpush.msra.mxu0 %v6088
    %v6090 = vand.u32 %v198, 4294901760
    %v6091 = vsub.f32 %v198, %v6090
    %v6092 = vand.u32 %v6091, 4294901760
    %6093 = vmatpush.msra.mxu0 %v6092
    %v6094 = vand.u32 %v192, 4294901760
    %v6095 = vsub.f32 %v192, %v6094
    %v6096 = vand.u32 %v6095, 4294901760
    %6097 = vmatpush.msra.mxu0 %v6096
    %v6098 = vand.u32 %v186, 4294901760
    %v6099 = vsub.f32 %v186, %v6098
    %v6100 = vand.u32 %v6099, 4294901760
    %6101 = vmatpush.msra.mxu0 %v6100
    %v6102 = vand.u32 %v180, 4294901760
    %v6103 = vsub.f32 %v180, %v6102
    %v6104 = vand.u32 %v6103, 4294901760
    %6105 = vmatpush.msra.mxu0 %v6104
    %v6106 = vand.u32 %v174, 4294901760
    %v6107 = vsub.f32 %v174, %v6106
    %v6108 = vand.u32 %v6107, 4294901760
    %6109 = vmatpush.msra.mxu0 %v6108
    %v6110 = vand.u32 %v168, 4294901760
    %v6111 = vsub.f32 %v168, %v6110
    %v6112 = vand.u32 %v6111, 4294901760
    %6113 = vmatpush.msra.mxu0 %v6112
    %v6114 = vand.u32 %v162, 4294901760
    %v6115 = vsub.f32 %v162, %v6114
    %v6116 = vand.u32 %v6115, 4294901760
    %6117 = vmatpush.msra.mxu0 %v6116
    %v6118 = vand.u32 %v59, 4294901760
    %6119 = vmatmul.f32.gmra.mxu0 %v6118
    %v6120 = vpop.f32.mrf.mxu0
    %v6121 = vadd.f32 %v6052, %v6120
    %6122 = vdwg.mxu0
    %v6123 = vand.u32 %v252, 4294901760
    %6124 = vmatpush.msra.mxu0 %v6123
    %v6125 = vand.u32 %v246, 4294901760
    %6126 = vmatpush.msra.mxu0 %v6125
    %v6127 = vand.u32 %v240, 4294901760
    %6128 = vmatpush.msra.mxu0 %v6127
    %v6129 = vand.u32 %v234, 4294901760
    %6130 = vmatpush.msra.mxu0 %v6129
    %v6131 = vand.u32 %v228, 4294901760
    %6132 = vmatpush.msra.mxu0 %v6131
    %v6133 = vand.u32 %v222, 4294901760
    %6134 = vmatpush.msra.mxu0 %v6133
    %v6135 = vand.u32 %v216, 4294901760
    %6136 = vmatpush.msra.mxu0 %v6135
    %v6137 = vand.u32 %v210, 4294901760
    %6138 = vmatpush.msra.mxu0 %v6137
    %v6139 = vand.u32 %v204, 4294901760
    %6140 = vmatpush.msra.mxu0 %v6139
    %v6141 = vand.u32 %v198, 4294901760
    %6142 = vmatpush.msra.mxu0 %v6141
    %v6143 = vand.u32 %v192, 4294901760
    %6144 = vmatpush.msra.mxu0 %v6143
    %v6145 = vand.u32 %v186, 4294901760
    %6146 = vmatpush.msra.mxu0 %v6145
    %v6147 = vand.u32 %v180, 4294901760
    %6148 = vmatpush.msra.mxu0 %v6147
    %v6149 = vand.u32 %v174, 4294901760
    %6150 = vmatpush.msra.mxu0 %v6149
    %v6151 = vand.u32 %v168, 4294901760
    %6152 = vmatpush.msra.mxu0 %v6151
    %v6153 = vand.u32 %v162, 4294901760
    %6154 = vmatpush.msra.mxu0 %v6153
    %v6155 = vand.u32 %v59, 4294901760
    %6156 = vmatmul.f32.gmra.mxu0 %v6155
    %v6157 = vpop.f32.mrf.mxu0
    %v6158 = vadd.f32 %v6121, %v6157
    %6159 = vdwg.mxu0
    %v6160 = vand.u32 %v348, 4294901760
    %6161 = vmatpush.msra.mxu0 %v6160
    %v6162 = vand.u32 %v342, 4294901760
    %6163 = vmatpush.msra.mxu0 %v6162
    %v6164 = vand.u32 %v336, 4294901760
    %6165 = vmatpush.msra.mxu0 %v6164
    %v6166 = vand.u32 %v330, 4294901760
    %6167 = vmatpush.msra.mxu0 %v6166
    %v6168 = vand.u32 %v324, 4294901760
    %6169 = vmatpush.msra.mxu0 %v6168
    %v6170 = vand.u32 %v318, 4294901760
    %6171 = vmatpush.msra.mxu0 %v6170
    %v6172 = vand.u32 %v312, 4294901760
    %6173 = vmatpush.msra.mxu0 %v6172
    %v6174 = vand.u32 %v306, 4294901760
    %6175 = vmatpush.msra.mxu0 %v6174
    %v6176 = vand.u32 %v300, 4294901760
    %6177 = vmatpush.msra.mxu0 %v6176
    %v6178 = vand.u32 %v294, 4294901760
    %6179 = vmatpush.msra.mxu0 %v6178
    %v6180 = vand.u32 %v288, 4294901760
    %6181 = vmatpush.msra.mxu0 %v6180
    %v6182 = vand.u32 %v282, 4294901760
    %6183 = vmatpush.msra.mxu0 %v6182
    %v6184 = vand.u32 %v276, 4294901760
    %6185 = vmatpush.msra.mxu0 %v6184
    %v6186 = vand.u32 %v270, 4294901760
    %6187 = vmatpush.msra.mxu0 %v6186
    %v6188 = vand.u32 %v264, 4294901760
    %6189 = vmatpush.msra.mxu0 %v6188
    %v6190 = vand.u32 %v258, 4294901760
    %6191 = vmatpush.msra.mxu0 %v6190
    %v6192 = vand.u32 %v60, 4294901760
    %v6193 = vsub.f32 %v60, %v6192
    %v6194 = vand.u32 %v6193, 4294901760
    %v6195 = vsub.f32 %v6193, %v6194
    %v6196 = vand.u32 %v6195, 4294901760
    %6197 = vmatmul.f32.gmra.mxu0 %v6196
    %v6198 = vpop.f32.mrf.mxu0
    %v6199 = vadd.f32 %v6158, %v6198
    %6200 = vdwg.mxu0
    %v6201 = vand.u32 %v348, 4294901760
    %v6202 = vsub.f32 %v348, %v6201
    %v6203 = vand.u32 %v6202, 4294901760
    %v6204 = vsub.f32 %v6202, %v6203
    %v6205 = vand.u32 %v6204, 4294901760
    %6206 = vmatpush.msra.mxu0 %v6205
    %v6207 = vand.u32 %v342, 4294901760
    %v6208 = vsub.f32 %v342, %v6207
    %v6209 = vand.u32 %v6208, 4294901760
    %v6210 = vsub.f32 %v6208, %v6209
    %v6211 = vand.u32 %v6210, 4294901760
    %6212 = vmatpush.msra.mxu0 %v6211
    %v6213 = vand.u32 %v336, 4294901760
    %v6214 = vsub.f32 %v336, %v6213
    %v6215 = vand.u32 %v6214, 4294901760
    %v6216 = vsub.f32 %v6214, %v6215
    %v6217 = vand.u32 %v6216, 4294901760
    %6218 = vmatpush.msra.mxu0 %v6217
    %v6219 = vand.u32 %v330, 4294901760
    %v6220 = vsub.f32 %v330, %v6219
    %v6221 = vand.u32 %v6220, 4294901760
    %v6222 = vsub.f32 %v6220, %v6221
    %v6223 = vand.u32 %v6222, 4294901760
    %6224 = vmatpush.msra.mxu0 %v6223
    %v6225 = vand.u32 %v324, 4294901760
    %v6226 = vsub.f32 %v324, %v6225
    %v6227 = vand.u32 %v6226, 4294901760
    %v6228 = vsub.f32 %v6226, %v6227
    %v6229 = vand.u32 %v6228, 4294901760
    %6230 = vmatpush.msra.mxu0 %v6229
    %v6231 = vand.u32 %v318, 4294901760
    %v6232 = vsub.f32 %v318, %v6231
    %v6233 = vand.u32 %v6232, 4294901760
    %v6234 = vsub.f32 %v6232, %v6233
    %v6235 = vand.u32 %v6234, 4294901760
    %6236 = vmatpush.msra.mxu0 %v6235
    %v6237 = vand.u32 %v312, 4294901760
    %v6238 = vsub.f32 %v312, %v6237
    %v6239 = vand.u32 %v6238, 4294901760
    %v6240 = vsub.f32 %v6238, %v6239
    %v6241 = vand.u32 %v6240, 4294901760
    %6242 = vmatpush.msra.mxu0 %v6241
    %v6243 = vand.u32 %v306, 4294901760
    %v6244 = vsub.f32 %v306, %v6243
    %v6245 = vand.u32 %v6244, 4294901760
    %v6246 = vsub.f32 %v6244, %v6245
    %v6247 = vand.u32 %v6246, 4294901760
    %6248 = vmatpush.msra.mxu0 %v6247
    %v6249 = vand.u32 %v300, 4294901760
    %v6250 = vsub.f32 %v300, %v6249
    %v6251 = vand.u32 %v6250, 4294901760
    %v6252 = vsub.f32 %v6250, %v6251
    %v6253 = vand.u32 %v6252, 4294901760
    %6254 = vmatpush.msra.mxu0 %v6253
    %v6255 = vand.u32 %v294, 4294901760
    %v6256 = vsub.f32 %v294, %v6255
    %v6257 = vand.u32 %v6256, 4294901760
    %v6258 = vsub.f32 %v6256, %v6257
    %v6259 = vand.u32 %v6258, 4294901760
    %6260 = vmatpush.msra.mxu0 %v6259
    %v6261 = vand.u32 %v288, 4294901760
    %v6262 = vsub.f32 %v288, %v6261
    %v6263 = vand.u32 %v6262, 4294901760
    %v6264 = vsub.f32 %v6262, %v6263
    %v6265 = vand.u32 %v6264, 4294901760
    %6266 = vmatpush.msra.mxu0 %v6265
    %v6267 = vand.u32 %v282, 4294901760
    %v6268 = vsub.f32 %v282, %v6267
    %v6269 = vand.u32 %v6268, 4294901760
    %v6270 = vsub.f32 %v6268, %v6269
    %v6271 = vand.u32 %v6270, 4294901760
    %6272 = vmatpush.msra.mxu0 %v6271
    %v6273 = vand.u32 %v276, 4294901760
    %v6274 = vsub.f32 %v276, %v6273
    %v6275 = vand.u32 %v6274, 4294901760
    %v6276 = vsub.f32 %v6274, %v6275
    %v6277 = vand.u32 %v6276, 4294901760
    %6278 = vmatpush.msra.mxu0 %v6277
    %v6279 = vand.u32 %v270, 4294901760
    %v6280 = vsub.f32 %v270, %v6279
    %v6281 = vand.u32 %v6280, 4294901760
    %v6282 = vsub.f32 %v6280, %v6281
    %v6283 = vand.u32 %v6282, 4294901760
    %6284 = vmatpush.msra.mxu0 %v6283
    %v6285 = vand.u32 %v264, 4294901760
    %v6286 = vsub.f32 %v264, %v6285
    %v6287 = vand.u32 %v6286, 4294901760
    %v6288 = vsub.f32 %v6286, %v6287
    %v6289 = vand.u32 %v6288, 4294901760
    %6290 = vmatpush.msra.mxu0 %v6289
    %v6291 = vand.u32 %v258, 4294901760
    %v6292 = vsub.f32 %v258, %v6291
    %v6293 = vand.u32 %v6292, 4294901760
    %v6294 = vsub.f32 %v6292, %v6293
    %v6295 = vand.u32 %v6294, 4294901760
    %6296 = vmatpush.msra.mxu0 %v6295
    %v6297 = vand.u32 %v60, 4294901760
    %6298 = vmatmul.f32.gmra.mxu0 %v6297
    %v6299 = vpop.f32.mrf.mxu0
    %v6300 = vadd.f32 %v6199, %v6299
    %6301 = vdwg.mxu0
    %v6302 = vand.u32 %v348, 4294901760
    %v6303 = vsub.f32 %v348, %v6302
    %6304 = vmatpush.msra.mxu0 %v6303
    %v6305 = vand.u32 %v342, 4294901760
    %v6306 = vsub.f32 %v342, %v6305
    %6307 = vmatpush.msra.mxu0 %v6306
    %v6308 = vand.u32 %v336, 4294901760
    %v6309 = vsub.f32 %v336, %v6308
    %6310 = vmatpush.msra.mxu0 %v6309
    %v6311 = vand.u32 %v330, 4294901760
    %v6312 = vsub.f32 %v330, %v6311
    %6313 = vmatpush.msra.mxu0 %v6312
    %v6314 = vand.u32 %v324, 4294901760
    %v6315 = vsub.f32 %v324, %v6314
    %6316 = vmatpush.msra.mxu0 %v6315
    %v6317 = vand.u32 %v318, 4294901760
    %v6318 = vsub.f32 %v318, %v6317
    %6319 = vmatpush.msra.mxu0 %v6318
    %v6320 = vand.u32 %v312, 4294901760
    %v6321 = vsub.f32 %v312, %v6320
    %6322 = vmatpush.msra.mxu0 %v6321
    %v6323 = vand.u32 %v306, 4294901760
    %v6324 = vsub.f32 %v306, %v6323
    %6325 = vmatpush.msra.mxu0 %v6324
    %v6326 = vand.u32 %v300, 4294901760
    %v6327 = vsub.f32 %v300, %v6326
    %6328 = vmatpush.msra.mxu0 %v6327
    %v6329 = vand.u32 %v294, 4294901760
    %v6330 = vsub.f32 %v294, %v6329
    %6331 = vmatpush.msra.mxu0 %v6330
    %v6332 = vand.u32 %v288, 4294901760
    %v6333 = vsub.f32 %v288, %v6332
    %6334 = vmatpush.msra.mxu0 %v6333
    %v6335 = vand.u32 %v282, 4294901760
    %v6336 = vsub.f32 %v282, %v6335
    %6337 = vmatpush.msra.mxu0 %v6336
    %v6338 = vand.u32 %v276, 4294901760
    %v6339 = vsub.f32 %v276, %v6338
    %6340 = vmatpush.msra.mxu0 %v6339
    %v6341 = vand.u32 %v270, 4294901760
    %v6342 = vsub.f32 %v270, %v6341
    %6343 = vmatpush.msra.mxu0 %v6342
    %v6344 = vand.u32 %v264, 4294901760
    %v6345 = vsub.f32 %v264, %v6344
    %6346 = vmatpush.msra.mxu0 %v6345
    %v6347 = vand.u32 %v258, 4294901760
    %v6348 = vsub.f32 %v258, %v6347
    %6349 = vmatpush.msra.mxu0 %v6348
    %v6350 = vand.u32 %v60, 4294901760
    %v6351 = vsub.f32 %v60, %v6350
    %6352 = vmatmul.f32.gmra.mxu0 %v6351
    %v6353 = vpop.f32.mrf.mxu0
    %v6354 = vadd.f32 %v6300, %v6353
    %6355 = vdwg.mxu0
    %v6356 = vand.u32 %v348, 4294901760
    %6357 = vmatpush.msra.mxu0 %v6356
    %v6358 = vand.u32 %v342, 4294901760
    %6359 = vmatpush.msra.mxu0 %v6358
    %v6360 = vand.u32 %v336, 4294901760
    %6361 = vmatpush.msra.mxu0 %v6360
    %v6362 = vand.u32 %v330, 4294901760
    %6363 = vmatpush.msra.mxu0 %v6362
    %v6364 = vand.u32 %v324, 4294901760
    %6365 = vmatpush.msra.mxu0 %v6364
    %v6366 = vand.u32 %v318, 4294901760
    %6367 = vmatpush.msra.mxu0 %v6366
    %v6368 = vand.u32 %v312, 4294901760
    %6369 = vmatpush.msra.mxu0 %v6368
    %v6370 = vand.u32 %v306, 4294901760
    %6371 = vmatpush.msra.mxu0 %v6370
    %v6372 = vand.u32 %v300, 4294901760
    %6373 = vmatpush.msra.mxu0 %v6372
    %v6374 = vand.u32 %v294, 4294901760
    %6375 = vmatpush.msra.mxu0 %v6374
    %v6376 = vand.u32 %v288, 4294901760
    %6377 = vmatpush.msra.mxu0 %v6376
    %v6378 = vand.u32 %v282, 4294901760
    %6379 = vmatpush.msra.mxu0 %v6378
    %v6380 = vand.u32 %v276, 4294901760
    %6381 = vmatpush.msra.mxu0 %v6380
    %v6382 = vand.u32 %v270, 4294901760
    %6383 = vmatpush.msra.mxu0 %v6382
    %v6384 = vand.u32 %v264, 4294901760
    %6385 = vmatpush.msra.mxu0 %v6384
    %v6386 = vand.u32 %v258, 4294901760
    %6387 = vmatpush.msra.mxu0 %v6386
    %v6388 = vand.u32 %v60, 4294901760
    %v6389 = vsub.f32 %v60, %v6388
    %v6390 = vand.u32 %v6389, 4294901760
    %6391 = vmatmul.f32.gmra.mxu0 %v6390
    %v6392 = vpop.f32.mrf.mxu0
    %v6393 = vadd.f32 %v6354, %v6392
    %6394 = vdwg.mxu0
    %v6395 = vand.u32 %v348, 4294901760
    %v6396 = vsub.f32 %v348, %v6395
    %v6397 = vand.u32 %v6396, 4294901760
    %6398 = vmatpush.msra.mxu0 %v6397
    %v6399 = vand.u32 %v342, 4294901760
    %v6400 = vsub.f32 %v342, %v6399
    %v6401 = vand.u32 %v6400, 4294901760
    %6402 = vmatpush.msra.mxu0 %v6401
    %v6403 = vand.u32 %v336, 4294901760
    %v6404 = vsub.f32 %v336, %v6403
    %v6405 = vand.u32 %v6404, 4294901760
    %6406 = vmatpush.msra.mxu0 %v6405
    %v6407 = vand.u32 %v330, 4294901760
    %v6408 = vsub.f32 %v330, %v6407
    %v6409 = vand.u32 %v6408, 4294901760
    %6410 = vmatpush.msra.mxu0 %v6409
    %v6411 = vand.u32 %v324, 4294901760
    %v6412 = vsub.f32 %v324, %v6411
    %v6413 = vand.u32 %v6412, 4294901760
    %6414 = vmatpush.msra.mxu0 %v6413
    %v6415 = vand.u32 %v318, 4294901760
    %v6416 = vsub.f32 %v318, %v6415
    %v6417 = vand.u32 %v6416, 4294901760
    %6418 = vmatpush.msra.mxu0 %v6417
    %v6419 = vand.u32 %v312, 4294901760
    %v6420 = vsub.f32 %v312, %v6419
    %v6421 = vand.u32 %v6420, 4294901760
    %6422 = vmatpush.msra.mxu0 %v6421
    %v6423 = vand.u32 %v306, 4294901760
    %v6424 = vsub.f32 %v306, %v6423
    %v6425 = vand.u32 %v6424, 4294901760
    %6426 = vmatpush.msra.mxu0 %v6425
    %v6427 = vand.u32 %v300, 4294901760
    %v6428 = vsub.f32 %v300, %v6427
    %v6429 = vand.u32 %v6428, 4294901760
    %6430 = vmatpush.msra.mxu0 %v6429
    %v6431 = vand.u32 %v294, 4294901760
    %v6432 = vsub.f32 %v294, %v6431
    %v6433 = vand.u32 %v6432, 4294901760
    %6434 = vmatpush.msra.mxu0 %v6433
    %v6435 = vand.u32 %v288, 4294901760
    %v6436 = vsub.f32 %v288, %v6435
    %v6437 = vand.u32 %v6436, 4294901760
    %6438 = vmatpush.msra.mxu0 %v6437
    %v6439 = vand.u32 %v282, 4294901760
    %v6440 = vsub.f32 %v282, %v6439
    %v6441 = vand.u32 %v6440, 4294901760
    %6442 = vmatpush.msra.mxu0 %v6441
    %v6443 = vand.u32 %v276, 4294901760
    %v6444 = vsub.f32 %v276, %v6443
    %v6445 = vand.u32 %v6444, 4294901760
    %6446 = vmatpush.msra.mxu0 %v6445
    %v6447 = vand.u32 %v270, 4294901760
    %v6448 = vsub.f32 %v270, %v6447
    %v6449 = vand.u32 %v6448, 4294901760
    %6450 = vmatpush.msra.mxu0 %v6449
    %v6451 = vand.u32 %v264, 4294901760
    %v6452 = vsub.f32 %v264, %v6451
    %v6453 = vand.u32 %v6452, 4294901760
    %6454 = vmatpush.msra.mxu0 %v6453
    %v6455 = vand.u32 %v258, 4294901760
    %v6456 = vsub.f32 %v258, %v6455
    %v6457 = vand.u32 %v6456, 4294901760
    %6458 = vmatpush.msra.mxu0 %v6457
    %v6459 = vand.u32 %v60, 4294901760
    %6460 = vmatmul.f32.gmra.mxu0 %v6459
    %v6461 = vpop.f32.mrf.mxu0
    %v6462 = vadd.f32 %v6393, %v6461
    %6463 = vdwg.mxu0
    %v6464 = vand.u32 %v348, 4294901760
    %6465 = vmatpush.msra.mxu0 %v6464
    %v6466 = vand.u32 %v342, 4294901760
    %6467 = vmatpush.msra.mxu0 %v6466
    %v6468 = vand.u32 %v336, 4294901760
    %6469 = vmatpush.msra.mxu0 %v6468
    %v6470 = vand.u32 %v330, 4294901760
    %6471 = vmatpush.msra.mxu0 %v6470
    %v6472 = vand.u32 %v324, 4294901760
    %6473 = vmatpush.msra.mxu0 %v6472
    %v6474 = vand.u32 %v318, 4294901760
    %6475 = vmatpush.msra.mxu0 %v6474
    %v6476 = vand.u32 %v312, 4294901760
    %6477 = vmatpush.msra.mxu0 %v6476
    %v6478 = vand.u32 %v306, 4294901760
    %6479 = vmatpush.msra.mxu0 %v6478
    %v6480 = vand.u32 %v300, 4294901760
    %6481 = vmatpush.msra.mxu0 %v6480
    %v6482 = vand.u32 %v294, 4294901760
    %6483 = vmatpush.msra.mxu0 %v6482
    %v6484 = vand.u32 %v288, 4294901760
    %6485 = vmatpush.msra.mxu0 %v6484
    %v6486 = vand.u32 %v282, 4294901760
    %6487 = vmatpush.msra.mxu0 %v6486
    %v6488 = vand.u32 %v276, 4294901760
    %6489 = vmatpush.msra.mxu0 %v6488
    %v6490 = vand.u32 %v270, 4294901760
    %6491 = vmatpush.msra.mxu0 %v6490
    %v6492 = vand.u32 %v264, 4294901760
    %6493 = vmatpush.msra.mxu0 %v6492
    %v6494 = vand.u32 %v258, 4294901760
    %6495 = vmatpush.msra.mxu0 %v6494
    %v6496 = vand.u32 %v60, 4294901760
    %6497 = vmatmul.f32.gmra.mxu0 %v6496
    %v6498 = vpop.f32.mrf.mxu0
    %v6499 = vadd.f32 %v6462, %v6498
    %6500 = vdwg.mxu0
    %v6501 = vrcp.pop %v4453
    %v6502 = vmul.f32 %v4453, %v6501
    %v6503 = vsub.f32 1.0, %v6502
    %v6504 = vmul.f32 %v6501, %v6503
    %v6505 = vadd.f32 %v6501, %v6504
    %vm6506 = vweird.f32 %v4453
    %vm6507 = vweird.f32 %v6501
    %vm6508 = vmor %vm6506, %vm6507
    %v6509 = vsel %vm6508, %v6501, %v6505
    %v6510 = vand.u32 2147483647, %v4453
    %vm6511 = vcmp.eq.f32.partialorder %v6510, 8.507059e+37
    %v6512 = vand.u32 %v4453, 2147483648
    %v6513 = vor.u32 1.1754944e-38, %v6512
    %v6514 = vsel %vm6511, %v6513, %v6509
    %v6515 = vmul.f32 %v1384, %v6514
    %v6516 = vrcp.pop %v5476
    %v6517 = vmul.f32 %v5476, %v6516
    %v6518 = vsub.f32 1.0, %v6517
    %v6519 = vmul.f32 %v6516, %v6518
    %v6520 = vadd.f32 %v6516, %v6519
    %vm6521 = vweird.f32 %v5476
    %vm6522 = vweird.f32 %v6516
    %vm6523 = vmor %vm6521, %vm6522
    %v6524 = vsel %vm6523, %v6516, %v6520
    %v6525 = vand.u32 2147483647, %v5476
    %vm6526 = vcmp.eq.f32.partialorder %v6525, 8.507059e+37
    %v6527 = vand.u32 %v5476, 2147483648
    %v6528 = vor.u32 1.1754944e-38, %v6527
    %v6529 = vsel %vm6526, %v6528, %v6524
    %v6530 = vmul.f32 %v2407, %v6529
    %v6531 = vrcp.pop %v6499
    %v6532 = vmul.f32 %v6499, %v6531
    %v6533 = vsub.f32 1.0, %v6532
    %v6534 = vmul.f32 %v6531, %v6533
    %v6535 = vadd.f32 %v6531, %v6534
    %vm6536 = vweird.f32 %v6499
    %vm6537 = vweird.f32 %v6531
    %vm6538 = vmor %vm6536, %vm6537
    %v6539 = vsel %vm6538, %v6531, %v6535
    %v6540 = vand.u32 2147483647, %v6499
    %vm6541 = vcmp.eq.f32.partialorder %v6540, 8.507059e+37
    %v6542 = vand.u32 %v6499, 2147483648
    %v6543 = vor.u32 1.1754944e-38, %v6542
    %v6544 = vsel %vm6541, %v6543, %v6539
    %v6545 = vmul.f32 %v3430, %v6544
    %6546 = vst [vmem:[#allocation8] sm:$0xff] %v6515
    %6547 = vst [vmem:[#allocation8 + $0x8] sm:$0xff] %v6530
    %6548 = vst [vmem:[#allocation8 + $0x10] sm:$0xff] %v6545
    // Predicated region
    $region26: #{tpu_custom_call.1} parent=1 // pred_check
      _
    $region27: #{tpu_custom_call.1} parent=1 // pred_check_branch
      %6550 = sbr.rel (0) target = $region29
    $region28: #{tpu_custom_call.1} parent=1 // pred_region
      %6552 = vsyncadd [#allocation4], 0
      %s6554 = sshll.u32 [#allocation8], 4
      %s6555 = int_to_ptr.vmem [resolvable:$true] %s6554
      %s6556 = sshll.u32 %s3, 4
      %s6557 = int_to_ptr.hbm [resolvable:$true] %s6556
      %6559 = dma.vmem_to_hbm [thread:$0]  %s6555, 384, %s6557, [#allocation4]
    $region29: #{tpu_custom_call.1} parent=1 // pred_fallthru
      _
    // Predicated region
    $region30: #{tpu_custom_call.1} parent=1 // pred_check
      _
    $region31: #{tpu_custom_call.1} parent=1 // pred_check_branch
      %6561 = sbr.rel (0) target = $region33
    $region32: #{tpu_custom_call.1} parent=1 // pred_region
      %6563 = dma.done [#allocation4], 384
    $region33: #{tpu_custom_call.1} parent=1 // pred_fallthru
      _
    %6564 = vsyncpa [#allocation3], 1
    %6565 = vsyncpa [#allocation6], 1
    %6566 = vsyncpa [#allocation4], 1

</llo_original>
